<compile_context>
chip_gen: v7x
topology: tpu7x:2x2x1
jax: 0.10.0
libtpu: 0.0.40
codegen_flags: <defaults>
</compile_context>

<pallas_src>
import math

import jax
import jax.numpy as jnp
from jax import lax
from jax.experimental import pallas as pl
from jax.experimental.pallas import tpu as pltpu

# ------------------------- scaled-down config ------------------------------
VOCAB = 100
MAX_POS = 40
HIDDEN = 64            # D_in of the regressor head (768 in the real model)
N_HEADS = 4
HEAD_DIM = HIDDEN // N_HEADS
INTERMEDIATE = 128
N_LAYERS = 2
EPS = 1e-5
D_OUT = 1
PADDING_IDX = 1


# ------------------------------ kernel --------------------------------------

def _layernorm(x, g, b):
    mean = jnp.mean(x, axis=-1, keepdims=True)
    var = jnp.mean(jnp.square(x - mean), axis=-1, keepdims=True)
    return (x - mean) * lax.rsqrt(var + EPS) * g + b


def _fused_forward_kernel(
    # constant-across-grid inputs
    bias_ref, emb_ref, eg_ref, eb_ref,
    # per-layer weights (streamed along the layer grid axis, leading dim squeezed)
    wqkv_ref, bqkv_ref, wo_ref, bo_ref,
    ln1g_ref, ln1b_ref, w1_ref, b1_ref, w2_ref, b2_ref, ln2g_ref, ln2b_ref,
    # pooler + regressor head (constant)
    wp_ref, bp_ref, wr_ref, br_ref,
    # output
    out_ref,
    # VMEM scratch (persists across grid steps)
    h_s,
):
    l = pl.program_id(0)
    B = bias_ref.shape[0]
    S = bias_ref.shape[-1]

    # Seed the residual stream with the embedding LayerNorm at layer 0.
    @pl.when(l == 0)
    def _():
        h_s[...] = _layernorm(emb_ref[...], eg_ref[...], eb_ref[...])

    x = h_s[...]                                                # (BS, H) f32
    x16 = x.astype(jnp.bfloat16)

    # Fused Q|K|V projection: one bf16 MXU matmul with N = 3*H, f32 accumulate.
    qkv = jnp.dot(x16, wqkv_ref[...],
                  preferred_element_type=jnp.float32) + bqkv_ref[...]

    # Multi-head self-attention, batched over B per head. Precomputed additive
    # mask bias (B, 1, S) is applied on the key axis only.
    # TODO(synk): only key-side masking; padded query rows carry garbage but
    # only the CLS row is ever read downstream.
    bias = bias_ref[...]                                        # (B, 1, S)
    scale = 1.0 / math.sqrt(HEAD_DIM)
    ctx_heads = []
    for h in range(N_HEADS):                                    # static unroll
        q_h = qkv[:, h * HEAD_DIM:(h + 1) * HEAD_DIM]
        k_h = qkv[:, HIDDEN + h * HEAD_DIM:HIDDEN + (h + 1) * HEAD_DIM]
        v_h = qkv[:, 2 * HIDDEN + h * HEAD_DIM:2 * HIDDEN + (h + 1) * HEAD_DIM]
        q_h = q_h.reshape(B, S, HEAD_DIM).astype(jnp.bfloat16)
        k_h = k_h.reshape(B, S, HEAD_DIM).astype(jnp.bfloat16)
        v_h = v_h.reshape(B, S, HEAD_DIM).astype(jnp.bfloat16)
        scores = jnp.einsum('bqd,bkd->bqk', q_h, k_h,
                            preferred_element_type=jnp.float32) * scale + bias
        m = jnp.max(scores, axis=-1, keepdims=True)
        p = jnp.exp(scores - m)
        p = p * pl.reciprocal(jnp.sum(p, axis=-1, keepdims=True), approx=True)
        ctx_h = jnp.einsum('bqk,bkd->bqd', p.astype(jnp.bfloat16), v_h,
                           preferred_element_type=jnp.float32)
        ctx_heads.append(ctx_h.reshape(B * S, HEAD_DIM))
    ctx = jnp.concatenate(ctx_heads, axis=-1)                   # (BS, H) f32

    # Output projection + residual + LayerNorm (fused).
    attn_out = jnp.dot(ctx.astype(jnp.bfloat16), wo_ref[...],
                       preferred_element_type=jnp.float32) + bo_ref[...]
    h1 = _layernorm(x + attn_out, ln1g_ref[...], ln1b_ref[...])

    # FFN: Linear -> GELU -> Linear, then residual + LayerNorm (fused).
    # TODO(synk): HF XLM-RoBERTa uses exact erf GELU; tanh approximation here.
    ffn_h = jax.nn.gelu(
        jnp.dot(h1.astype(jnp.bfloat16), w1_ref[...],
                preferred_element_type=jnp.float32) + b1_ref[...],
        approximate=True)
    ffn_o = jnp.dot(ffn_h.astype(jnp.bfloat16), w2_ref[...],
                    preferred_element_type=jnp.float32) + b2_ref[...]
    h2 = _layernorm(h1 + ffn_o, ln2g_ref[...], ln2b_ref[...])
    h_s[...] = h2

    # Pooler tanh(W_p h_cls + b_p) + regressor Linear(D_in, 1), fused into the
    # last layer's grid step, computed only on the B CLS rows.
    @pl.when(l == pl.num_programs(0) - 1)
    def _():
        cls = jnp.concatenate([h2[b * S:b * S + 1, :] for b in range(B)],
                              axis=0)                           # (B, H)
        pooled = jnp.tanh(
            jnp.dot(cls.astype(jnp.bfloat16), wp_ref[...],
                    preferred_element_type=jnp.float32) + bp_ref[...])
        # TODO(synk): nn.Dropout(drop_rate) is identity in eval mode.
        vals = jnp.dot(pooled.astype(jnp.bfloat16), wr_ref[...],
                       preferred_element_type=jnp.float32) + br_ref[...]
        out_ref[...] = vals                                     # single store


# ----------------------------- wrapper ---------------------------------------

def _const_spec(shape):
    nd = len(shape)
    return pl.BlockSpec(shape, lambda l, _nd=nd: (0,) * _nd)


def _layer_spec(shape):
    nd = len(shape)
    return pl.BlockSpec((pl.Squeezed(),) + shape,
                        lambda l, _nd=nd: (l,) + (0,) * _nd)


def fused_forward(attn_bias, emb2d, p):
    B = attn_bias.shape[0]
    S = attn_bias.shape[-1]
    BS, H = emb2d.shape
    L = p["wqkv"].shape[0]

    grid_spec = pltpu.PrefetchScalarGridSpec(
        num_scalar_prefetch=0,
        grid=(L,),
        in_specs=[
            _const_spec((B, 1, S)),                             # mask bias
            _const_spec((BS, H)),                               # embeddings
            _const_spec((1, H)), _const_spec((1, H)),           # emb LN
            _layer_spec((H, 3 * H)), _layer_spec((1, 3 * H)),   # fused QKV
            _layer_spec((H, H)), _layer_spec((1, H)),           # attn out proj
            _layer_spec((1, H)), _layer_spec((1, H)),           # LN1
            _layer_spec((H, INTERMEDIATE)), _layer_spec((1, INTERMEDIATE)),
            _layer_spec((INTERMEDIATE, H)), _layer_spec((1, H)),
            _layer_spec((1, H)), _layer_spec((1, H)),           # LN2
            _const_spec((H, H)), _const_spec((1, H)),           # pooler
            _const_spec((H, D_OUT)), _const_spec((1, D_OUT)),   # regressor
        ],
        out_specs=pl.BlockSpec((B, D_OUT), lambda l: (0, 0)),
        scratch_shapes=[
            pltpu.VMEM((BS, H), jnp.float32),                   # residual stream
        ],
    )
    return pl.pallas_call(
        _fused_forward_kernel,
        out_shape=jax.ShapeDtypeStruct((B, D_OUT), jnp.float32),
        grid_spec=grid_spec,
        compiler_params=pltpu.CompilerParams(
            dimension_semantics=("arbitrary",),     # layer axis is sequential
            # TODO(synk): re-budget per generation at real size (v5e/v6e raise
            # toward ~100 MiB; v7x physical VMEM is only 64 MiB).
            vmem_limit_bytes=32 * 1024 * 1024,
        ),
    )(
        attn_bias, emb2d, p["emb_ln_g"], p["emb_ln_b"],
        p["wqkv"], p["bqkv"], p["wo"], p["bo"],
        p["ln1_g"], p["ln1_b"], p["w1"], p["b1"],
        p["w2"], p["b2"], p["ln2_g"], p["ln2_b"],
        p["pooler_w"], p["pooler_b"], p["reg_w"], p["reg_b"],
    )


# ----------------------------- model glue ------------------------------------

def init_params(key):
    scale = 0.02

    def nrm(k, shape, dtype=jnp.float32):
        return (scale * jax.random.normal(k, shape, dtype=jnp.float32)).astype(dtype)

    keys = iter(jax.random.split(key, 8 + 4 * N_LAYERS))
    bf16 = jnp.bfloat16
    return {
        "word_emb": nrm(next(keys), (VOCAB, HIDDEN)),
        "pos_emb": nrm(next(keys), (MAX_POS, HIDDEN)),
        "type_emb": nrm(next(keys), (1, HIDDEN)),
        "emb_ln_g": jnp.ones((1, HIDDEN), jnp.float32),
        "emb_ln_b": jnp.zeros((1, HIDDEN), jnp.float32),
        # per-layer matmul weights, stacked along a leading N_LAYERS axis, bf16
        "wqkv": jnp.stack([nrm(next(keys), (HIDDEN, 3 * HIDDEN), bf16)
                           for _ in range(N_LAYERS)]),
        "bqkv": jnp.zeros((N_LAYERS, 1, 3 * HIDDEN), jnp.float32),
        "wo": jnp.stack([nrm(next(keys), (HIDDEN, HIDDEN), bf16)
                         for _ in range(N_LAYERS)]),
        "bo": jnp.zeros((N_LAYERS, 1, HIDDEN), jnp.float32),
        "ln1_g": jnp.ones((N_LAYERS, 1, HIDDEN), jnp.float32),
        "ln1_b": jnp.zeros((N_LAYERS, 1, HIDDEN), jnp.float32),
        "w1": jnp.stack([nrm(next(keys), (HIDDEN, INTERMEDIATE), bf16)
                         for _ in range(N_LAYERS)]),
        "b1": jnp.zeros((N_LAYERS, 1, INTERMEDIATE), jnp.float32),
        "w2": jnp.stack([nrm(next(keys), (INTERMEDIATE, HIDDEN), bf16)
                         for _ in range(N_LAYERS)]),
        "b2": jnp.zeros((N_LAYERS, 1, HIDDEN), jnp.float32),
        "ln2_g": jnp.ones((N_LAYERS, 1, HIDDEN), jnp.float32),
        "ln2_b": jnp.zeros((N_LAYERS, 1, HIDDEN), jnp.float32),
        "pooler_w": nrm(next(keys), (HIDDEN, HIDDEN), bf16),
        "pooler_b": jnp.zeros((1, HIDDEN), jnp.float32),
        "reg_w": nrm(next(keys), (HIDDEN, D_OUT), bf16),
        "reg_b": jnp.zeros((1, D_OUT), jnp.float32),
    }


@jax.jit
def xlmroberta_regressor_forward(params, input_ids, attention_masks):
    B, S = input_ids.shape
    # Embedding gathers are glue in plain JAX (data-dependent row gather).
    mask_i = attention_masks.astype(jnp.int32)
    # HF create_position_ids_from_input_ids: cumsum over non-pad tokens + pad idx.
    position_ids = jnp.cumsum(mask_i, axis=1) * mask_i + PADDING_IDX
    emb = (
        params["word_emb"][input_ids]
        + params["pos_emb"][position_ids]
        + params["type_emb"][0][None, None, :]
    )
    emb2d = emb.reshape(B * S, HIDDEN)
    # Additive attention-mask bias, computed once for the whole forward.
    attn_bias = ((1.0 - attention_masks.astype(jnp.float32)) * -1e9
                 ).reshape(B, 1, S)
    return fused_forward(attn_bias, emb2d, params)          # (B, 1)


# -------------------------------- main ----------------------------------------

if __name__ == "__main__":
    B, S = 2, 8
    key = jax.random.PRNGKey(0)
    k_ids, k_params = jax.random.split(key)

    input_ids = jax.random.randint(k_ids, (B, S), 0, VOCAB, dtype=jnp.int32)
    attention_masks = jnp.ones((B, S), dtype=jnp.int32).at[1, 6:].set(0)

    params = init_params(k_params)
    out = xlmroberta_regressor_forward(params, input_ids, attention_masks)
    out = jax.block_until_ready(out)

    assert out.shape == (B, 1), out.shape
    assert out.dtype == jnp.float32
    assert bool(jnp.all(jnp.isfinite(out)))
    print("KERNEL_OK")
</pallas_src>

<mosaic_0001>
module attributes {stable_mosaic.version = 11 : i64} {
  func.func @_fused_forward_kernel(%arg0: i32, %arg1: memref<2x1x8xf32, #tpu.memory_space<vmem>>, %arg2: memref<16x64xf32, #tpu.memory_space<vmem>>, %arg3: memref<1x64xf32, #tpu.memory_space<vmem>>, %arg4: memref<1x64xf32, #tpu.memory_space<vmem>>, %arg5: memref<1x64x192xbf16, #tpu.memory_space<vmem>>, %arg6: memref<1x1x192xf32, #tpu.memory_space<vmem>>, %arg7: memref<1x64x64xbf16, #tpu.memory_space<vmem>>, %arg8: memref<1x1x64xf32, #tpu.memory_space<vmem>>, %arg9: memref<1x1x64xf32, #tpu.memory_space<vmem>>, %arg10: memref<1x1x64xf32, #tpu.memory_space<vmem>>, %arg11: memref<1x64x128xbf16, #tpu.memory_space<vmem>>, %arg12: memref<1x1x128xf32, #tpu.memory_space<vmem>>, %arg13: memref<1x128x64xbf16, #tpu.memory_space<vmem>>, %arg14: memref<1x1x64xf32, #tpu.memory_space<vmem>>, %arg15: memref<1x1x64xf32, #tpu.memory_space<vmem>>, %arg16: memref<1x1x64xf32, #tpu.memory_space<vmem>>, %arg17: memref<64x64xbf16, #tpu.memory_space<vmem>>, %arg18: memref<1x64xf32, #tpu.memory_space<vmem>>, %arg19: memref<64x1xbf16, #tpu.memory_space<vmem>>, %arg20: memref<1x1xf32, #tpu.memory_space<vmem>>, %arg21: memref<2x1xf32, #tpu.memory_space<vmem>>, %arg22: memref<16x64xf32, #tpu.memory_space<vmem>>) attributes {dimension_semantics = [#tpu.dimension_semantics<arbitrary>], iteration_bounds = array<i64: 2>, scalar_prefetch = 0 : i64, scratch_operands = 1 : i64, tpu.core_type = #tpu.core_type<tc>, window_params = [{pipeline_mode = #tpu.pipeline_mode<synchronous>, transform_indices = @transform_0, window_bounds = array<i64: 2, 1, 8>}, {pipeline_mode = #tpu.pipeline_mode<synchronous>, transform_indices = @transform_1, window_bounds = array<i64: 16, 64>}, {pipeline_mode = #tpu.pipeline_mode<synchronous>, transform_indices = @transform_2, window_bounds = array<i64: 1, 64>}, {pipeline_mode = #tpu.pipeline_mode<synchronous>, transform_indices = @transform_3, window_bounds = array<i64: 1, 64>}, {transform_indices = @transform_4, window_bounds = array<i64: 1, 64, 192>}, {transform_indices = @transform_5, window_bounds = array<i64: 1, 1, 192>}, {transform_indices = @transform_6, window_bounds = array<i64: 1, 64, 64>}, {transform_indices = @transform_7, window_bounds = array<i64: 1, 1, 64>}, {transform_indices = @transform_8, window_bounds = array<i64: 1, 1, 64>}, {transform_indices = @transform_9, window_bounds = array<i64: 1, 1, 64>}, {transform_indices = @transform_10, window_bounds = array<i64: 1, 64, 128>}, {transform_indices = @transform_11, window_bounds = array<i64: 1, 1, 128>}, {transform_indices = @transform_12, window_bounds = array<i64: 1, 128, 64>}, {transform_indices = @transform_13, window_bounds = array<i64: 1, 1, 64>}, {transform_indices = @transform_14, window_bounds = array<i64: 1, 1, 64>}, {transform_indices = @transform_15, window_bounds = array<i64: 1, 1, 64>}, {pipeline_mode = #tpu.pipeline_mode<synchronous>, transform_indices = @transform_16, window_bounds = array<i64: 64, 64>}, {pipeline_mode = #tpu.pipeline_mode<synchronous>, transform_indices = @transform_17, window_bounds = array<i64: 1, 64>}, {pipeline_mode = #tpu.pipeline_mode<synchronous>, transform_indices = @transform_18, window_bounds = array<i64: 64, 1>}, {pipeline_mode = #tpu.pipeline_mode<synchronous>, transform_indices = @transform_19, window_bounds = array<i64: 1, 1>}, {pipeline_mode = #tpu.pipeline_mode<synchronous>, transform_indices = @transform_20, window_bounds = array<i64: 2, 1>}]} {
    %c0_i32 = arith.constant 0 : i32
    %0 = arith.cmpi eq, %arg0, %c0_i32 : i32
    %1 = arith.extui %0 : i1 to i32
    %c0_i32_0 = arith.constant 0 : i32
    %2 = arith.cmpi ne, %1, %c0_i32_0 : i32
    scf.if %2 {
      %c0_81 = arith.constant 0 : index
      %c0_82 = arith.constant 0 : index
      %217 = vector.load %arg2[%c0_81, %c0_82] : memref<16x64xf32, #tpu.memory_space<vmem>>, vector<16x64xf32>
      %c0_83 = arith.constant 0 : index
      %c0_84 = arith.constant 0 : index
      %218 = vector.load %arg3[%c0_83, %c0_84] : memref<1x64xf32, #tpu.memory_space<vmem>>, vector<1x64xf32>
      %c0_85 = arith.constant 0 : index
      %c0_86 = arith.constant 0 : index
      %219 = vector.load %arg4[%c0_85, %c0_86] : memref<1x64xf32, #tpu.memory_space<vmem>>, vector<1x64xf32>
      %cst_87 = arith.constant dense<0.000000e+00> : vector<16xf32>
      %220 = vector.multi_reduction <add>, %217, %cst_87 [1] : vector<16x64xf32> to vector<16xf32>
      %221 = vector.shape_cast %220 : vector<16xf32> to vector<16x1xf32>
      %cst_88 = arith.constant 6.400000e+01 : f32
      %222 = vector.broadcast %cst_88 : f32 to vector<16x1xf32>
      %223 = arith.divf %221, %222 : vector<16x1xf32>
      %224 = vector.broadcast %223 : vector<16x1xf32> to vector<16x64xf32>
      %225 = arith.subf %217, %224 : vector<16x64xf32>
      %226 = arith.mulf %225, %225 : vector<16x64xf32>
      %cst_89 = arith.constant dense<0.000000e+00> : vector<16xf32>
      %227 = vector.multi_reduction <add>, %226, %cst_89 [1] : vector<16x64xf32> to vector<16xf32>
      %228 = vector.shape_cast %227 : vector<16xf32> to vector<16x1xf32>
      %cst_90 = arith.constant 6.400000e+01 : f32
      %229 = vector.broadcast %cst_90 : f32 to vector<16x1xf32>
      %230 = arith.divf %228, %229 : vector<16x1xf32>
      %231 = vector.broadcast %223 : vector<16x1xf32> to vector<16x64xf32>
      %232 = arith.subf %217, %231 : vector<16x64xf32>
      %cst_91 = arith.constant 9.99999974E-6 : f32
      %233 = vector.broadcast %cst_91 : f32 to vector<16x1xf32>
      %234 = arith.addf %230, %233 : vector<16x1xf32>
      %235 = math.rsqrt %234 : vector<16x1xf32>
      %236 = vector.broadcast %235 : vector<16x1xf32> to vector<16x64xf32>
      %237 = arith.mulf %232, %236 : vector<16x64xf32>
      %238 = vector.broadcast %218 : vector<1x64xf32> to vector<16x64xf32>
      %239 = arith.mulf %237, %238 : vector<16x64xf32>
      %240 = vector.broadcast %219 : vector<1x64xf32> to vector<16x64xf32>
      %241 = arith.addf %239, %240 : vector<16x64xf32>
      %c0_92 = arith.constant 0 : index
      %c0_93 = arith.constant 0 : index
      %242 = vector.load %arg22[%c0_92, %c0_93] : memref<16x64xf32, #tpu.memory_space<vmem>>, vector<16x64xf32>
      tpu.vector_store %arg22[%c0_92, %c0_93], %241 {strides = array<i32>} : memref<16x64xf32, #tpu.memory_space<vmem>>, vector<16x64xf32>,
    } else {
    }
    %c0 = arith.constant 0 : index
    %c0_1 = arith.constant 0 : index
    %3 = vector.load %arg22[%c0, %c0_1] : memref<16x64xf32, #tpu.memory_space<vmem>>, vector<16x64xf32>
    %4 = arith.truncf %3 : vector<16x64xf32> to vector<16x64xbf16>
    %c0_2 = arith.constant 0 : index
    %c0_3 = arith.constant 0 : index
    %c0_4 = arith.constant 0 : index
    %5 = vector.load %arg5[%c0_2, %c0_3, %c0_4] : memref<1x64x192xbf16, #tpu.memory_space<vmem>>, vector<1x64x192xbf16>
    %6 = vector.shape_cast %5 : vector<1x64x192xbf16> to vector<64x192xbf16>
    %cst = arith.constant dense<0.000000e+00> : vector<16x192xf32>
    %7 = tpu.matmul %4, %6, %cst {dimension_numbers = #tpu.dot_dimension_numbers<[1], [0], [0], [1], [0, 0, 1, 1], [], []>} : vector<16x64xbf16>, vector<64x192xbf16>, vector<16x192xf32> -> vector<16x192xf32>
    %c0_5 = arith.constant 0 : index
    %c0_6 = arith.constant 0 : index
    %c0_7 = arith.constant 0 : index
    %8 = vector.load %arg6[%c0_5, %c0_6, %c0_7] : memref<1x1x192xf32, #tpu.memory_space<vmem>>, vector<1x1x192xf32>
    %9 = vector.shape_cast %8 : vector<1x1x192xf32> to vector<1x192xf32>
    %10 = vector.broadcast %9 : vector<1x192xf32> to vector<16x192xf32>
    %11 = arith.addf %7, %10 : vector<16x192xf32>
    %c0_8 = arith.constant 0 : index
    %c0_9 = arith.constant 0 : index
    %c0_10 = arith.constant 0 : index
    %12 = vector.load %arg1[%c0_8, %c0_9, %c0_10] : memref<2x1x8xf32, #tpu.memory_space<vmem>>, vector<2x1x8xf32>
    %13 = vector.extract_strided_slice %11 {offsets = [0, 0], sizes = [16, 16], strides = [1, 1]} : vector<16x192xf32> to vector<16x16xf32>
    %14 = vector.extract_strided_slice %11 {offsets = [0, 64], sizes = [16, 16], strides = [1, 1]} : vector<16x192xf32> to vector<16x16xf32>
    %15 = vector.extract_strided_slice %11 {offsets = [0, 128], sizes = [16, 16], strides = [1, 1]} : vector<16x192xf32> to vector<16x16xf32>
    %16 = vector.shape_cast %13 : vector<16x16xf32> to vector<2x8x16xf32>
    %17 = arith.truncf %16 : vector<2x8x16xf32> to vector<2x8x16xbf16>
    %18 = vector.shape_cast %14 : vector<16x16xf32> to vector<2x8x16xf32>
    %19 = arith.truncf %18 : vector<2x8x16xf32> to vector<2x8x16xbf16>
    %20 = vector.shape_cast %15 : vector<16x16xf32> to vector<2x8x16xf32>
    %21 = arith.truncf %20 : vector<2x8x16xf32> to vector<2x8x16xbf16>
    "tpu.trace_start"() <{level = 10 : i32, message = "bqd,bkd->bqk"}> : () -> ()
    %cst_11 = arith.constant dense<0.000000e+00> : vector<2x8x8xf32>
    %22 = tpu.matmul %17, %19, %cst_11 {dimension_numbers = #tpu.dot_dimension_numbers<[2], [2], [1], [1], [0, 0, 0, 1, 1, 1], [0], [0]>} : vector<2x8x16xbf16>, vector<2x8x16xbf16>, vector<2x8x8xf32> -> vector<2x8x8xf32>
    "tpu.trace_stop"() : () -> ()
    %cst_12 = arith.constant 2.500000e-01 : f32
    %23 = vector.broadcast %cst_12 : f32 to vector<2x8x8xf32>
    %24 = arith.mulf %22, %23 : vector<2x8x8xf32>
    %25 = vector.broadcast %12 : vector<2x1x8xf32> to vector<2x8x8xf32>
    %26 = arith.addf %24, %25 : vector<2x8x8xf32>
    %cst_13 = arith.constant dense<0xFF800000> : vector<2x8xf32>
    %27 = vector.multi_reduction <maximumf>, %26, %cst_13 [2] : vector<2x8x8xf32> to vector<2x8xf32>
    %28 = vector.shape_cast %27 : vector<2x8xf32> to vector<2x8x1xf32>
    %29 = vector.broadcast %28 : vector<2x8x1xf32> to vector<2x8x8xf32>
    %30 = arith.subf %26, %29 : vector<2x8x8xf32>
    %31 = math.exp %30 : vector<2x8x8xf32>
    %cst_14 = arith.constant dense<0.000000e+00> : vector<2x8xf32>
    %32 = vector.multi_reduction <add>, %31, %cst_14 [2] : vector<2x8x8xf32> to vector<2x8xf32>
    %33 = vector.shape_cast %32 : vector<2x8xf32> to vector<2x8x1xf32>
    %34 = tpu.reciprocal %33 {approx = true} : vector<2x8x1xf32> -> vector<2x8x1xf32>
    %35 = vector.broadcast %34 : vector<2x8x1xf32> to vector<2x8x8xf32>
    %36 = arith.mulf %31, %35 : vector<2x8x8xf32>
    %37 = arith.truncf %36 : vector<2x8x8xf32> to vector<2x8x8xbf16>
    "tpu.trace_start"() <{level = 10 : i32, message = "bqk,bkd->bqd"}> : () -> ()
    %cst_15 = arith.constant dense<0.000000e+00> : vector<2x8x16xf32>
    %38 = tpu.matmul %37, %21, %cst_15 {dimension_numbers = #tpu.dot_dimension_numbers<[2], [1], [1], [2], [0, 0, 0, 1, 1, 2], [0], [0]>} : vector<2x8x8xbf16>, vector<2x8x16xbf16>, vector<2x8x16xf32> -> vector<2x8x16xf32>
    "tpu.trace_stop"() : () -> ()
    %39 = vector.shape_cast %38 : vector<2x8x16xf32> to vector<16x16xf32>
    %40 = vector.extract_strided_slice %11 {offsets = [0, 16], sizes = [16, 16], strides = [1, 1]} : vector<16x192xf32> to vector<16x16xf32>
    %41 = vector.extract_strided_slice %11 {offsets = [0, 80], sizes = [16, 16], strides = [1, 1]} : vector<16x192xf32> to vector<16x16xf32>
    %42 = vector.extract_strided_slice %11 {offsets = [0, 144], sizes = [16, 16], strides = [1, 1]} : vector<16x192xf32> to vector<16x16xf32>
    %43 = vector.shape_cast %40 : vector<16x16xf32> to vector<2x8x16xf32>
    %44 = arith.truncf %43 : vector<2x8x16xf32> to vector<2x8x16xbf16>
    %45 = vector.shape_cast %41 : vector<16x16xf32> to vector<2x8x16xf32>
    %46 = arith.truncf %45 : vector<2x8x16xf32> to vector<2x8x16xbf16>
    %47 = vector.shape_cast %42 : vector<16x16xf32> to vector<2x8x16xf32>
    %48 = arith.truncf %47 : vector<2x8x16xf32> to vector<2x8x16xbf16>
    "tpu.trace_start"() <{level = 10 : i32, message = "bqd,bkd->bqk"}> : () -> ()
    %cst_16 = arith.constant dense<0.000000e+00> : vector<2x8x8xf32>
    %49 = tpu.matmul %44, %46, %cst_16 {dimension_numbers = #tpu.dot_dimension_numbers<[2], [2], [1], [1], [0, 0, 0, 1, 1, 1], [0], [0]>} : vector<2x8x16xbf16>, vector<2x8x16xbf16>, vector<2x8x8xf32> -> vector<2x8x8xf32>
    "tpu.trace_stop"() : () -> ()
    %cst_17 = arith.constant 2.500000e-01 : f32
    %50 = vector.broadcast %cst_17 : f32 to vector<2x8x8xf32>
    %51 = arith.mulf %49, %50 : vector<2x8x8xf32>
    %52 = vector.broadcast %12 : vector<2x1x8xf32> to vector<2x8x8xf32>
    %53 = arith.addf %51, %52 : vector<2x8x8xf32>
    %cst_18 = arith.constant dense<0xFF800000> : vector<2x8xf32>
    %54 = vector.multi_reduction <maximumf>, %53, %cst_18 [2] : vector<2x8x8xf32> to vector<2x8xf32>
    %55 = vector.shape_cast %54 : vector<2x8xf32> to vector<2x8x1xf32>
    %56 = vector.broadcast %55 : vector<2x8x1xf32> to vector<2x8x8xf32>
    %57 = arith.subf %53, %56 : vector<2x8x8xf32>
    %58 = math.exp %57 : vector<2x8x8xf32>
    %cst_19 = arith.constant dense<0.000000e+00> : vector<2x8xf32>
    %59 = vector.multi_reduction <add>, %58, %cst_19 [2] : vector<2x8x8xf32> to vector<2x8xf32>
    %60 = vector.shape_cast %59 : vector<2x8xf32> to vector<2x8x1xf32>
    %61 = tpu.reciprocal %60 {approx = true} : vector<2x8x1xf32> -> vector<2x8x1xf32>
    %62 = vector.broadcast %61 : vector<2x8x1xf32> to vector<2x8x8xf32>
    %63 = arith.mulf %58, %62 : vector<2x8x8xf32>
    %64 = arith.truncf %63 : vector<2x8x8xf32> to vector<2x8x8xbf16>
    "tpu.trace_start"() <{level = 10 : i32, message = "bqk,bkd->bqd"}> : () -> ()
    %cst_20 = arith.constant dense<0.000000e+00> : vector<2x8x16xf32>
    %65 = tpu.matmul %64, %48, %cst_20 {dimension_numbers = #tpu.dot_dimension_numbers<[2], [1], [1], [2], [0, 0, 0, 1, 1, 2], [0], [0]>} : vector<2x8x8xbf16>, vector<2x8x16xbf16>, vector<2x8x16xf32> -> vector<2x8x16xf32>
    "tpu.trace_stop"() : () -> ()
    %66 = vector.shape_cast %65 : vector<2x8x16xf32> to vector<16x16xf32>
    %67 = vector.extract_strided_slice %11 {offsets = [0, 32], sizes = [16, 16], strides = [1, 1]} : vector<16x192xf32> to vector<16x16xf32>
    %68 = vector.extract_strided_slice %11 {offsets = [0, 96], sizes = [16, 16], strides = [1, 1]} : vector<16x192xf32> to vector<16x16xf32>
    %69 = vector.extract_strided_slice %11 {offsets = [0, 160], sizes = [16, 16], strides = [1, 1]} : vector<16x192xf32> to vector<16x16xf32>
    %70 = vector.shape_cast %67 : vector<16x16xf32> to vector<2x8x16xf32>
    %71 = arith.truncf %70 : vector<2x8x16xf32> to vector<2x8x16xbf16>
    %72 = vector.shape_cast %68 : vector<16x16xf32> to vector<2x8x16xf32>
    %73 = arith.truncf %72 : vector<2x8x16xf32> to vector<2x8x16xbf16>
    %74 = vector.shape_cast %69 : vector<16x16xf32> to vector<2x8x16xf32>
    %75 = arith.truncf %74 : vector<2x8x16xf32> to vector<2x8x16xbf16>
    "tpu.trace_start"() <{level = 10 : i32, message = "bqd,bkd->bqk"}> : () -> ()
    %cst_21 = arith.constant dense<0.000000e+00> : vector<2x8x8xf32>
    %76 = tpu.matmul %71, %73, %cst_21 {dimension_numbers = #tpu.dot_dimension_numbers<[2], [2], [1], [1], [0, 0, 0, 1, 1, 1], [0], [0]>} : vector<2x8x16xbf16>, vector<2x8x16xbf16>, vector<2x8x8xf32> -> vector<2x8x8xf32>
    "tpu.trace_stop"() : () -> ()
    %cst_22 = arith.constant 2.500000e-01 : f32
    %77 = vector.broadcast %cst_22 : f32 to vector<2x8x8xf32>
    %78 = arith.mulf %76, %77 : vector<2x8x8xf32>
    %79 = vector.broadcast %12 : vector<2x1x8xf32> to vector<2x8x8xf32>
    %80 = arith.addf %78, %79 : vector<2x8x8xf32>
    %cst_23 = arith.constant dense<0xFF800000> : vector<2x8xf32>
    %81 = vector.multi_reduction <maximumf>, %80, %cst_23 [2] : vector<2x8x8xf32> to vector<2x8xf32>
    %82 = vector.shape_cast %81 : vector<2x8xf32> to vector<2x8x1xf32>
    %83 = vector.broadcast %82 : vector<2x8x1xf32> to vector<2x8x8xf32>
    %84 = arith.subf %80, %83 : vector<2x8x8xf32>
    %85 = math.exp %84 : vector<2x8x8xf32>
    %cst_24 = arith.constant dense<0.000000e+00> : vector<2x8xf32>
    %86 = vector.multi_reduction <add>, %85, %cst_24 [2] : vector<2x8x8xf32> to vector<2x8xf32>
    %87 = vector.shape_cast %86 : vector<2x8xf32> to vector<2x8x1xf32>
    %88 = tpu.reciprocal %87 {approx = true} : vector<2x8x1xf32> -> vector<2x8x1xf32>
    %89 = vector.broadcast %88 : vector<2x8x1xf32> to vector<2x8x8xf32>
    %90 = arith.mulf %85, %89 : vector<2x8x8xf32>
    %91 = arith.truncf %90 : vector<2x8x8xf32> to vector<2x8x8xbf16>
    "tpu.trace_start"() <{level = 10 : i32, message = "bqk,bkd->bqd"}> : () -> ()
    %cst_25 = arith.constant dense<0.000000e+00> : vector<2x8x16xf32>
    %92 = tpu.matmul %91, %75, %cst_25 {dimension_numbers = #tpu.dot_dimension_numbers<[2], [1], [1], [2], [0, 0, 0, 1, 1, 2], [0], [0]>} : vector<2x8x8xbf16>, vector<2x8x16xbf16>, vector<2x8x16xf32> -> vector<2x8x16xf32>
    "tpu.trace_stop"() : () -> ()
    %93 = vector.shape_cast %92 : vector<2x8x16xf32> to vector<16x16xf32>
    %94 = vector.extract_strided_slice %11 {offsets = [0, 48], sizes = [16, 16], strides = [1, 1]} : vector<16x192xf32> to vector<16x16xf32>
    %95 = vector.extract_strided_slice %11 {offsets = [0, 112], sizes = [16, 16], strides = [1, 1]} : vector<16x192xf32> to vector<16x16xf32>
    %96 = vector.extract_strided_slice %11 {offsets = [0, 176], sizes = [16, 16], strides = [1, 1]} : vector<16x192xf32> to vector<16x16xf32>
    %97 = vector.shape_cast %94 : vector<16x16xf32> to vector<2x8x16xf32>
    %98 = arith.truncf %97 : vector<2x8x16xf32> to vector<2x8x16xbf16>
    %99 = vector.shape_cast %95 : vector<16x16xf32> to vector<2x8x16xf32>
    %100 = arith.truncf %99 : vector<2x8x16xf32> to vector<2x8x16xbf16>
    %101 = vector.shape_cast %96 : vector<16x16xf32> to vector<2x8x16xf32>
    %102 = arith.truncf %101 : vector<2x8x16xf32> to vector<2x8x16xbf16>
    "tpu.trace_start"() <{level = 10 : i32, message = "bqd,bkd->bqk"}> : () -> ()
    %cst_26 = arith.constant dense<0.000000e+00> : vector<2x8x8xf32>
    %103 = tpu.matmul %98, %100, %cst_26 {dimension_numbers = #tpu.dot_dimension_numbers<[2], [2], [1], [1], [0, 0, 0, 1, 1, 1], [0], [0]>} : vector<2x8x16xbf16>, vector<2x8x16xbf16>, vector<2x8x8xf32> -> vector<2x8x8xf32>
    "tpu.trace_stop"() : () -> ()
    %cst_27 = arith.constant 2.500000e-01 : f32
    %104 = vector.broadcast %cst_27 : f32 to vector<2x8x8xf32>
    %105 = arith.mulf %103, %104 : vector<2x8x8xf32>
    %106 = vector.broadcast %12 : vector<2x1x8xf32> to vector<2x8x8xf32>
    %107 = arith.addf %105, %106 : vector<2x8x8xf32>
    %cst_28 = arith.constant dense<0xFF800000> : vector<2x8xf32>
    %108 = vector.multi_reduction <maximumf>, %107, %cst_28 [2] : vector<2x8x8xf32> to vector<2x8xf32>
    %109 = vector.shape_cast %108 : vector<2x8xf32> to vector<2x8x1xf32>
    %110 = vector.broadcast %109 : vector<2x8x1xf32> to vector<2x8x8xf32>
    %111 = arith.subf %107, %110 : vector<2x8x8xf32>
    %112 = math.exp %111 : vector<2x8x8xf32>
    %cst_29 = arith.constant dense<0.000000e+00> : vector<2x8xf32>
    %113 = vector.multi_reduction <add>, %112, %cst_29 [2] : vector<2x8x8xf32> to vector<2x8xf32>
    %114 = vector.shape_cast %113 : vector<2x8xf32> to vector<2x8x1xf32>
    %115 = tpu.reciprocal %114 {approx = true} : vector<2x8x1xf32> -> vector<2x8x1xf32>
    %116 = vector.broadcast %115 : vector<2x8x1xf32> to vector<2x8x8xf32>
    %117 = arith.mulf %112, %116 : vector<2x8x8xf32>
    %118 = arith.truncf %117 : vector<2x8x8xf32> to vector<2x8x8xbf16>
    "tpu.trace_start"() <{level = 10 : i32, message = "bqk,bkd->bqd"}> : () -> ()
    %cst_30 = arith.constant dense<0.000000e+00> : vector<2x8x16xf32>
    %119 = tpu.matmul %118, %102, %cst_30 {dimension_numbers = #tpu.dot_dimension_numbers<[2], [1], [1], [2], [0, 0, 0, 1, 1, 2], [0], [0]>} : vector<2x8x8xbf16>, vector<2x8x16xbf16>, vector<2x8x16xf32> -> vector<2x8x16xf32>
    "tpu.trace_stop"() : () -> ()
    %120 = vector.shape_cast %119 : vector<2x8x16xf32> to vector<16x16xf32>
    %121 = tpu.concatenate %39, %66, %93, %120 in 1 : vector<16x16xf32>, vector<16x16xf32>, vector<16x16xf32>, vector<16x16xf32> -> vector<16x64xf32>
    %122 = arith.truncf %121 : vector<16x64xf32> to vector<16x64xbf16>
    %c0_31 = arith.constant 0 : index
    %c0_32 = arith.constant 0 : index
    %c0_33 = arith.constant 0 : index
    %123 = vector.load %arg7[%c0_31, %c0_32, %c0_33] : memref<1x64x64xbf16, #tpu.memory_space<vmem>>, vector<1x64x64xbf16>
    %124 = vector.shape_cast %123 : vector<1x64x64xbf16> to vector<64x64xbf16>
    %cst_34 = arith.constant dense<0.000000e+00> : vector<16x64xf32>
    %125 = tpu.matmul %122, %124, %cst_34 {dimension_numbers = #tpu.dot_dimension_numbers<[1], [0], [0], [1], [0, 0, 1, 1], [], []>} : vector<16x64xbf16>, vector<64x64xbf16>, vector<16x64xf32> -> vector<16x64xf32>
    %c0_35 = arith.constant 0 : index
    %c0_36 = arith.constant 0 : index
    %c0_37 = arith.constant 0 : index
    %126 = vector.load %arg8[%c0_35, %c0_36, %c0_37] : memref<1x1x64xf32, #tpu.memory_space<vmem>>, vector<1x1x64xf32>
    %127 = vector.shape_cast %126 : vector<1x1x64xf32> to vector<1x64xf32>
    %128 = vector.broadcast %127 : vector<1x64xf32> to vector<16x64xf32>
    %129 = arith.addf %125, %128 : vector<16x64xf32>
    %130 = arith.addf %3, %129 : vector<16x64xf32>
    %c0_38 = arith.constant 0 : index
    %c0_39 = arith.constant 0 : index
    %c0_40 = arith.constant 0 : index
    %131 = vector.load %arg9[%c0_38, %c0_39, %c0_40] : memref<1x1x64xf32, #tpu.memory_space<vmem>>, vector<1x1x64xf32>
    %132 = vector.shape_cast %131 : vector<1x1x64xf32> to vector<1x64xf32>
    %c0_41 = arith.constant 0 : index
    %c0_42 = arith.constant 0 : index
    %c0_43 = arith.constant 0 : index
    %133 = vector.load %arg10[%c0_41, %c0_42, %c0_43] : memref<1x1x64xf32, #tpu.memory_space<vmem>>, vector<1x1x64xf32>
    %134 = vector.shape_cast %133 : vector<1x1x64xf32> to vector<1x64xf32>
    %cst_44 = arith.constant dense<0.000000e+00> : vector<16xf32>
    %135 = vector.multi_reduction <add>, %130, %cst_44 [1] : vector<16x64xf32> to vector<16xf32>
    %136 = vector.shape_cast %135 : vector<16xf32> to vector<16x1xf32>
    %cst_45 = arith.constant 6.400000e+01 : f32
    %137 = vector.broadcast %cst_45 : f32 to vector<16x1xf32>
    %138 = arith.divf %136, %137 : vector<16x1xf32>
    %139 = vector.broadcast %138 : vector<16x1xf32> to vector<16x64xf32>
    %140 = arith.subf %130, %139 : vector<16x64xf32>
    %141 = arith.mulf %140, %140 : vector<16x64xf32>
    %cst_46 = arith.constant dense<0.000000e+00> : vector<16xf32>
    %142 = vector.multi_reduction <add>, %141, %cst_46 [1] : vector<16x64xf32> to vector<16xf32>
    %143 = vector.shape_cast %142 : vector<16xf32> to vector<16x1xf32>
    %cst_47 = arith.constant 6.400000e+01 : f32
    %144 = vector.broadcast %cst_47 : f32 to vector<16x1xf32>
    %145 = arith.divf %143, %144 : vector<16x1xf32>
    %146 = vector.broadcast %138 : vector<16x1xf32> to vector<16x64xf32>
    %147 = arith.subf %130, %146 : vector<16x64xf32>
    %cst_48 = arith.constant 9.99999974E-6 : f32
    %148 = vector.broadcast %cst_48 : f32 to vector<16x1xf32>
    %149 = arith.addf %145, %148 : vector<16x1xf32>
    %150 = math.rsqrt %149 : vector<16x1xf32>
    %151 = vector.broadcast %150 : vector<16x1xf32> to vector<16x64xf32>
    %152 = arith.mulf %147, %151 : vector<16x64xf32>
    %153 = vector.broadcast %132 : vector<1x64xf32> to vector<16x64xf32>
    %154 = arith.mulf %152, %153 : vector<16x64xf32>
    %155 = vector.broadcast %134 : vector<1x64xf32> to vector<16x64xf32>
    %156 = arith.addf %154, %155 : vector<16x64xf32>
    %157 = arith.truncf %156 : vector<16x64xf32> to vector<16x64xbf16>
    %c0_49 = arith.constant 0 : index
    %c0_50 = arith.constant 0 : index
    %c0_51 = arith.constant 0 : index
    %158 = vector.load %arg11[%c0_49, %c0_50, %c0_51] : memref<1x64x128xbf16, #tpu.memory_space<vmem>>, vector<1x64x128xbf16>
    %159 = vector.shape_cast %158 : vector<1x64x128xbf16> to vector<64x128xbf16>
    %cst_52 = arith.constant dense<0.000000e+00> : vector<16x128xf32>
    %160 = tpu.matmul %157, %159, %cst_52 {dimension_numbers = #tpu.dot_dimension_numbers<[1], [0], [0], [1], [0, 0, 1, 1], [], []>} : vector<16x64xbf16>, vector<64x128xbf16>, vector<16x128xf32> -> vector<16x128xf32>
    %c0_53 = arith.constant 0 : index
    %c0_54 = arith.constant 0 : index
    %c0_55 = arith.constant 0 : index
    %161 = vector.load %arg12[%c0_53, %c0_54, %c0_55] : memref<1x1x128xf32, #tpu.memory_space<vmem>>, vector<1x1x128xf32>
    %162 = vector.shape_cast %161 : vector<1x1x128xf32> to vector<1x128xf32>
    %163 = vector.broadcast %162 : vector<1x128xf32> to vector<16x128xf32>
    %164 = arith.addf %160, %163 : vector<16x128xf32>
    %165 = arith.mulf %164, %164 : vector<16x128xf32>
    %166 = arith.mulf %164, %165 : vector<16x128xf32>
    %cst_56 = arith.constant 4.471500e-02 : f32
    %167 = vector.broadcast %cst_56 : f32 to vector<16x128xf32>
    %168 = arith.mulf %167, %166 : vector<16x128xf32>
    %169 = arith.addf %164, %168 : vector<16x128xf32>
    %cst_57 = arith.constant 0.797884583 : f32
    %170 = vector.broadcast %cst_57 : f32 to vector<16x128xf32>
    %171 = arith.mulf %170, %169 : vector<16x128xf32>
    %172 = math.tanh %171 : vector<16x128xf32>
    %cst_58 = arith.constant 1.000000e+00 : f32
    %173 = vector.broadcast %cst_58 : f32 to vector<16x128xf32>
    %174 = arith.addf %173, %172 : vector<16x128xf32>
    %cst_59 = arith.constant 5.000000e-01 : f32
    %175 = vector.broadcast %cst_59 : f32 to vector<16x128xf32>
    %176 = arith.mulf %175, %174 : vector<16x128xf32>
    %177 = arith.mulf %164, %176 : vector<16x128xf32>
    %178 = arith.truncf %177 : vector<16x128xf32> to vector<16x128xbf16>
    %c0_60 = arith.constant 0 : index
    %c0_61 = arith.constant 0 : index
    %c0_62 = arith.constant 0 : index
    %179 = vector.load %arg13[%c0_60, %c0_61, %c0_62] : memref<1x128x64xbf16, #tpu.memory_space<vmem>>, vector<1x128x64xbf16>
    %180 = vector.shape_cast %179 : vector<1x128x64xbf16> to vector<128x64xbf16>
    %cst_63 = arith.constant dense<0.000000e+00> : vector<16x64xf32>
    %181 = tpu.matmul %178, %180, %cst_63 {dimension_numbers = #tpu.dot_dimension_numbers<[1], [0], [0], [1], [0, 0, 1, 1], [], []>} : vector<16x128xbf16>, vector<128x64xbf16>, vector<16x64xf32> -> vector<16x64xf32>
    %c0_64 = arith.constant 0 : index
    %c0_65 = arith.constant 0 : index
    %c0_66 = arith.constant 0 : index
    %182 = vector.load %arg14[%c0_64, %c0_65, %c0_66] : memref<1x1x64xf32, #tpu.memory_space<vmem>>, vector<1x1x64xf32>
    %183 = vector.shape_cast %182 : vector<1x1x64xf32> to vector<1x64xf32>
    %184 = vector.broadcast %183 : vector<1x64xf32> to vector<16x64xf32>
    %185 = arith.addf %181, %184 : vector<16x64xf32>
    %186 = arith.addf %156, %185 : vector<16x64xf32>
    %c0_67 = arith.constant 0 : index
    %c0_68 = arith.constant 0 : index
    %c0_69 = arith.constant 0 : index
    %187 = vector.load %arg15[%c0_67, %c0_68, %c0_69] : memref<1x1x64xf32, #tpu.memory_space<vmem>>, vector<1x1x64xf32>
    %188 = vector.shape_cast %187 : vector<1x1x64xf32> to vector<1x64xf32>
    %c0_70 = arith.constant 0 : index
    %c0_71 = arith.constant 0 : index
    %c0_72 = arith.constant 0 : index
    %189 = vector.load %arg16[%c0_70, %c0_71, %c0_72] : memref<1x1x64xf32, #tpu.memory_space<vmem>>, vector<1x1x64xf32>
    %190 = vector.shape_cast %189 : vector<1x1x64xf32> to vector<1x64xf32>
    %cst_73 = arith.constant dense<0.000000e+00> : vector<16xf32>
    %191 = vector.multi_reduction <add>, %186, %cst_73 [1] : vector<16x64xf32> to vector<16xf32>
    %192 = vector.shape_cast %191 : vector<16xf32> to vector<16x1xf32>
    %cst_74 = arith.constant 6.400000e+01 : f32
    %193 = vector.broadcast %cst_74 : f32 to vector<16x1xf32>
    %194 = arith.divf %192, %193 : vector<16x1xf32>
    %195 = vector.broadcast %194 : vector<16x1xf32> to vector<16x64xf32>
    %196 = arith.subf %186, %195 : vector<16x64xf32>
    %197 = arith.mulf %196, %196 : vector<16x64xf32>
    %cst_75 = arith.constant dense<0.000000e+00> : vector<16xf32>
    %198 = vector.multi_reduction <add>, %197, %cst_75 [1] : vector<16x64xf32> to vector<16xf32>
    %199 = vector.shape_cast %198 : vector<16xf32> to vector<16x1xf32>
    %cst_76 = arith.constant 6.400000e+01 : f32
    %200 = vector.broadcast %cst_76 : f32 to vector<16x1xf32>
    %201 = arith.divf %199, %200 : vector<16x1xf32>
    %202 = vector.broadcast %194 : vector<16x1xf32> to vector<16x64xf32>
    %203 = arith.subf %186, %202 : vector<16x64xf32>
    %cst_77 = arith.constant 9.99999974E-6 : f32
    %204 = vector.broadcast %cst_77 : f32 to vector<16x1xf32>
    %205 = arith.addf %201, %204 : vector<16x1xf32>
    %206 = math.rsqrt %205 : vector<16x1xf32>
    %207 = vector.broadcast %206 : vector<16x1xf32> to vector<16x64xf32>
    %208 = arith.mulf %203, %207 : vector<16x64xf32>
    %209 = vector.broadcast %188 : vector<1x64xf32> to vector<16x64xf32>
    %210 = arith.mulf %208, %209 : vector<16x64xf32>
    %211 = vector.broadcast %190 : vector<1x64xf32> to vector<16x64xf32>
    %212 = arith.addf %210, %211 : vector<16x64xf32>
    %c0_78 = arith.constant 0 : index
    %c0_79 = arith.constant 0 : index
    %213 = vector.load %arg22[%c0_78, %c0_79] : memref<16x64xf32, #tpu.memory_space<vmem>>, vector<16x64xf32>
    tpu.vector_store %arg22[%c0_78, %c0_79], %212 {strides = array<i32>} : memref<16x64xf32, #tpu.memory_space<vmem>>, vector<16x64xf32>,
    %c1_i32 = arith.constant 1 : i32
    %214 = arith.cmpi eq, %arg0, %c1_i32 : i32
    %215 = arith.extui %214 : i1 to i32
    %c0_i32_80 = arith.constant 0 : i32
    %216 = arith.cmpi ne, %215, %c0_i32_80 : i32
    scf.if %216 {
      %217 = vector.extract_strided_slice %212 {offsets = [0, 0], sizes = [1, 64], strides = [1, 1]} : vector<16x64xf32> to vector<1x64xf32>
      %218 = vector.extract_strided_slice %212 {offsets = [8, 0], sizes = [1, 64], strides = [1, 1]} : vector<16x64xf32> to vector<1x64xf32>
      %219 = tpu.concatenate %217, %218 in 0 : vector<1x64xf32>, vector<1x64xf32> -> vector<2x64xf32>
      %220 = arith.truncf %219 : vector<2x64xf32> to vector<2x64xbf16>
      %c0_81 = arith.constant 0 : index
      %c0_82 = arith.constant 0 : index
      %221 = vector.load %arg17[%c0_81, %c0_82] : memref<64x64xbf16, #tpu.memory_space<vmem>>, vector<64x64xbf16>
      %cst_83 = arith.constant dense<0.000000e+00> : vector<2x64xf32>
      %222 = tpu.matmul %220, %221, %cst_83 {dimension_numbers = #tpu.dot_dimension_numbers<[1], [0], [0], [1], [0, 0, 1, 1], [], []>} : vector<2x64xbf16>, vector<64x64xbf16>, vector<2x64xf32> -> vector<2x64xf32>
      %c0_84 = arith.constant 0 : index
      %c0_85 = arith.constant 0 : index
      %223 = vector.load %arg18[%c0_84, %c0_85] : memref<1x64xf32, #tpu.memory_space<vmem>>, vector<1x64xf32>
      %224 = vector.broadcast %223 : vector<1x64xf32> to vector<2x64xf32>
      %225 = arith.addf %222, %224 : vector<2x64xf32>
      %226 = math.tanh %225 : vector<2x64xf32>
      %227 = arith.truncf %226 : vector<2x64xf32> to vector<2x64xbf16>
      %c0_86 = arith.constant 0 : index
      %c0_87 = arith.constant 0 : index
      %228 = vector.load %arg19[%c0_86, %c0_87] : memref<64x1xbf16, #tpu.memory_space<vmem>>, vector<64x1xbf16>
      %cst_88 = arith.constant dense<0.000000e+00> : vector<2x1xf32>
      %229 = tpu.matmul %227, %228, %cst_88 {dimension_numbers = #tpu.dot_dimension_numbers<[1], [0], [0], [1], [0, 0, 1, 1], [], []>} : vector<2x64xbf16>, vector<64x1xbf16>, vector<2x1xf32> -> vector<2x1xf32>
      %c0_89 = arith.constant 0 : index
      %c0_90 = arith.constant 0 : index
      %230 = vector.load %arg20[%c0_89, %c0_90] : memref<1x1xf32, #tpu.memory_space<vmem>>, vector<1x1xf32>
      %231 = vector.broadcast %230 : vector<1x1xf32> to vector<2x1xf32>
      %232 = arith.addf %229, %231 : vector<2x1xf32>
      %c0_91 = arith.constant 0 : index
      %c0_92 = arith.constant 0 : index
      %233 = vector.load %arg21[%c0_91, %c0_92] : memref<2x1xf32, #tpu.memory_space<vmem>>, vector<2x1xf32>
      tpu.vector_store %arg21[%c0_91, %c0_92], %232 {strides = array<i32>} : memref<2x1xf32, #tpu.memory_space<vmem>>, vector<2x1xf32>,
    } else {
    }
    return
  }
  func.func @transform_0(%arg0: i32) -> (i32, i32, i32) {
    %c0_i32 = arith.constant 0 : i32
    %c0_i32_0 = arith.constant 0 : i32
    %c0_i32_1 = arith.constant 0 : i32
    %c0_i32_2 = arith.constant 0 : i32
    return %c0_i32, %c0_i32_0, %c0_i32_1 : i32, i32, i32
  }
  func.func @transform_1(%arg0: i32) -> (i32, i32) {
    %c0_i32 = arith.constant 0 : i32
    %c0_i32_0 = arith.constant 0 : i32
    %c0_i32_1 = arith.constant 0 : i32
    return %c0_i32, %c0_i32_0 : i32, i32
  }
  func.func @transform_2(%arg0: i32) -> (i32, i32) {
    %c0_i32 = arith.constant 0 : i32
    %c0_i32_0 = arith.constant 0 : i32
    %c0_i32_1 = arith.constant 0 : i32
    return %c0_i32, %c0_i32_0 : i32, i32
  }
  func.func @transform_3(%arg0: i32) -> (i32, i32) {
    %c0_i32 = arith.constant 0 : i32
    %c0_i32_0 = arith.constant 0 : i32
    %c0_i32_1 = arith.constant 0 : i32
    return %c0_i32, %c0_i32_0 : i32, i32
  }
  func.func @transform_4(%arg0: i32) -> (i32, i32, i32) {
    %c0_i32 = arith.constant 0 : i32
    %c0_i32_0 = arith.constant 0 : i32
    %c0_i32_1 = arith.constant 0 : i32
    return %arg0, %c0_i32, %c0_i32_0 : i32, i32, i32
  }
  func.func @transform_5(%arg0: i32) -> (i32, i32, i32) {
    %c0_i32 = arith.constant 0 : i32
    %c0_i32_0 = arith.constant 0 : i32
    %c0_i32_1 = arith.constant 0 : i32
    return %arg0, %c0_i32, %c0_i32_0 : i32, i32, i32
  }
  func.func @transform_6(%arg0: i32) -> (i32, i32, i32) {
    %c0_i32 = arith.constant 0 : i32
    %c0_i32_0 = arith.constant 0 : i32
    %c0_i32_1 = arith.constant 0 : i32
    return %arg0, %c0_i32, %c0_i32_0 : i32, i32, i32
  }
  func.func @transform_7(%arg0: i32) -> (i32, i32, i32) {
    %c0_i32 = arith.constant 0 : i32
    %c0_i32_0 = arith.constant 0 : i32
    %c0_i32_1 = arith.constant 0 : i32
    return %arg0, %c0_i32, %c0_i32_0 : i32, i32, i32
  }
  func.func @transform_8(%arg0: i32) -> (i32, i32, i32) {
    %c0_i32 = arith.constant 0 : i32
    %c0_i32_0 = arith.constant 0 : i32
    %c0_i32_1 = arith.constant 0 : i32
    return %arg0, %c0_i32, %c0_i32_0 : i32, i32, i32
  }
  func.func @transform_9(%arg0: i32) -> (i32, i32, i32) {
    %c0_i32 = arith.constant 0 : i32
    %c0_i32_0 = arith.constant 0 : i32
    %c0_i32_1 = arith.constant 0 : i32
    return %arg0, %c0_i32, %c0_i32_0 : i32, i32, i32
  }
  func.func @transform_10(%arg0: i32) -> (i32, i32, i32) {
    %c0_i32 = arith.constant 0 : i32
    %c0_i32_0 = arith.constant 0 : i32
    %c0_i32_1 = arith.constant 0 : i32
    return %arg0, %c0_i32, %c0_i32_0 : i32, i32, i32
  }
  func.func @transform_11(%arg0: i32) -> (i32, i32, i32) {
    %c0_i32 = arith.constant 0 : i32
    %c0_i32_0 = arith.constant 0 : i32
    %c0_i32_1 = arith.constant 0 : i32
    return %arg0, %c0_i32, %c0_i32_0 : i32, i32, i32
  }
  func.func @transform_12(%arg0: i32) -> (i32, i32, i32) {
    %c0_i32 = arith.constant 0 : i32
    %c0_i32_0 = arith.constant 0 : i32
    %c0_i32_1 = arith.constant 0 : i32
    return %arg0, %c0_i32, %c0_i32_0 : i32, i32, i32
  }
  func.func @transform_13(%arg0: i32) -> (i32, i32, i32) {
    %c0_i32 = arith.constant 0 : i32
    %c0_i32_0 = arith.constant 0 : i32
    %c0_i32_1 = arith.constant 0 : i32
    return %arg0, %c0_i32, %c0_i32_0 : i32, i32, i32
  }
  func.func @transform_14(%arg0: i32) -> (i32, i32, i32) {
    %c0_i32 = arith.constant 0 : i32
    %c0_i32_0 = arith.constant 0 : i32
    %c0_i32_1 = arith.constant 0 : i32
    return %arg0, %c0_i32, %c0_i32_0 : i32, i32, i32
  }
  func.func @transform_15(%arg0: i32) -> (i32, i32, i32) {
    %c0_i32 = arith.constant 0 : i32
    %c0_i32_0 = arith.constant 0 : i32
    %c0_i32_1 = arith.constant 0 : i32
    return %arg0, %c0_i32, %c0_i32_0 : i32, i32, i32
  }
  func.func @transform_16(%arg0: i32) -> (i32, i32) {
    %c0_i32 = arith.constant 0 : i32
    %c0_i32_0 = arith.constant 0 : i32
    %c0_i32_1 = arith.constant 0 : i32
    return %c0_i32, %c0_i32_0 : i32, i32
  }
  func.func @transform_17(%arg0: i32) -> (i32, i32) {
    %c0_i32 = arith.constant 0 : i32
    %c0_i32_0 = arith.constant 0 : i32
    %c0_i32_1 = arith.constant 0 : i32
    return %c0_i32, %c0_i32_0 : i32, i32
  }
  func.func @transform_18(%arg0: i32) -> (i32, i32) {
    %c0_i32 = arith.constant 0 : i32
    %c0_i32_0 = arith.constant 0 : i32
    %c0_i32_1 = arith.constant 0 : i32
    return %c0_i32, %c0_i32_0 : i32, i32
  }
  func.func @transform_19(%arg0: i32) -> (i32, i32) {
    %c0_i32 = arith.constant 0 : i32
    %c0_i32_0 = arith.constant 0 : i32
    %c0_i32_1 = arith.constant 0 : i32
    return %c0_i32, %c0_i32_0 : i32, i32
  }
  func.func @transform_20(%arg0: i32) -> (i32, i32) {
    %c0_i32 = arith.constant 0 : i32
    %c0_i32_0 = arith.constant 0 : i32
    %c0_i32_1 = arith.constant 0 : i32
    return %c0_i32, %c0_i32_0 : i32, i32
  }
}

</mosaic_0001>

<llo_original>
// kernel: xlmroberta_regressor_forward.1
$region0: #{xlmroberta_regressor_forward.1}
  #allocation0 [shape = 'u32[]', space=smem, size = 0x4, offset = 0x4, fixed_abs, tag = 'smem constant byte address 0x4 - core index']
  #allocation1 [shape = 'u32[144,128]{1,0:T(1,128)}', space=vmem, size = 0x12000, scoped, tag = 'internal scratch']
  #allocation2 [shape = 'f32[16,64]{1,0:T(8,128)}', space=vmem, size = 0x2000, scoped, tag = 'scratch operand']
  #allocation3 [shape = 'f32[1,1]{1,0:T(1,128)S(1)}', space=vmem, size = 0x200, scoped, tag = 'scoped memory for xlmroberta_regressor_forward.1']
  %s0 = inlined_call_operand.vmem [shape: f32[2,1,8], index: 0, kind: input, shape index: {}]
  %s1 = inlined_call_operand.vmem [shape: f32[16,64], index: 1, kind: input, shape index: {}]
  %s2 = inlined_call_operand.vmem [shape: f32[1,64], index: 2, kind: input, shape index: {}]
  %s3 = inlined_call_operand.vmem [shape: f32[1,64], index: 3, kind: input, shape index: {}]
  %s4 = inlined_call_operand.vmem [shape: bf16[2,64,192], index: 4, kind: input, shape index: {}]
  %s5 = inlined_call_operand.vmem [shape: f32[2,1,192], index: 5, kind: input, shape index: {}]
  %s6 = inlined_call_operand.vmem [shape: bf16[2,64,64], index: 6, kind: input, shape index: {}]
  %s7 = inlined_call_operand.vmem [shape: f32[2,1,64], index: 7, kind: input, shape index: {}]
  %s8 = inlined_call_operand.vmem [shape: f32[2,1,64], index: 8, kind: input, shape index: {}]
  %s9 = inlined_call_operand.vmem [shape: f32[2,1,64], index: 9, kind: input, shape index: {}]
  %s10 = inlined_call_operand.vmem [shape: bf16[2,64,128], index: 10, kind: input, shape index: {}]
  %s11 = inlined_call_operand.vmem [shape: f32[2,1,128], index: 11, kind: input, shape index: {}]
  %s12 = inlined_call_operand.vmem [shape: bf16[2,128,64], index: 12, kind: input, shape index: {}]
  %s13 = inlined_call_operand.vmem [shape: f32[2,1,64], index: 13, kind: input, shape index: {}]
  %s14 = inlined_call_operand.vmem [shape: f32[2,1,64], index: 14, kind: input, shape index: {}]
  %s15 = inlined_call_operand.vmem [shape: f32[2,1,64], index: 15, kind: input, shape index: {}]
  %s16 = inlined_call_operand.vmem [shape: bf16[64,64], index: 16, kind: input, shape index: {}]
  %s17 = inlined_call_operand.vmem [shape: f32[1,64], index: 17, kind: input, shape index: {}]
  %s18 = inlined_call_operand.vmem [shape: bf16[64,1], index: 18, kind: input, shape index: {}]
  %s19 = inlined_call_operand.<no memory space> [shape: f32[1,1], index: 19, kind: input, shape index: {}]
  %s20 = inlined_call_operand.vmem [shape: f32[2,1], index: 20, kind: output, shape index: {}]
  %s21 = sld [smem:[#allocation0]]
  $region121: #{xlmroberta_regressor_forward.1} parent=0
    _
  %s23 = ssub.s32 1, %s21
  %s24 = scalar_select 0, %s23, %s21
  %v25 = vstv %s19
  %26 = vst [vmem:[#allocation3] sm:$0x1] %v25
  loop: start=0, step=1, limit=4
  $region2: #{xlmroberta_regressor_forward.1} parent=0 // loop_pre_header
    _
  $region3: #{xlmroberta_regressor_forward.1} parent=0 // loop_header
    %s28 = sphi 0, %s32
    %p29 = scmp.ge.s32.totalorder %s28, 4
    %s36 = sphi 0, %s36
    %s38 = sphi 0, %s36
    %s39 = sphi 0, %s38
    %s53 = sphi 0, %s39
    %s57 = sphi 0, %s57
    %s59 = sphi 0, %s57
    %s60 = sphi 0, %s59
    %s74 = sphi 0, %s60
    %s78 = sphi 0, %s78
    %s80 = sphi 0, %s78
    %s81 = sphi 0, %s80
    %s95 = sphi 0, %s81
    %s99 = sphi 0, %s99
    %s101 = sphi 0, %s99
    %s102 = sphi 0, %s101
    %s116 = sphi 0, %s102
    %s122 = sphi 0, %s124
    %s125 = sphi 0, %s122
    %s126 = sphi 0, %s125
    %s142 = sphi 0, %s126
    %s148 = sphi 0, %s150
    %s151 = sphi 0, %s148
    %s152 = sphi 0, %s151
    %s168 = sphi 0, %s152
    %s174 = sphi 0, %s176
    %s177 = sphi 0, %s174
    %s178 = sphi 0, %s177
    %s194 = sphi 0, %s178
    %s200 = sphi 0, %s202
    %s203 = sphi 0, %s200
    %s204 = sphi 0, %s203
    %s220 = sphi 0, %s204
    %s226 = sphi 0, %s228
    %s229 = sphi 0, %s226
    %s230 = sphi 0, %s229
    %s246 = sphi 0, %s230
    %s252 = sphi 0, %s254
    %s255 = sphi 0, %s252
    %s256 = sphi 0, %s255
    %s272 = sphi 0, %s256
    %s278 = sphi 0, %s280
    %s281 = sphi 0, %s278
    %s282 = sphi 0, %s281
    %s298 = sphi 0, %s282
    %s304 = sphi 0, %s306
    %s307 = sphi 0, %s304
    %s308 = sphi 0, %s307
    %s324 = sphi 0, %s308
    %s330 = sphi 0, %s332
    %s333 = sphi 0, %s330
    %s334 = sphi 0, %s333
    %s350 = sphi 0, %s334
    %s356 = sphi 0, %s358
    %s359 = sphi 0, %s356
    %s360 = sphi 0, %s359
    %s376 = sphi 0, %s360
    %s382 = sphi 0, %s384
    %s385 = sphi 0, %s382
    %s386 = sphi 0, %s385
    %s402 = sphi 0, %s386
    %s408 = sphi 0, %s410
    %s411 = sphi 0, %s408
    %s412 = sphi 0, %s411
    %s428 = sphi 0, %s412
    %s432 = sphi 0, %s432
    %s434 = sphi 0, %s432
    %s435 = sphi 0, %s434
    %s449 = sphi 0, %s435
    %s453 = sphi 0, %s453
    %s455 = sphi 0, %s453
    %s456 = sphi 0, %s455
    %s470 = sphi 0, %s456
    %s474 = sphi 0, %s474
    %s476 = sphi 0, %s474
    %s477 = sphi 0, %s476
    %s491 = sphi 0, %s477
    %s495 = sphi 0, %s495
    %s497 = sphi 0, %s495
    %s498 = sphi 0, %s497
    %s512 = sphi 0, %s498
    %s516 = sphi 0, %s516
    %s518 = sphi 0, %s516
    %s519 = sphi 0, %s518
    %s533 = sphi 0, %s519
  $region4: #{xlmroberta_regressor_forward.1} parent=0 // loop_header_branch
    %31 = sbr.rel (%p29) target = $region8
  $region5: #{xlmroberta_regressor_forward.1} parent=0 // loop_body
    %s33 = ssub.s32 %s28, 1
    %s34 = ssub.s32 %s28, 2
    %s35 = sadd.s32 %s28, 1
    %s37 = sadd.s32 %s36, 1
    %p40 = scmp.eq.s32.totalorder %s28, 1
    %p41 = scmp.ne.s32.totalorder %s36, %s38
    %p42 = scmp.eq.s32.totalorder %s28, 0
    %p43 = por %p41, %p42
    %p44 = scmp.ne.s32.totalorder %s36, %s38
    %p45 = scmp.eq.s32.totalorder %s33, 1
    %p46 = por %p44, %p45
    %p47 = scmp.ne.s32.totalorder %s38, %s39
    %p48 = scmp.eq.s32.totalorder %s33, 0
    %p49 = por %p47, %p48
    %p50 = scmp.ne.s32.totalorder %s38, %s39
    %p51 = scmp.eq.s32.totalorder %s34, 1
    %p52 = por %p50, %p51
    %p54 = scmp.ne.s32.totalorder %s39, %s53
    %p55 = scmp.eq.s32.totalorder %s34, 0
    %p56 = por %p54, %p55
    %s58 = sadd.s32 %s57, 1
    %p61 = scmp.eq.s32.totalorder %s28, 1
    %p62 = scmp.ne.s32.totalorder %s57, %s59
    %p63 = scmp.eq.s32.totalorder %s28, 0
    %p64 = por %p62, %p63
    %p65 = scmp.ne.s32.totalorder %s57, %s59
    %p66 = scmp.eq.s32.totalorder %s33, 1
    %p67 = por %p65, %p66
    %p68 = scmp.ne.s32.totalorder %s59, %s60
    %p69 = scmp.eq.s32.totalorder %s33, 0
    %p70 = por %p68, %p69
    %p71 = scmp.ne.s32.totalorder %s59, %s60
    %p72 = scmp.eq.s32.totalorder %s34, 1
    %p73 = por %p71, %p72
    %p75 = scmp.ne.s32.totalorder %s60, %s74
    %p76 = scmp.eq.s32.totalorder %s34, 0
    %p77 = por %p75, %p76
    %s79 = sadd.s32 %s78, 1
    %p82 = scmp.eq.s32.totalorder %s28, 1
    %p83 = scmp.ne.s32.totalorder %s78, %s80
    %p84 = scmp.eq.s32.totalorder %s28, 0
    %p85 = por %p83, %p84
    %p86 = scmp.ne.s32.totalorder %s78, %s80
    %p87 = scmp.eq.s32.totalorder %s33, 1
    %p88 = por %p86, %p87
    %p89 = scmp.ne.s32.totalorder %s80, %s81
    %p90 = scmp.eq.s32.totalorder %s33, 0
    %p91 = por %p89, %p90
    %p92 = scmp.ne.s32.totalorder %s80, %s81
    %p93 = scmp.eq.s32.totalorder %s34, 1
    %p94 = por %p92, %p93
    %p96 = scmp.ne.s32.totalorder %s81, %s95
    %p97 = scmp.eq.s32.totalorder %s34, 0
    %p98 = por %p96, %p97
    %s100 = sadd.s32 %s99, 1
    %p103 = scmp.eq.s32.totalorder %s28, 1
    %p104 = scmp.ne.s32.totalorder %s99, %s101
    %p105 = scmp.eq.s32.totalorder %s28, 0
    %p106 = por %p104, %p105
    %p107 = scmp.ne.s32.totalorder %s99, %s101
    %p108 = scmp.eq.s32.totalorder %s33, 1
    %p109 = por %p107, %p108
    %p110 = scmp.ne.s32.totalorder %s101, %s102
    %p111 = scmp.eq.s32.totalorder %s33, 0
    %p112 = por %p110, %p111
    %p113 = scmp.ne.s32.totalorder %s101, %s102
    %p114 = scmp.eq.s32.totalorder %s34, 1
    %p115 = por %p113, %p114
    %p117 = scmp.ne.s32.totalorder %s102, %s116
    %p118 = scmp.eq.s32.totalorder %s34, 0
    %p119 = por %p117, %p118
    %s120 = ssub.s32 %s28, %s35
    %p121 = scmp.eq.s32.totalorder %s120, 0
    %s123 = sadd.s32 %s122, 1
    %s124 = scalar_select %p121, %s122, %s123
    %p127 = pneg %p121
    %p128 = scmp.eq.s32.totalorder %s28, 1
    %p129 = por %p127, %p128
    %p130 = scmp.ne.s32.totalorder %s122, %s125
    %p131 = scmp.eq.s32.totalorder %s28, 0
    %p132 = por %p130, %p131
    %p133 = scmp.ne.s32.totalorder %s122, %s125
    %p134 = scmp.eq.s32.totalorder %s33, 1
    %p135 = por %p133, %p134
    %p136 = scmp.ne.s32.totalorder %s125, %s126
    %p137 = scmp.eq.s32.totalorder %s33, 0
    %p138 = por %p136, %p137
    %p139 = scmp.ne.s32.totalorder %s125, %s126
    %p140 = scmp.eq.s32.totalorder %s34, 1
    %p141 = por %p139, %p140
    %p143 = scmp.ne.s32.totalorder %s126, %s142
    %p144 = scmp.eq.s32.totalorder %s34, 0
    %p145 = por %p143, %p144
    %s146 = ssub.s32 %s28, %s35
    %p147 = scmp.eq.s32.totalorder %s146, 0
    %s149 = sadd.s32 %s148, 1
    %s150 = scalar_select %p147, %s148, %s149
    %p153 = pneg %p147
    %p154 = scmp.eq.s32.totalorder %s28, 1
    %p155 = por %p153, %p154
    %p156 = scmp.ne.s32.totalorder %s148, %s151
    %p157 = scmp.eq.s32.totalorder %s28, 0
    %p158 = por %p156, %p157
    %p159 = scmp.ne.s32.totalorder %s148, %s151
    %p160 = scmp.eq.s32.totalorder %s33, 1
    %p161 = por %p159, %p160
    %p162 = scmp.ne.s32.totalorder %s151, %s152
    %p163 = scmp.eq.s32.totalorder %s33, 0
    %p164 = por %p162, %p163
    %p165 = scmp.ne.s32.totalorder %s151, %s152
    %p166 = scmp.eq.s32.totalorder %s34, 1
    %p167 = por %p165, %p166
    %p169 = scmp.ne.s32.totalorder %s152, %s168
    %p170 = scmp.eq.s32.totalorder %s34, 0
    %p171 = por %p169, %p170
    %s172 = ssub.s32 %s28, %s35
    %p173 = scmp.eq.s32.totalorder %s172, 0
    %s175 = sadd.s32 %s174, 1
    %s176 = scalar_select %p173, %s174, %s175
    %p179 = pneg %p173
    %p180 = scmp.eq.s32.totalorder %s28, 1
    %p181 = por %p179, %p180
    %p182 = scmp.ne.s32.totalorder %s174, %s177
    %p183 = scmp.eq.s32.totalorder %s28, 0
    %p184 = por %p182, %p183
    %p185 = scmp.ne.s32.totalorder %s174, %s177
    %p186 = scmp.eq.s32.totalorder %s33, 1
    %p187 = por %p185, %p186
    %p188 = scmp.ne.s32.totalorder %s177, %s178
    %p189 = scmp.eq.s32.totalorder %s33, 0
    %p190 = por %p188, %p189
    %p191 = scmp.ne.s32.totalorder %s177, %s178
    %p192 = scmp.eq.s32.totalorder %s34, 1
    %p193 = por %p191, %p192
    %p195 = scmp.ne.s32.totalorder %s178, %s194
    %p196 = scmp.eq.s32.totalorder %s34, 0
    %p197 = por %p195, %p196
    %s198 = ssub.s32 %s28, %s35
    %p199 = scmp.eq.s32.totalorder %s198, 0
    %s201 = sadd.s32 %s200, 1
    %s202 = scalar_select %p199, %s200, %s201
    %p205 = pneg %p199
    %p206 = scmp.eq.s32.totalorder %s28, 1
    %p207 = por %p205, %p206
    %p208 = scmp.ne.s32.totalorder %s200, %s203
    %p209 = scmp.eq.s32.totalorder %s28, 0
    %p210 = por %p208, %p209
    %p211 = scmp.ne.s32.totalorder %s200, %s203
    %p212 = scmp.eq.s32.totalorder %s33, 1
    %p213 = por %p211, %p212
    %p214 = scmp.ne.s32.totalorder %s203, %s204
    %p215 = scmp.eq.s32.totalorder %s33, 0
    %p216 = por %p214, %p215
    %p217 = scmp.ne.s32.totalorder %s203, %s204
    %p218 = scmp.eq.s32.totalorder %s34, 1
    %p219 = por %p217, %p218
    %p221 = scmp.ne.s32.totalorder %s204, %s220
    %p222 = scmp.eq.s32.totalorder %s34, 0
    %p223 = por %p221, %p222
    %s224 = ssub.s32 %s28, %s35
    %p225 = scmp.eq.s32.totalorder %s224, 0
    %s227 = sadd.s32 %s226, 1
    %s228 = scalar_select %p225, %s226, %s227
    %p231 = pneg %p225
    %p232 = scmp.eq.s32.totalorder %s28, 1
    %p233 = por %p231, %p232
    %p234 = scmp.ne.s32.totalorder %s226, %s229
    %p235 = scmp.eq.s32.totalorder %s28, 0
    %p236 = por %p234, %p235
    %p237 = scmp.ne.s32.totalorder %s226, %s229
    %p238 = scmp.eq.s32.totalorder %s33, 1
    %p239 = por %p237, %p238
    %p240 = scmp.ne.s32.totalorder %s229, %s230
    %p241 = scmp.eq.s32.totalorder %s33, 0
    %p242 = por %p240, %p241
    %p243 = scmp.ne.s32.totalorder %s229, %s230
    %p244 = scmp.eq.s32.totalorder %s34, 1
    %p245 = por %p243, %p244
    %p247 = scmp.ne.s32.totalorder %s230, %s246
    %p248 = scmp.eq.s32.totalorder %s34, 0
    %p249 = por %p247, %p248
    %s250 = ssub.s32 %s28, %s35
    %p251 = scmp.eq.s32.totalorder %s250, 0
    %s253 = sadd.s32 %s252, 1
    %s254 = scalar_select %p251, %s252, %s253
    %p257 = pneg %p251
    %p258 = scmp.eq.s32.totalorder %s28, 1
    %p259 = por %p257, %p258
    %p260 = scmp.ne.s32.totalorder %s252, %s255
    %p261 = scmp.eq.s32.totalorder %s28, 0
    %p262 = por %p260, %p261
    %p263 = scmp.ne.s32.totalorder %s252, %s255
    %p264 = scmp.eq.s32.totalorder %s33, 1
    %p265 = por %p263, %p264
    %p266 = scmp.ne.s32.totalorder %s255, %s256
    %p267 = scmp.eq.s32.totalorder %s33, 0
    %p268 = por %p266, %p267
    %p269 = scmp.ne.s32.totalorder %s255, %s256
    %p270 = scmp.eq.s32.totalorder %s34, 1
    %p271 = por %p269, %p270
    %p273 = scmp.ne.s32.totalorder %s256, %s272
    %p274 = scmp.eq.s32.totalorder %s34, 0
    %p275 = por %p273, %p274
    %s276 = ssub.s32 %s28, %s35
    %p277 = scmp.eq.s32.totalorder %s276, 0
    %s279 = sadd.s32 %s278, 1
    %s280 = scalar_select %p277, %s278, %s279
    %p283 = pneg %p277
    %p284 = scmp.eq.s32.totalorder %s28, 1
    %p285 = por %p283, %p284
    %p286 = scmp.ne.s32.totalorder %s278, %s281
    %p287 = scmp.eq.s32.totalorder %s28, 0
    %p288 = por %p286, %p287
    %p289 = scmp.ne.s32.totalorder %s278, %s281
    %p290 = scmp.eq.s32.totalorder %s33, 1
    %p291 = por %p289, %p290
    %p292 = scmp.ne.s32.totalorder %s281, %s282
    %p293 = scmp.eq.s32.totalorder %s33, 0
    %p294 = por %p292, %p293
    %p295 = scmp.ne.s32.totalorder %s281, %s282
    %p296 = scmp.eq.s32.totalorder %s34, 1
    %p297 = por %p295, %p296
    %p299 = scmp.ne.s32.totalorder %s282, %s298
    %p300 = scmp.eq.s32.totalorder %s34, 0
    %p301 = por %p299, %p300
    %s302 = ssub.s32 %s28, %s35
    %p303 = scmp.eq.s32.totalorder %s302, 0
    %s305 = sadd.s32 %s304, 1
    %s306 = scalar_select %p303, %s304, %s305
    %p309 = pneg %p303
    %p310 = scmp.eq.s32.totalorder %s28, 1
    %p311 = por %p309, %p310
    %p312 = scmp.ne.s32.totalorder %s304, %s307
    %p313 = scmp.eq.s32.totalorder %s28, 0
    %p314 = por %p312, %p313
    %p315 = scmp.ne.s32.totalorder %s304, %s307
    %p316 = scmp.eq.s32.totalorder %s33, 1
    %p317 = por %p315, %p316
    %p318 = scmp.ne.s32.totalorder %s307, %s308
    %p319 = scmp.eq.s32.totalorder %s33, 0
    %p320 = por %p318, %p319
    %p321 = scmp.ne.s32.totalorder %s307, %s308
    %p322 = scmp.eq.s32.totalorder %s34, 1
    %p323 = por %p321, %p322
    %p325 = scmp.ne.s32.totalorder %s308, %s324
    %p326 = scmp.eq.s32.totalorder %s34, 0
    %p327 = por %p325, %p326
    %s328 = ssub.s32 %s28, %s35
    %p329 = scmp.eq.s32.totalorder %s328, 0
    %s331 = sadd.s32 %s330, 1
    %s332 = scalar_select %p329, %s330, %s331
    %p335 = pneg %p329
    %p336 = scmp.eq.s32.totalorder %s28, 1
    %p337 = por %p335, %p336
    %p338 = scmp.ne.s32.totalorder %s330, %s333
    %p339 = scmp.eq.s32.totalorder %s28, 0
    %p340 = por %p338, %p339
    %p341 = scmp.ne.s32.totalorder %s330, %s333
    %p342 = scmp.eq.s32.totalorder %s33, 1
    %p343 = por %p341, %p342
    %p344 = scmp.ne.s32.totalorder %s333, %s334
    %p345 = scmp.eq.s32.totalorder %s33, 0
    %p346 = por %p344, %p345
    %p347 = scmp.ne.s32.totalorder %s333, %s334
    %p348 = scmp.eq.s32.totalorder %s34, 1
    %p349 = por %p347, %p348
    %p351 = scmp.ne.s32.totalorder %s334, %s350
    %p352 = scmp.eq.s32.totalorder %s34, 0
    %p353 = por %p351, %p352
    %s354 = ssub.s32 %s28, %s35
    %p355 = scmp.eq.s32.totalorder %s354, 0
    %s357 = sadd.s32 %s356, 1
    %s358 = scalar_select %p355, %s356, %s357
    %p361 = pneg %p355
    %p362 = scmp.eq.s32.totalorder %s28, 1
    %p363 = por %p361, %p362
    %p364 = scmp.ne.s32.totalorder %s356, %s359
    %p365 = scmp.eq.s32.totalorder %s28, 0
    %p366 = por %p364, %p365
    %p367 = scmp.ne.s32.totalorder %s356, %s359
    %p368 = scmp.eq.s32.totalorder %s33, 1
    %p369 = por %p367, %p368
    %p370 = scmp.ne.s32.totalorder %s359, %s360
    %p371 = scmp.eq.s32.totalorder %s33, 0
    %p372 = por %p370, %p371
    %p373 = scmp.ne.s32.totalorder %s359, %s360
    %p374 = scmp.eq.s32.totalorder %s34, 1
    %p375 = por %p373, %p374
    %p377 = scmp.ne.s32.totalorder %s360, %s376
    %p378 = scmp.eq.s32.totalorder %s34, 0
    %p379 = por %p377, %p378
    %s380 = ssub.s32 %s28, %s35
    %p381 = scmp.eq.s32.totalorder %s380, 0
    %s383 = sadd.s32 %s382, 1
    %s384 = scalar_select %p381, %s382, %s383
    %p387 = pneg %p381
    %p388 = scmp.eq.s32.totalorder %s28, 1
    %p389 = por %p387, %p388
    %p390 = scmp.ne.s32.totalorder %s382, %s385
    %p391 = scmp.eq.s32.totalorder %s28, 0
    %p392 = por %p390, %p391
    %p393 = scmp.ne.s32.totalorder %s382, %s385
    %p394 = scmp.eq.s32.totalorder %s33, 1
    %p395 = por %p393, %p394
    %p396 = scmp.ne.s32.totalorder %s385, %s386
    %p397 = scmp.eq.s32.totalorder %s33, 0
    %p398 = por %p396, %p397
    %p399 = scmp.ne.s32.totalorder %s385, %s386
    %p400 = scmp.eq.s32.totalorder %s34, 1
    %p401 = por %p399, %p400
    %p403 = scmp.ne.s32.totalorder %s386, %s402
    %p404 = scmp.eq.s32.totalorder %s34, 0
    %p405 = por %p403, %p404
    %s406 = ssub.s32 %s28, %s35
    %p407 = scmp.eq.s32.totalorder %s406, 0
    %s409 = sadd.s32 %s408, 1
    %s410 = scalar_select %p407, %s408, %s409
    %p413 = pneg %p407
    %p414 = scmp.eq.s32.totalorder %s28, 1
    %p415 = por %p413, %p414
    %p416 = scmp.ne.s32.totalorder %s408, %s411
    %p417 = scmp.eq.s32.totalorder %s28, 0
    %p418 = por %p416, %p417
    %p419 = scmp.ne.s32.totalorder %s408, %s411
    %p420 = scmp.eq.s32.totalorder %s33, 1
    %p421 = por %p419, %p420
    %p422 = scmp.ne.s32.totalorder %s411, %s412
    %p423 = scmp.eq.s32.totalorder %s33, 0
    %p424 = por %p422, %p423
    %p425 = scmp.ne.s32.totalorder %s411, %s412
    %p426 = scmp.eq.s32.totalorder %s34, 1
    %p427 = por %p425, %p426
    %p429 = scmp.ne.s32.totalorder %s412, %s428
    %p430 = scmp.eq.s32.totalorder %s34, 0
    %p431 = por %p429, %p430
    %s433 = sadd.s32 %s432, 1
    %p436 = scmp.eq.s32.totalorder %s28, 1
    %p437 = scmp.ne.s32.totalorder %s432, %s434
    %p438 = scmp.eq.s32.totalorder %s28, 0
    %p439 = por %p437, %p438
    %p440 = scmp.ne.s32.totalorder %s432, %s434
    %p441 = scmp.eq.s32.totalorder %s33, 1
    %p442 = por %p440, %p441
    %p443 = scmp.ne.s32.totalorder %s434, %s435
    %p444 = scmp.eq.s32.totalorder %s33, 0
    %p445 = por %p443, %p444
    %p446 = scmp.ne.s32.totalorder %s434, %s435
    %p447 = scmp.eq.s32.totalorder %s34, 1
    %p448 = por %p446, %p447
    %p450 = scmp.ne.s32.totalorder %s435, %s449
    %p451 = scmp.eq.s32.totalorder %s34, 0
    %p452 = por %p450, %p451
    %s454 = sadd.s32 %s453, 1
    %p457 = scmp.eq.s32.totalorder %s28, 1
    %p458 = scmp.ne.s32.totalorder %s453, %s455
    %p459 = scmp.eq.s32.totalorder %s28, 0
    %p460 = por %p458, %p459
    %p461 = scmp.ne.s32.totalorder %s453, %s455
    %p462 = scmp.eq.s32.totalorder %s33, 1
    %p463 = por %p461, %p462
    %p464 = scmp.ne.s32.totalorder %s455, %s456
    %p465 = scmp.eq.s32.totalorder %s33, 0
    %p466 = por %p464, %p465
    %p467 = scmp.ne.s32.totalorder %s455, %s456
    %p468 = scmp.eq.s32.totalorder %s34, 1
    %p469 = por %p467, %p468
    %p471 = scmp.ne.s32.totalorder %s456, %s470
    %p472 = scmp.eq.s32.totalorder %s34, 0
    %p473 = por %p471, %p472
    %s475 = sadd.s32 %s474, 1
    %p478 = scmp.eq.s32.totalorder %s28, 1
    %p479 = scmp.ne.s32.totalorder %s474, %s476
    %p480 = scmp.eq.s32.totalorder %s28, 0
    %p481 = por %p479, %p480
    %p482 = scmp.ne.s32.totalorder %s474, %s476
    %p483 = scmp.eq.s32.totalorder %s33, 1
    %p484 = por %p482, %p483
    %p485 = scmp.ne.s32.totalorder %s476, %s477
    %p486 = scmp.eq.s32.totalorder %s33, 0
    %p487 = por %p485, %p486
    %p488 = scmp.ne.s32.totalorder %s476, %s477
    %p489 = scmp.eq.s32.totalorder %s34, 1
    %p490 = por %p488, %p489
    %p492 = scmp.ne.s32.totalorder %s477, %s491
    %p493 = scmp.eq.s32.totalorder %s34, 0
    %p494 = por %p492, %p493
    %s496 = sadd.s32 %s495, 1
    %p499 = scmp.eq.s32.totalorder %s28, 1
    %p500 = scmp.ne.s32.totalorder %s495, %s497
    %p501 = scmp.eq.s32.totalorder %s28, 0
    %p502 = por %p500, %p501
    %p503 = scmp.ne.s32.totalorder %s495, %s497
    %p504 = scmp.eq.s32.totalorder %s33, 1
    %p505 = por %p503, %p504
    %p506 = scmp.ne.s32.totalorder %s497, %s498
    %p507 = scmp.eq.s32.totalorder %s33, 0
    %p508 = por %p506, %p507
    %p509 = scmp.ne.s32.totalorder %s497, %s498
    %p510 = scmp.eq.s32.totalorder %s34, 1
    %p511 = por %p509, %p510
    %p513 = scmp.ne.s32.totalorder %s498, %s512
    %p514 = scmp.eq.s32.totalorder %s34, 0
    %p515 = por %p513, %p514
    %s517 = sadd.s32 %s516, 1
    %p520 = scmp.eq.s32.totalorder %s28, 1
    %p521 = scmp.ne.s32.totalorder %s516, %s518
    %p522 = scmp.eq.s32.totalorder %s28, 0
    %p523 = por %p521, %p522
    %p524 = scmp.ne.s32.totalorder %s516, %s518
    %p525 = scmp.eq.s32.totalorder %s33, 1
    %p526 = por %p524, %p525
    %p527 = scmp.ne.s32.totalorder %s518, %s519
    %p528 = scmp.eq.s32.totalorder %s33, 0
    %p529 = por %p527, %p528
    %p530 = scmp.ne.s32.totalorder %s518, %s519
    %p531 = scmp.eq.s32.totalorder %s34, 1
    %p532 = por %p530, %p531
    %p534 = scmp.ne.s32.totalorder %s519, %s533
    %p535 = scmp.eq.s32.totalorder %s34, 0
    %p536 = por %p534, %p535
    %p537 = scmp.le.s32.totalorder 1, %s28
    %p538 = scmp.lt.s32.totalorder %s28, 3
    %p539 = pnand %p537, %p538
    %p540 = pneg %p539
    // Predicated region
    $region9: #{xlmroberta_regressor_forward.1} parent=5 // pred_check
      _
    $region10: #{xlmroberta_regressor_forward.1} parent=5 // pred_check_branch
      %542 = sbr.rel (%p539) target = $region12
    $region11: #{xlmroberta_regressor_forward.1} parent=5 // pred_region
      %s543 = ssub.s32 %s28, 1
      // Predicated region
      $region13: #{xlmroberta_regressor_forward.1} parent=11 // pred_check
        %p544 = pneg %p49
      $region14: #{xlmroberta_regressor_forward.1} parent=11 // pred_check_branch
        %546 = sbr.rel (%p544) target = $region16
      $region15: #{xlmroberta_regressor_forward.1} parent=11 // pred_region
        _
      $region16: #{xlmroberta_regressor_forward.1} parent=11 // pred_fallthru
        _
      // Predicated region
      $region17: #{xlmroberta_regressor_forward.1} parent=11 // pred_check
        %p547 = pneg %p70
      $region18: #{xlmroberta_regressor_forward.1} parent=11 // pred_check_branch
        %549 = sbr.rel (%p547) target = $region20
      $region19: #{xlmroberta_regressor_forward.1} parent=11 // pred_region
        _
      $region20: #{xlmroberta_regressor_forward.1} parent=11 // pred_fallthru
        _
      // Predicated region
      $region21: #{xlmroberta_regressor_forward.1} parent=11 // pred_check
        %p550 = pneg %p91
      $region22: #{xlmroberta_regressor_forward.1} parent=11 // pred_check_branch
        %552 = sbr.rel (%p550) target = $region24
      $region23: #{xlmroberta_regressor_forward.1} parent=11 // pred_region
        _
      $region24: #{xlmroberta_regressor_forward.1} parent=11 // pred_fallthru
        _
      // Predicated region
      $region25: #{xlmroberta_regressor_forward.1} parent=11 // pred_check
        %p553 = pneg %p112
      $region26: #{xlmroberta_regressor_forward.1} parent=11 // pred_check_branch
        %555 = sbr.rel (%p553) target = $region28
      $region27: #{xlmroberta_regressor_forward.1} parent=11 // pred_region
        _
      $region28: #{xlmroberta_regressor_forward.1} parent=11 // pred_fallthru
        _
      // Predicated region
      $region29: #{xlmroberta_regressor_forward.1} parent=11 // pred_check
        %p556 = pneg %p445
      $region30: #{xlmroberta_regressor_forward.1} parent=11 // pred_check_branch
        %558 = sbr.rel (%p556) target = $region32
      $region31: #{xlmroberta_regressor_forward.1} parent=11 // pred_region
        _
      $region32: #{xlmroberta_regressor_forward.1} parent=11 // pred_fallthru
        _
      // Predicated region
      $region33: #{xlmroberta_regressor_forward.1} parent=11 // pred_check
        %p559 = pneg %p466
      $region34: #{xlmroberta_regressor_forward.1} parent=11 // pred_check_branch
        %561 = sbr.rel (%p559) target = $region36
      $region35: #{xlmroberta_regressor_forward.1} parent=11 // pred_region
        _
      $region36: #{xlmroberta_regressor_forward.1} parent=11 // pred_fallthru
        _
      // Predicated region
      $region37: #{xlmroberta_regressor_forward.1} parent=11 // pred_check
        %p562 = pneg %p487
      $region38: #{xlmroberta_regressor_forward.1} parent=11 // pred_check_branch
        %564 = sbr.rel (%p562) target = $region40
      $region39: #{xlmroberta_regressor_forward.1} parent=11 // pred_region
        _
      $region40: #{xlmroberta_regressor_forward.1} parent=11 // pred_fallthru
        _
      // Predicated region
      $region41: #{xlmroberta_regressor_forward.1} parent=11 // pred_check
        %p565 = pneg %p508
      $region42: #{xlmroberta_regressor_forward.1} parent=11 // pred_check_branch
        %567 = sbr.rel (%p565) target = $region44
      $region43: #{xlmroberta_regressor_forward.1} parent=11 // pred_region
        _
      $region44: #{xlmroberta_regressor_forward.1} parent=11 // pred_fallthru
        _
    $region12: #{xlmroberta_regressor_forward.1} parent=5 // pred_fallthru
      _
    %p568 = scmp.lt.s32.totalorder %s28, 2
    // Predicated region
    $region45: #{xlmroberta_regressor_forward.1} parent=5 // pred_check
      %p569 = pneg %p568
    $region46: #{xlmroberta_regressor_forward.1} parent=5 // pred_check_branch
      %571 = sbr.rel (%p569) target = $region48
    $region47: #{xlmroberta_regressor_forward.1} parent=5 // pred_region
      // Predicated region
      $region49: #{xlmroberta_regressor_forward.1} parent=47 // pred_check
        %p572 = pneg %p132
      $region50: #{xlmroberta_regressor_forward.1} parent=47 // pred_check_branch
        %574 = sbr.rel (%p572) target = $region52
      $region51: #{xlmroberta_regressor_forward.1} parent=47 // pred_region
        %p575 = scmp.lt.s32.totalorder %s28, 1
        %s576 = scalar_select %p575, %s28, 1
        %s577 = smul.addr %s576, 16
        %s578 = smul.addr %s577, 4
        %s579 = scalar_lea.vmem %s4, %s578
      $region52: #{xlmroberta_regressor_forward.1} parent=47 // pred_fallthru
        _
      // Predicated region
      $region53: #{xlmroberta_regressor_forward.1} parent=47 // pred_check
        %p580 = pneg %p158
      $region54: #{xlmroberta_regressor_forward.1} parent=47 // pred_check_branch
        %582 = sbr.rel (%p580) target = $region56
      $region55: #{xlmroberta_regressor_forward.1} parent=47 // pred_region
        %p583 = scmp.lt.s32.totalorder %s28, 1
        %s584 = scalar_select %p583, %s28, 1
        %s585 = smul.addr %s584, 2
        %s586 = scalar_lea.vmem %s5, %s585
      $region56: #{xlmroberta_regressor_forward.1} parent=47 // pred_fallthru
        _
      // Predicated region
      $region57: #{xlmroberta_regressor_forward.1} parent=47 // pred_check
        %p587 = pneg %p184
      $region58: #{xlmroberta_regressor_forward.1} parent=47 // pred_check_branch
        %589 = sbr.rel (%p587) target = $region60
      $region59: #{xlmroberta_regressor_forward.1} parent=47 // pred_region
        %p590 = scmp.lt.s32.totalorder %s28, 1
        %s591 = scalar_select %p590, %s28, 1
        %s592 = smul.addr %s591, 8
        %s593 = smul.addr %s592, 4
        %s594 = scalar_lea.vmem %s6, %s593
      $region60: #{xlmroberta_regressor_forward.1} parent=47 // pred_fallthru
        _
      // Predicated region
      $region61: #{xlmroberta_regressor_forward.1} parent=47 // pred_check
        %p595 = pneg %p210
      $region62: #{xlmroberta_regressor_forward.1} parent=47 // pred_check_branch
        %597 = sbr.rel (%p595) target = $region64
      $region63: #{xlmroberta_regressor_forward.1} parent=47 // pred_region
        %p598 = scmp.lt.s32.totalorder %s28, 1
        %s599 = scalar_select %p598, %s28, 1
        %s600 = scalar_lea.vmem %s7, %s599
      $region64: #{xlmroberta_regressor_forward.1} parent=47 // pred_fallthru
        _
      // Predicated region
      $region65: #{xlmroberta_regressor_forward.1} parent=47 // pred_check
        %p601 = pneg %p236
      $region66: #{xlmroberta_regressor_forward.1} parent=47 // pred_check_branch
        %603 = sbr.rel (%p601) target = $region68
      $region67: #{xlmroberta_regressor_forward.1} parent=47 // pred_region
        %p604 = scmp.lt.s32.totalorder %s28, 1
        %s605 = scalar_select %p604, %s28, 1
        %s606 = scalar_lea.vmem %s8, %s605
      $region68: #{xlmroberta_regressor_forward.1} parent=47 // pred_fallthru
        _
      // Predicated region
      $region69: #{xlmroberta_regressor_forward.1} parent=47 // pred_check
        %p607 = pneg %p262
      $region70: #{xlmroberta_regressor_forward.1} parent=47 // pred_check_branch
        %609 = sbr.rel (%p607) target = $region72
      $region71: #{xlmroberta_regressor_forward.1} parent=47 // pred_region
        %p610 = scmp.lt.s32.totalorder %s28, 1
        %s611 = scalar_select %p610, %s28, 1
        %s612 = scalar_lea.vmem %s9, %s611
      $region72: #{xlmroberta_regressor_forward.1} parent=47 // pred_fallthru
        _
      // Predicated region
      $region73: #{xlmroberta_regressor_forward.1} parent=47 // pred_check
        %p613 = pneg %p288
      $region74: #{xlmroberta_regressor_forward.1} parent=47 // pred_check_branch
        %615 = sbr.rel (%p613) target = $region76
      $region75: #{xlmroberta_regressor_forward.1} parent=47 // pred_region
        %p616 = scmp.lt.s32.totalorder %s28, 1
        %s617 = scalar_select %p616, %s28, 1
        %s618 = smul.addr %s617, 8
        %s619 = smul.addr %s618, 4
        %s620 = scalar_lea.vmem %s10, %s619
      $region76: #{xlmroberta_regressor_forward.1} parent=47 // pred_fallthru
        _
      // Predicated region
      $region77: #{xlmroberta_regressor_forward.1} parent=47 // pred_check
        %p621 = pneg %p314
      $region78: #{xlmroberta_regressor_forward.1} parent=47 // pred_check_branch
        %623 = sbr.rel (%p621) target = $region80
      $region79: #{xlmroberta_regressor_forward.1} parent=47 // pred_region
        %p624 = scmp.lt.s32.totalorder %s28, 1
        %s625 = scalar_select %p624, %s28, 1
        %s626 = scalar_lea.vmem %s11, %s625
      $region80: #{xlmroberta_regressor_forward.1} parent=47 // pred_fallthru
        _
      // Predicated region
      $region81: #{xlmroberta_regressor_forward.1} parent=47 // pred_check
        %p627 = pneg %p340
      $region82: #{xlmroberta_regressor_forward.1} parent=47 // pred_check_branch
        %629 = sbr.rel (%p627) target = $region84
      $region83: #{xlmroberta_regressor_forward.1} parent=47 // pred_region
        %p630 = scmp.lt.s32.totalorder %s28, 1
        %s631 = scalar_select %p630, %s28, 1
        %s632 = smul.addr %s631, 16
        %s633 = smul.addr %s632, 4
        %s634 = scalar_lea.vmem %s12, %s633
      $region84: #{xlmroberta_regressor_forward.1} parent=47 // pred_fallthru
        _
      // Predicated region
      $region85: #{xlmroberta_regressor_forward.1} parent=47 // pred_check
        %p635 = pneg %p366
      $region86: #{xlmroberta_regressor_forward.1} parent=47 // pred_check_branch
        %637 = sbr.rel (%p635) target = $region88
      $region87: #{xlmroberta_regressor_forward.1} parent=47 // pred_region
        %p638 = scmp.lt.s32.totalorder %s28, 1
        %s639 = scalar_select %p638, %s28, 1
        %s640 = scalar_lea.vmem %s13, %s639
      $region88: #{xlmroberta_regressor_forward.1} parent=47 // pred_fallthru
        _
      // Predicated region
      $region89: #{xlmroberta_regressor_forward.1} parent=47 // pred_check
        %p641 = pneg %p392
      $region90: #{xlmroberta_regressor_forward.1} parent=47 // pred_check_branch
        %643 = sbr.rel (%p641) target = $region92
      $region91: #{xlmroberta_regressor_forward.1} parent=47 // pred_region
        %p644 = scmp.lt.s32.totalorder %s28, 1
        %s645 = scalar_select %p644, %s28, 1
        %s646 = scalar_lea.vmem %s14, %s645
      $region92: #{xlmroberta_regressor_forward.1} parent=47 // pred_fallthru
        _
      // Predicated region
      $region93: #{xlmroberta_regressor_forward.1} parent=47 // pred_check
        %p647 = pneg %p418
      $region94: #{xlmroberta_regressor_forward.1} parent=47 // pred_check_branch
        %649 = sbr.rel (%p647) target = $region96
      $region95: #{xlmroberta_regressor_forward.1} parent=47 // pred_region
        %p650 = scmp.lt.s32.totalorder %s28, 1
        %s651 = scalar_select %p650, %s28, 1
        %s652 = scalar_lea.vmem %s15, %s651
      $region96: #{xlmroberta_regressor_forward.1} parent=47 // pred_fallthru
        _
    $region48: #{xlmroberta_regressor_forward.1} parent=5 // pred_fallthru
      _
    %p653 = scmp.le.s32.totalorder 1, %s28
    %p654 = scmp.lt.s32.totalorder %s28, 3
    %p655 = pnand %p653, %p654
    %p656 = pneg %p655
    // Predicated region
    $region97: #{xlmroberta_regressor_forward.1} parent=5 // pred_check
      _
    $region98: #{xlmroberta_regressor_forward.1} parent=5 // pred_check_branch
      %658 = sbr.rel (%p655) target = $region100
    $region99: #{xlmroberta_regressor_forward.1} parent=5 // pred_region
      %s659 = ssub.s32 %s28, 1
      %p660 = pneg %p49
      %p661 = pneg %p46
      %p662 = pneg %p70
      %p663 = pneg %p67
      %p664 = pneg %p91
      %p665 = pneg %p88
      %p666 = pneg %p112
      %p667 = pneg %p109
      %p668 = scmp.lt.s32.totalorder %s33, 1
      %s669 = scalar_select %p668, %s33, 1
      %s670 = smul.addr %s669, 16
      %s671 = smul.addr %s670, 4
      %s672 = scalar_lea.vmem %s4, %s671
      %p673 = pneg %p138
      %p674 = pneg %p135
      %p675 = scmp.lt.s32.totalorder %s33, 1
      %s676 = scalar_select %p675, %s33, 1
      %s677 = smul.addr %s676, 2
      %s678 = scalar_lea.vmem %s5, %s677
      %p679 = pneg %p164
      %p680 = pneg %p161
      %p681 = scmp.lt.s32.totalorder %s33, 1
      %s682 = scalar_select %p681, %s33, 1
      %s683 = smul.addr %s682, 8
      %s684 = smul.addr %s683, 4
      %s685 = scalar_lea.vmem %s6, %s684
      %p686 = pneg %p190
      %p687 = pneg %p187
      %p688 = scmp.lt.s32.totalorder %s33, 1
      %s689 = scalar_select %p688, %s33, 1
      %s690 = scalar_lea.vmem %s7, %s689
      %p691 = pneg %p216
      %p692 = pneg %p213
      %p693 = scmp.lt.s32.totalorder %s33, 1
      %s694 = scalar_select %p693, %s33, 1
      %s695 = scalar_lea.vmem %s8, %s694
      %p696 = pneg %p242
      %p697 = pneg %p239
      %p698 = scmp.lt.s32.totalorder %s33, 1
      %s699 = scalar_select %p698, %s33, 1
      %s700 = scalar_lea.vmem %s9, %s699
      %p701 = pneg %p268
      %p702 = pneg %p265
      %p703 = scmp.lt.s32.totalorder %s33, 1
      %s704 = scalar_select %p703, %s33, 1
      %s705 = smul.addr %s704, 8
      %s706 = smul.addr %s705, 4
      %s707 = scalar_lea.vmem %s10, %s706
      %p708 = pneg %p294
      %p709 = pneg %p291
      %p710 = scmp.lt.s32.totalorder %s33, 1
      %s711 = scalar_select %p710, %s33, 1
      %s712 = scalar_lea.vmem %s11, %s711
      %p713 = pneg %p320
      %p714 = pneg %p317
      %p715 = scmp.lt.s32.totalorder %s33, 1
      %s716 = scalar_select %p715, %s33, 1
      %s717 = smul.addr %s716, 16
      %s718 = smul.addr %s717, 4
      %s719 = scalar_lea.vmem %s12, %s718
      %p720 = pneg %p346
      %p721 = pneg %p343
      %p722 = scmp.lt.s32.totalorder %s33, 1
      %s723 = scalar_select %p722, %s33, 1
      %s724 = scalar_lea.vmem %s13, %s723
      %p725 = pneg %p372
      %p726 = pneg %p369
      %p727 = scmp.lt.s32.totalorder %s33, 1
      %s728 = scalar_select %p727, %s33, 1
      %s729 = scalar_lea.vmem %s14, %s728
      %p730 = pneg %p398
      %p731 = pneg %p395
      %p732 = scmp.lt.s32.totalorder %s33, 1
      %s733 = scalar_select %p732, %s33, 1
      %s734 = scalar_lea.vmem %s15, %s733
      %p735 = pneg %p424
      %p736 = pneg %p421
      %p737 = pneg %p445
      %p738 = pneg %p442
      %p739 = pneg %p466
      %p740 = pneg %p463
      %p741 = pneg %p487
      %p742 = pneg %p484
      %p743 = pneg %p508
      %p744 = pneg %p505
      %p745 = pneg %p529
      %p746 = pneg %p526
      %p747 = scmp.lt.s32.totalorder %s33, 1
      %s748 = scalar_select %p747, %s33, 1
      %s749 = smul.addr %s748, 16
      %s750 = smul.addr %s749, 4
      %s751 = scalar_lea.vmem %s4, %s750
      %p752 = scmp.lt.s32.totalorder %s33, 1
      %s753 = scalar_select %p752, %s33, 1
      %s754 = smul.addr %s753, 2
      %s755 = scalar_lea.vmem %s5, %s754
      %p756 = scmp.lt.s32.totalorder %s33, 1
      %s757 = scalar_select %p756, %s33, 1
      %s758 = smul.addr %s757, 8
      %s759 = smul.addr %s758, 4
      %s760 = scalar_lea.vmem %s6, %s759
      %p761 = scmp.lt.s32.totalorder %s33, 1
      %s762 = scalar_select %p761, %s33, 1
      %s763 = scalar_lea.vmem %s7, %s762
      %p764 = scmp.lt.s32.totalorder %s33, 1
      %s765 = scalar_select %p764, %s33, 1
      %s766 = scalar_lea.vmem %s8, %s765
      %p767 = scmp.lt.s32.totalorder %s33, 1
      %s768 = scalar_select %p767, %s33, 1
      %s769 = scalar_lea.vmem %s9, %s768
      %p770 = scmp.lt.s32.totalorder %s33, 1
      %s771 = scalar_select %p770, %s33, 1
      %s772 = smul.addr %s771, 8
      %s773 = smul.addr %s772, 4
      %s774 = scalar_lea.vmem %s10, %s773
      %p775 = scmp.lt.s32.totalorder %s33, 1
      %s776 = scalar_select %p775, %s33, 1
      %s777 = scalar_lea.vmem %s11, %s776
      %p778 = scmp.lt.s32.totalorder %s33, 1
      %s779 = scalar_select %p778, %s33, 1
      %s780 = smul.addr %s779, 16
      %s781 = smul.addr %s780, 4
      %s782 = scalar_lea.vmem %s12, %s781
      %p783 = scmp.lt.s32.totalorder %s33, 1
      %s784 = scalar_select %p783, %s33, 1
      %s785 = scalar_lea.vmem %s13, %s784
      %p786 = scmp.lt.s32.totalorder %s33, 1
      %s787 = scalar_select %p786, %s33, 1
      %s788 = scalar_lea.vmem %s14, %s787
      %p789 = scmp.lt.s32.totalorder %s33, 1
      %s790 = scalar_select %p789, %s33, 1
      %s791 = scalar_lea.vmem %s15, %s790
      %p793 = scmp.eq.s32.totalorder %s33, 0
      // Predicated region
      $region101: #{xlmroberta_regressor_forward.1} parent=99 // pred_check
        %p794 = pneg %p793
      $region102: #{xlmroberta_regressor_forward.1} parent=99 // pred_check_branch
        %796 = sbr.rel (%p794) target = $region104
      $region103: #{xlmroberta_regressor_forward.1} parent=99 // pred_region
        %v797 = vld [vmem:[%s1] sm:$0xff]
        %v798 = vld [vmem:[%s1 + $0x8] sm:$0xff]
        %v799 = vld [vmem:[%s2] sm:$0x1]
        %v800 = vld [vmem:[%s3] sm:$0x1]
        %vm801 = vcmask 523264
        %v802 = vsel %vm801, %v797, 0.0
        %803 = vadd.xlane.f32.xlu0 %v802
        %v804 = vpop.xlane.xlu0 %803
        %v805 = vsel %vm801, %v798, 0.0
        %806 = vadd.xlane.f32.xlu0 %v805
        %v807 = vpop.xlane.xlu0 %806
        %v808 = vrcp.pop 64.0
        %v809 = vmul.f32 %v804, %v808
        %v810 = vmul.f32 %v807, %v808
        %v811 = vsub.f32 %v797, %v809
        %v812 = vsub.f32 %v798, %v810
        %v813 = vmul.f32 %v811, %v811
        %v814 = vmul.f32 %v812, %v812
        %v815 = vsel %vm801, %v813, 0.0
        %816 = vadd.xlane.f32.xlu0 %v815
        %v817 = vpop.xlane.xlu0 %816
        %v818 = vsel %vm801, %v814, 0.0
        %819 = vadd.xlane.f32.xlu0 %v818
        %v820 = vpop.xlane.xlu0 %819
        %v821 = vmul.f32 %v817, %v808
        %v822 = vmul.f32 %v820, %v808
        %v823 = vadd.f32 %v821, 1e-05
        %v824 = vadd.f32 %v822, 1e-05
        %v825 = vrsqrt.pop %v823
        %v826 = vrsqrt.pop %v824
        %v827 = vmul.f32 %v811, %v825
        %v828 = vmul.f32 %v812, %v826
        %v830 = vlaneseq
        %v831 = vshrl.u32 %v830, 7
        %v832 = vsub.s32 0, %v831
        %v833 = vrot.slane %v799, %v832
        %v835 = vmul.f32 %v827, %v833
        %v836 = vmul.f32 %v828, %v833
        %v838 = vlaneseq
        %v839 = vshrl.u32 %v838, 7
        %v840 = vsub.s32 0, %v839
        %v841 = vrot.slane %v800, %v840
        %v843 = vadd.f32 %v835, %v841
        %v844 = vadd.f32 %v836, %v841
        %845 = vst.msk [vmem:[#allocation2] sm:$0xff] %vm801, %v843
        %846 = vst.msk [vmem:[#allocation2 + $0x8] sm:$0xff] %vm801, %v844
      $region104: #{xlmroberta_regressor_forward.1} parent=99 // pred_fallthru
        _
      %v847 = vld [vmem:[#allocation2] sm:$0xff]
      %v848 = vld [vmem:[#allocation2 + $0x8] sm:$0xff]
      %v849 = vpack.c.bf16 %v848, %v847
      %v850 = vld [vmem:[%s751] sm:$0xff]
      %v851 = vld [vmem:[%s751 + $0x8] sm:$0xff]
      %v852 = vld [vmem:[%s751 + $0x10] sm:$0xff]
      %v853 = vld [vmem:[%s751 + $0x18] sm:$0xff]
      %v854 = vld [vmem:[%s751 + $0x20] sm:$0xff]
      %v855 = vld [vmem:[%s751 + $0x28] sm:$0xff]
      %v856 = vld [vmem:[%s751 + $0x30] sm:$0xff]
      %v857 = vld [vmem:[%s751 + $0x38] sm:$0xff]
      %v858 = vld [vmem:[%s755] sm:$0x3]
      %v860 = vlaneseq
      %v861 = vshrl.u32 %v860, 7
      %v862 = vsub.s32 0, %v861
      %v863 = vrot.slane %v858, %v862
      %v864 = vlaneseq
      %v865 = vshrl.u32 %v864, 7
      %v866 = vsub.s32 1, %v865
      %v867 = vrot.slane %v858, %v866
      %v878 = vunpack.c.l.b16 %v850
      %v879 = vunpack.c.h.b16 %v850
      %v880 = vunpack.c.l.b16 %v851
      %v881 = vunpack.c.h.b16 %v851
      %v882 = vunpack.c.l.b16 %v852
      %v883 = vunpack.c.h.b16 %v852
      %v884 = vunpack.c.l.b16 %v853
      %v885 = vunpack.c.h.b16 %v853
      %v886 = vunpack.c.l.b16 %v854
      %v887 = vunpack.c.h.b16 %v854
      %v888 = vunpack.c.l.b16 %v855
      %v889 = vunpack.c.h.b16 %v855
      %v890 = vunpack.c.l.b16 %v856
      %v891 = vunpack.c.h.b16 %v856
      %v892 = vunpack.c.l.b16 %v857
      %v893 = vunpack.c.h.b16 %v857
      %v894 = vpack.c.b16 %v880, %v878
      %v895 = vpack.c.b16 %v881, %v879
      %v896 = vpack.c.b16 %v884, %v882
      %v897 = vpack.c.b16 %v885, %v883
      %v898 = vpack.c.b16 %v888, %v886
      %v899 = vpack.c.b16 %v889, %v887
      %v900 = vpack.c.b16 %v892, %v890
      %v901 = vpack.c.b16 %v893, %v891
      %vm910 = vcmask 523264
      %v912 = vsel %vm910, %v849, 0
      %914 = vmatprep.subr.bf16.mxu0 %v895
      %915 = vmatpush1.bf16.msra.mxu0 %v894
      %916 = vmatprep.subr.bf16.mxu0 %v897
      %917 = vmatpush1.bf16.msra.mxu0 %v896
      %918 = vmatprep.subr.bf16.mxu0 %v899
      %919 = vmatpush1.bf16.msra.mxu0 %v898
      %920 = vmatprep.subr.bf16.mxu0 %v901
      %921 = vmatpush1.bf16.msra.mxu0 %v900
      %922 = vmatprep.subr.bf16.mxu0 0
      %923 = vmatpush1.bf16.msra.mxu0 0
      %924 = vmatprep.subr.bf16.mxu0 0
      %925 = vmatpush1.bf16.msra.mxu0 0
      %926 = vmatprep.subr.bf16.mxu0 0
      %927 = vmatpush1.bf16.msra.mxu0 0
      %928 = vmatprep.subr.bf16.mxu0 0
      %929 = vmatpush1.bf16.msra.mxu0 0
      %930 = vmatprep.subr.bf16.mxu0 0
      %931 = vmatpush1.bf16.msra.mxu0 0
      %932 = vmatprep.subr.bf16.mxu0 0
      %933 = vmatpush1.bf16.msra.mxu0 0
      %934 = vmatprep.subr.bf16.mxu0 0
      %935 = vmatpush1.bf16.msra.mxu0 0
      %936 = vmatprep.subr.bf16.mxu0 0
      %937 = vmatpush1.bf16.msra.mxu0 0
      %938 = vmatprep.subr.bf16.mxu0 0
      %939 = vmatpush1.bf16.msra.mxu0 0
      %940 = vmatprep.subr.bf16.mxu0 0
      %941 = vmatpush1.bf16.msra.mxu0 0
      %942 = vmatprep.subr.bf16.mxu0 0
      %943 = vmatpush1.bf16.msra.mxu0 0
      %944 = vmatprep.subr.bf16.mxu0 0
      %945 = vmatpush1.bf16.msra.mxu0 0
      %946 = vmatprep.mubr.bf16.mxu0 0
      %947 = vmatmul.mubr.bf16.gmra.mrb[0].mxu0 %v912
      %v948 = vpop.f32.mrb[0].mxu0
      %v949 = vadd.f32 %v863, %v948
      %v950 = vpop.f32.mrb[0].mxu0
      %v951 = vadd.f32 %v867, %v950
      %v952 = vpop.f32.mrb[0].mxu0
      %v953 = vadd.f32 %v863, %v952
      %v954 = vpop.f32.mrb[0].mxu0
      %v955 = vadd.f32 %v867, %v954
      %956 = vdwg.mxu0
      %v957 = vld [vmem:[%s0] sm:$0x1]
      %v958 = vld [vmem:[%s0 + $0x1] sm:$0x1]
      %v959 = vpack.c.bf16 %v949, %v949
      %v960 = vpack.c.bf16 %v953, %v953
      %v961 = vpack.c.bf16 %v951, %v951
      %v962 = vpack.c.bf16 %v955, %v955
      %964 = vrot.lane.b32.xlu0 %v959, 64
      %v965 = vpop.permute.xlu0 %964
      %vm966 = vcmask 130048
      %v968 = vsel %vm966, %v959, 0
      %v971 = vsel %vm966, %v965, 0
      %973 = vmatprep.subr.bf16.mxu0 0
      %974 = vmatpush1.bf16.xpose.msra.mxu0 %v971
      %975 = vmatprep.subr.bf16.mxu0 0
      %976 = vmatpush1.bf16.xpose.msra.mxu0 0
      %977 = vmatprep.subr.bf16.mxu0 0
      %978 = vmatpush1.bf16.xpose.msra.mxu0 0
      %979 = vmatprep.subr.bf16.mxu0 0
      %980 = vmatpush1.bf16.xpose.msra.mxu0 0
      %981 = vmatprep.subr.bf16.mxu0 0
      %982 = vmatpush1.bf16.xpose.msra.mxu0 0
      %983 = vmatprep.subr.bf16.mxu0 0
      %984 = vmatpush1.bf16.xpose.msra.mxu0 0
      %985 = vmatprep.subr.bf16.mxu0 0
      %986 = vmatpush1.bf16.xpose.msra.mxu0 0
      %987 = vmatprep.subr.bf16.mxu0 0
      %988 = vmatpush1.bf16.xpose.msra.mxu0 0
      %989 = vmatprep.subr.bf16.mxu0 0
      %990 = vmatpush1.bf16.xpose.msra.mxu0 0
      %991 = vmatprep.subr.bf16.mxu0 0
      %992 = vmatpush1.bf16.xpose.msra.mxu0 0
      %993 = vmatprep.subr.bf16.mxu0 0
      %994 = vmatpush1.bf16.xpose.msra.mxu0 0
      %995 = vmatprep.subr.bf16.mxu0 0
      %996 = vmatpush1.bf16.xpose.msra.mxu0 0
      %997 = vmatprep.subr.bf16.mxu0 0
      %998 = vmatpush1.bf16.xpose.msra.mxu0 0
      %999 = vmatprep.subr.bf16.mxu0 0
      %1000 = vmatpush1.bf16.xpose.msra.mxu0 0
      %1001 = vmatprep.subr.bf16.mxu0 0
      %1002 = vmatpush1.bf16.xpose.msra.mxu0 0
      %1003 = vmatprep.subr.bf16.mxu0 0
      %1004 = vmatpush1.bf16.xpose.msra.mxu0 0
      %1005 = vmatprep.mubr.bf16.mxu0 0
      %1006 = vmatmul.mubr.bf16.gmra.mrb[0].mxu0 %v968
      %v1007 = vpop.f32.mrb[0].mxu0
      %v1008 = vadd.f32 0.0, %v1007
      %v1009 = vpop.f32.mrb[0].mxu0
      %v1010 = vpop.f32.mrb[0].mxu0
      %v1011 = vpop.f32.mrb[0].mxu0
      %1012 = vdwg.mxu0
      %1014 = vrot.lane.b32.xlu0 %v960, 64
      %v1015 = vpop.permute.xlu0 %1014
      %v1017 = vsel %vm966, %v960, 0
      %v1020 = vsel %vm966, %v1015, 0
      %1022 = vmatprep.subr.bf16.mxu0 0
      %1023 = vmatpush1.bf16.xpose.msra.mxu0 %v1020
      %1024 = vmatprep.subr.bf16.mxu0 0
      %1025 = vmatpush1.bf16.xpose.msra.mxu0 0
      %1026 = vmatprep.subr.bf16.mxu0 0
      %1027 = vmatpush1.bf16.xpose.msra.mxu0 0
      %1028 = vmatprep.subr.bf16.mxu0 0
      %1029 = vmatpush1.bf16.xpose.msra.mxu0 0
      %1030 = vmatprep.subr.bf16.mxu0 0
      %1031 = vmatpush1.bf16.xpose.msra.mxu0 0
      %1032 = vmatprep.subr.bf16.mxu0 0
      %1033 = vmatpush1.bf16.xpose.msra.mxu0 0
      %1034 = vmatprep.subr.bf16.mxu0 0
      %1035 = vmatpush1.bf16.xpose.msra.mxu0 0
      %1036 = vmatprep.subr.bf16.mxu0 0
      %1037 = vmatpush1.bf16.xpose.msra.mxu0 0
      %1038 = vmatprep.subr.bf16.mxu0 0
      %1039 = vmatpush1.bf16.xpose.msra.mxu0 0
      %1040 = vmatprep.subr.bf16.mxu0 0
      %1041 = vmatpush1.bf16.xpose.msra.mxu0 0
      %1042 = vmatprep.subr.bf16.mxu0 0
      %1043 = vmatpush1.bf16.xpose.msra.mxu0 0
      %1044 = vmatprep.subr.bf16.mxu0 0
      %1045 = vmatpush1.bf16.xpose.msra.mxu0 0
      %1046 = vmatprep.subr.bf16.mxu0 0
      %1047 = vmatpush1.bf16.xpose.msra.mxu0 0
      %1048 = vmatprep.subr.bf16.mxu0 0
      %1049 = vmatpush1.bf16.xpose.msra.mxu0 0
      %1050 = vmatprep.subr.bf16.mxu0 0
      %1051 = vmatpush1.bf16.xpose.msra.mxu0 0
      %1052 = vmatprep.subr.bf16.mxu0 0
      %1053 = vmatpush1.bf16.xpose.msra.mxu0 0
      %1054 = vmatprep.mubr.bf16.mxu0 0
      %1055 = vmatmul.mubr.bf16.gmra.mrb[0].mxu0 %v1017
      %v1056 = vpop.f32.mrb[0].mxu0
      %v1057 = vadd.f32 0.0, %v1056
      %v1058 = vpop.f32.mrb[0].mxu0
      %v1059 = vpop.f32.mrb[0].mxu0
      %v1060 = vpop.f32.mrb[0].mxu0
      %1061 = vdwg.mxu0
      %v1062 = vmul.f32 %v1008, 0.25
      %v1063 = vmul.f32 %v1057, 0.25
      %v1066 = vlaneseq
      %v1067 = vshrl.u32 %v1066, 7
      %v1068 = vsub.s32 0, %v1067
      %v1069 = vrot.slane %v957, %v1068
      %v1070 = vlaneseq
      %v1071 = vshrl.u32 %v1070, 7
      %v1072 = vsub.s32 0, %v1071
      %v1073 = vrot.slane %v958, %v1072
      %v1076 = vadd.f32 %v1062, %v1069
      %v1077 = vadd.f32 %v1063, %v1073
      %vm1078 = vcmask 64512
      %v1079 = vsel %vm1078, %v1076, -inf
      %1080 = vmax.xlane.f32.xlu0 %v1079
      %v1081 = vpop.xlane.xlu0 %1080
      %v1082 = vsel %vm1078, %v1077, -inf
      %1083 = vmax.xlane.f32.xlu0 %v1082
      %v1084 = vpop.xlane.xlu0 %1083
      %v1085 = vsub.f32 %v1076, %v1081
      %v1086 = vsub.f32 %v1077, %v1084
      %v1087 = vmul.f32 %v1085, 1.442695
      %v1088 = vpow.pop %v1087
      %v1089 = vmul.f32 %v1086, 1.442695
      %v1090 = vpow.pop %v1089
      %v1091 = vsel %vm1078, %v1088, 0.0
      %1092 = vadd.xlane.f32.xlu0 %v1091
      %v1093 = vpop.xlane.xlu0 %1092
      %v1094 = vsel %vm1078, %v1090, 0.0
      %1095 = vadd.xlane.f32.xlu0 %v1094
      %v1096 = vpop.xlane.xlu0 %1095
      %v1097 = vrcp.pop %v1093
      %v1098 = vrcp.pop %v1096
      %v1099 = vmul.f32 %v1088, %v1097
      %v1100 = vmul.f32 %v1090, %v1098
      %v1101 = vpack.c.bf16 %v1099, %v1099
      %v1102 = vpack.c.bf16 %v1100, %v1100
      %v1104 = vsel %vm1078, %v1101, 0
      %vm1106 = vcmask 1043456
      %v1108 = vsel %vm1106, %v961, 0
      %1110 = vmatprep.subr.bf16.mxu0 0
      %1111 = vmatpush1.bf16.msra.mxu0 %v1108
      %1112 = vmatprep.subr.bf16.mxu0 0
      %1113 = vmatpush1.bf16.msra.mxu0 0
      %1114 = vmatprep.subr.bf16.mxu0 0
      %1115 = vmatpush1.bf16.msra.mxu0 0
      %1116 = vmatprep.subr.bf16.mxu0 0
      %1117 = vmatpush1.bf16.msra.mxu0 0
      %1118 = vmatprep.subr.bf16.mxu0 0
      %1119 = vmatpush1.bf16.msra.mxu0 0
      %1120 = vmatprep.subr.bf16.mxu0 0
      %1121 = vmatpush1.bf16.msra.mxu0 0
      %1122 = vmatprep.subr.bf16.mxu0 0
      %1123 = vmatpush1.bf16.msra.mxu0 0
      %1124 = vmatprep.subr.bf16.mxu0 0
      %1125 = vmatpush1.bf16.msra.mxu0 0
      %1126 = vmatprep.subr.bf16.mxu0 0
      %1127 = vmatpush1.bf16.msra.mxu0 0
      %1128 = vmatprep.subr.bf16.mxu0 0
      %1129 = vmatpush1.bf16.msra.mxu0 0
      %1130 = vmatprep.subr.bf16.mxu0 0
      %1131 = vmatpush1.bf16.msra.mxu0 0
      %1132 = vmatprep.subr.bf16.mxu0 0
      %1133 = vmatpush1.bf16.msra.mxu0 0
      %1134 = vmatprep.subr.bf16.mxu0 0
      %1135 = vmatpush1.bf16.msra.mxu0 0
      %1136 = vmatprep.subr.bf16.mxu0 0
      %1137 = vmatpush1.bf16.msra.mxu0 0
      %1138 = vmatprep.subr.bf16.mxu0 0
      %1139 = vmatpush1.bf16.msra.mxu0 0
      %1140 = vmatprep.subr.bf16.mxu0 0
      %1141 = vmatpush1.bf16.msra.mxu0 0
      %1142 = vmatprep.mubr.bf16.mxu0 0
      %1143 = vmatmul.mubr.bf16.gmra.mrb[0].mxu0 %v1104
      %v1144 = vpop.f32.mrb[0].mxu0
      %v1145 = vadd.f32 0.0, %v1144
      %v1146 = vpop.f32.mrb[0].mxu0
      %v1147 = vpop.f32.mrb[0].mxu0
      %v1148 = vpop.f32.mrb[0].mxu0
      %1149 = vdwg.mxu0
      %v1151 = vsel %vm1078, %v1102, 0
      %v1154 = vsel %vm1106, %v962, 0
      %1156 = vmatprep.subr.bf16.mxu0 0
      %1157 = vmatpush1.bf16.msra.mxu0 %v1154
      %1158 = vmatprep.subr.bf16.mxu0 0
      %1159 = vmatpush1.bf16.msra.mxu0 0
      %1160 = vmatprep.subr.bf16.mxu0 0
      %1161 = vmatpush1.bf16.msra.mxu0 0
      %1162 = vmatprep.subr.bf16.mxu0 0
      %1163 = vmatpush1.bf16.msra.mxu0 0
      %1164 = vmatprep.subr.bf16.mxu0 0
      %1165 = vmatpush1.bf16.msra.mxu0 0
      %1166 = vmatprep.subr.bf16.mxu0 0
      %1167 = vmatpush1.bf16.msra.mxu0 0
      %1168 = vmatprep.subr.bf16.mxu0 0
      %1169 = vmatpush1.bf16.msra.mxu0 0
      %1170 = vmatprep.subr.bf16.mxu0 0
      %1171 = vmatpush1.bf16.msra.mxu0 0
      %1172 = vmatprep.subr.bf16.mxu0 0
      %1173 = vmatpush1.bf16.msra.mxu0 0
      %1174 = vmatprep.subr.bf16.mxu0 0
      %1175 = vmatpush1.bf16.msra.mxu0 0
      %1176 = vmatprep.subr.bf16.mxu0 0
      %1177 = vmatpush1.bf16.msra.mxu0 0
      %1178 = vmatprep.subr.bf16.mxu0 0
      %1179 = vmatpush1.bf16.msra.mxu0 0
      %1180 = vmatprep.subr.bf16.mxu0 0
      %1181 = vmatpush1.bf16.msra.mxu0 0
      %1182 = vmatprep.subr.bf16.mxu0 0
      %1183 = vmatpush1.bf16.msra.mxu0 0
      %1184 = vmatprep.subr.bf16.mxu0 0
      %1185 = vmatpush1.bf16.msra.mxu0 0
      %1186 = vmatprep.subr.bf16.mxu0 0
      %1187 = vmatpush1.bf16.msra.mxu0 0
      %1188 = vmatprep.mubr.bf16.mxu0 0
      %1189 = vmatmul.mubr.bf16.gmra.mrb[0].mxu0 %v1151
      %v1190 = vpop.f32.mrb[0].mxu0
      %v1191 = vadd.f32 0.0, %v1190
      %v1192 = vpop.f32.mrb[0].mxu0
      %v1193 = vpop.f32.mrb[0].mxu0
      %v1194 = vpop.f32.mrb[0].mxu0
      %1195 = vdwg.mxu0
      %1196 = vrot.lane.b32.xlu0 %v959, 112
      %v1197 = vpop.permute.xlu0 %1196
      %1198 = vrot.lane.b32.xlu0 %v959, 48
      %v1199 = vpop.permute.xlu0 %1198
      %v1201 = vsel %vm966, %v1197, 0
      %v1204 = vsel %vm966, %v1199, 0
      %1206 = vmatprep.subr.bf16.mxu0 0
      %1207 = vmatpush1.bf16.xpose.msra.mxu0 %v1204
      %1208 = vmatprep.subr.bf16.mxu0 0
      %1209 = vmatpush1.bf16.xpose.msra.mxu0 0
      %1210 = vmatprep.subr.bf16.mxu0 0
      %1211 = vmatpush1.bf16.xpose.msra.mxu0 0
      %1212 = vmatprep.subr.bf16.mxu0 0
      %1213 = vmatpush1.bf16.xpose.msra.mxu0 0
      %1214 = vmatprep.subr.bf16.mxu0 0
      %1215 = vmatpush1.bf16.xpose.msra.mxu0 0
      %1216 = vmatprep.subr.bf16.mxu0 0
      %1217 = vmatpush1.bf16.xpose.msra.mxu0 0
      %1218 = vmatprep.subr.bf16.mxu0 0
      %1219 = vmatpush1.bf16.xpose.msra.mxu0 0
      %1220 = vmatprep.subr.bf16.mxu0 0
      %1221 = vmatpush1.bf16.xpose.msra.mxu0 0
      %1222 = vmatprep.subr.bf16.mxu0 0
      %1223 = vmatpush1.bf16.xpose.msra.mxu0 0
      %1224 = vmatprep.subr.bf16.mxu0 0
      %1225 = vmatpush1.bf16.xpose.msra.mxu0 0
      %1226 = vmatprep.subr.bf16.mxu0 0
      %1227 = vmatpush1.bf16.xpose.msra.mxu0 0
      %1228 = vmatprep.subr.bf16.mxu0 0
      %1229 = vmatpush1.bf16.xpose.msra.mxu0 0
      %1230 = vmatprep.subr.bf16.mxu0 0
      %1231 = vmatpush1.bf16.xpose.msra.mxu0 0
      %1232 = vmatprep.subr.bf16.mxu0 0
      %1233 = vmatpush1.bf16.xpose.msra.mxu0 0
      %1234 = vmatprep.subr.bf16.mxu0 0
      %1235 = vmatpush1.bf16.xpose.msra.mxu0 0
      %1236 = vmatprep.subr.bf16.mxu0 0
      %1237 = vmatpush1.bf16.xpose.msra.mxu0 0
      %1238 = vmatprep.mubr.bf16.mxu0 0
      %1239 = vmatmul.mubr.bf16.gmra.mrb[0].mxu0 %v1201
      %v1240 = vpop.f32.mrb[0].mxu0
      %v1241 = vadd.f32 0.0, %v1240
      %v1242 = vpop.f32.mrb[0].mxu0
      %v1243 = vpop.f32.mrb[0].mxu0
      %v1244 = vpop.f32.mrb[0].mxu0
      %1245 = vdwg.mxu0
      %1246 = vrot.lane.b32.xlu0 %v960, 112
      %v1247 = vpop.permute.xlu0 %1246
      %1248 = vrot.lane.b32.xlu0 %v960, 48
      %v1249 = vpop.permute.xlu0 %1248
      %v1251 = vsel %vm966, %v1247, 0
      %v1254 = vsel %vm966, %v1249, 0
      %1256 = vmatprep.subr.bf16.mxu0 0
      %1257 = vmatpush1.bf16.xpose.msra.mxu0 %v1254
      %1258 = vmatprep.subr.bf16.mxu0 0
      %1259 = vmatpush1.bf16.xpose.msra.mxu0 0
      %1260 = vmatprep.subr.bf16.mxu0 0
      %1261 = vmatpush1.bf16.xpose.msra.mxu0 0
      %1262 = vmatprep.subr.bf16.mxu0 0
      %1263 = vmatpush1.bf16.xpose.msra.mxu0 0
      %1264 = vmatprep.subr.bf16.mxu0 0
      %1265 = vmatpush1.bf16.xpose.msra.mxu0 0
      %1266 = vmatprep.subr.bf16.mxu0 0
      %1267 = vmatpush1.bf16.xpose.msra.mxu0 0
      %1268 = vmatprep.subr.bf16.mxu0 0
      %1269 = vmatpush1.bf16.xpose.msra.mxu0 0
      %1270 = vmatprep.subr.bf16.mxu0 0
      %1271 = vmatpush1.bf16.xpose.msra.mxu0 0
      %1272 = vmatprep.subr.bf16.mxu0 0
      %1273 = vmatpush1.bf16.xpose.msra.mxu0 0
      %1274 = vmatprep.subr.bf16.mxu0 0
      %1275 = vmatpush1.bf16.xpose.msra.mxu0 0
      %1276 = vmatprep.subr.bf16.mxu0 0
      %1277 = vmatpush1.bf16.xpose.msra.mxu0 0
      %1278 = vmatprep.subr.bf16.mxu0 0
      %1279 = vmatpush1.bf16.xpose.msra.mxu0 0
      %1280 = vmatprep.subr.bf16.mxu0 0
      %1281 = vmatpush1.bf16.xpose.msra.mxu0 0
      %1282 = vmatprep.subr.bf16.mxu0 0
      %1283 = vmatpush1.bf16.xpose.msra.mxu0 0
      %1284 = vmatprep.subr.bf16.mxu0 0
      %1285 = vmatpush1.bf16.xpose.msra.mxu0 0
      %1286 = vmatprep.subr.bf16.mxu0 0
      %1287 = vmatpush1.bf16.xpose.msra.mxu0 0
      %1288 = vmatprep.mubr.bf16.mxu0 0
      %1289 = vmatmul.mubr.bf16.gmra.mrb[0].mxu0 %v1251
      %v1290 = vpop.f32.mrb[0].mxu0
      %v1291 = vadd.f32 0.0, %v1290
      %v1292 = vpop.f32.mrb[0].mxu0
      %v1293 = vpop.f32.mrb[0].mxu0
      %v1294 = vpop.f32.mrb[0].mxu0
      %1295 = vdwg.mxu0
      %v1296 = vmul.f32 %v1241, 0.25
      %v1297 = vmul.f32 %v1291, 0.25
      %v1298 = vadd.f32 %v1296, %v1069
      %v1299 = vadd.f32 %v1297, %v1073
      %v1300 = vsel %vm1078, %v1298, -inf
      %1301 = vmax.xlane.f32.xlu0 %v1300
      %v1302 = vpop.xlane.xlu0 %1301
      %v1303 = vsel %vm1078, %v1299, -inf
      %1304 = vmax.xlane.f32.xlu0 %v1303
      %v1305 = vpop.xlane.xlu0 %1304
      %v1306 = vsub.f32 %v1298, %v1302
      %v1307 = vsub.f32 %v1299, %v1305
      %v1308 = vmul.f32 %v1306, 1.442695
      %v1309 = vpow.pop %v1308
      %v1310 = vmul.f32 %v1307, 1.442695
      %v1311 = vpow.pop %v1310
      %v1312 = vsel %vm1078, %v1309, 0.0
      %1313 = vadd.xlane.f32.xlu0 %v1312
      %v1314 = vpop.xlane.xlu0 %1313
      %v1315 = vsel %vm1078, %v1311, 0.0
      %1316 = vadd.xlane.f32.xlu0 %v1315
      %v1317 = vpop.xlane.xlu0 %1316
      %v1318 = vrcp.pop %v1314
      %v1319 = vrcp.pop %v1317
      %v1320 = vmul.f32 %v1309, %v1318
      %v1321 = vmul.f32 %v1311, %v1319
      %v1322 = vpack.c.bf16 %v1320, %v1320
      %v1323 = vpack.c.bf16 %v1321, %v1321
      %1325 = vrot.lane.b32.xlu0 %v961, 112
      %v1326 = vpop.permute.xlu0 %1325
      %v1328 = vsel %vm1078, %v1322, 0
      %v1331 = vsel %vm1106, %v1326, 0
      %1333 = vmatprep.subr.bf16.mxu0 0
      %1334 = vmatpush1.bf16.msra.mxu0 %v1331
      %1335 = vmatprep.subr.bf16.mxu0 0
      %1336 = vmatpush1.bf16.msra.mxu0 0
      %1337 = vmatprep.subr.bf16.mxu0 0
      %1338 = vmatpush1.bf16.msra.mxu0 0
      %1339 = vmatprep.subr.bf16.mxu0 0
      %1340 = vmatpush1.bf16.msra.mxu0 0
      %1341 = vmatprep.subr.bf16.mxu0 0
      %1342 = vmatpush1.bf16.msra.mxu0 0
      %1343 = vmatprep.subr.bf16.mxu0 0
      %1344 = vmatpush1.bf16.msra.mxu0 0
      %1345 = vmatprep.subr.bf16.mxu0 0
      %1346 = vmatpush1.bf16.msra.mxu0 0
      %1347 = vmatprep.subr.bf16.mxu0 0
      %1348 = vmatpush1.bf16.msra.mxu0 0
      %1349 = vmatprep.subr.bf16.mxu0 0
      %1350 = vmatpush1.bf16.msra.mxu0 0
      %1351 = vmatprep.subr.bf16.mxu0 0
      %1352 = vmatpush1.bf16.msra.mxu0 0
      %1353 = vmatprep.subr.bf16.mxu0 0
      %1354 = vmatpush1.bf16.msra.mxu0 0
      %1355 = vmatprep.subr.bf16.mxu0 0
      %1356 = vmatpush1.bf16.msra.mxu0 0
      %1357 = vmatprep.subr.bf16.mxu0 0
      %1358 = vmatpush1.bf16.msra.mxu0 0
      %1359 = vmatprep.subr.bf16.mxu0 0
      %1360 = vmatpush1.bf16.msra.mxu0 0
      %1361 = vmatprep.subr.bf16.mxu0 0
      %1362 = vmatpush1.bf16.msra.mxu0 0
      %1363 = vmatprep.subr.bf16.mxu0 0
      %1364 = vmatpush1.bf16.msra.mxu0 0
      %1365 = vmatprep.mubr.bf16.mxu0 0
      %1366 = vmatmul.mubr.bf16.gmra.mrb[0].mxu0 %v1328
      %v1367 = vpop.f32.mrb[0].mxu0
      %v1368 = vadd.f32 0.0, %v1367
      %v1369 = vpop.f32.mrb[0].mxu0
      %v1370 = vpop.f32.mrb[0].mxu0
      %v1371 = vpop.f32.mrb[0].mxu0
      %1372 = vdwg.mxu0
      %1374 = vrot.lane.b32.xlu0 %v962, 112
      %v1375 = vpop.permute.xlu0 %1374
      %v1377 = vsel %vm1078, %v1323, 0
      %v1380 = vsel %vm1106, %v1375, 0
      %1382 = vmatprep.subr.bf16.mxu0 0
      %1383 = vmatpush1.bf16.msra.mxu0 %v1380
      %1384 = vmatprep.subr.bf16.mxu0 0
      %1385 = vmatpush1.bf16.msra.mxu0 0
      %1386 = vmatprep.subr.bf16.mxu0 0
      %1387 = vmatpush1.bf16.msra.mxu0 0
      %1388 = vmatprep.subr.bf16.mxu0 0
      %1389 = vmatpush1.bf16.msra.mxu0 0
      %1390 = vmatprep.subr.bf16.mxu0 0
      %1391 = vmatpush1.bf16.msra.mxu0 0
      %1392 = vmatprep.subr.bf16.mxu0 0
      %1393 = vmatpush1.bf16.msra.mxu0 0
      %1394 = vmatprep.subr.bf16.mxu0 0
      %1395 = vmatpush1.bf16.msra.mxu0 0
      %1396 = vmatprep.subr.bf16.mxu0 0
      %1397 = vmatpush1.bf16.msra.mxu0 0
      %1398 = vmatprep.subr.bf16.mxu0 0
      %1399 = vmatpush1.bf16.msra.mxu0 0
      %1400 = vmatprep.subr.bf16.mxu0 0
      %1401 = vmatpush1.bf16.msra.mxu0 0
      %1402 = vmatprep.subr.bf16.mxu0 0
      %1403 = vmatpush1.bf16.msra.mxu0 0
      %1404 = vmatprep.subr.bf16.mxu0 0
      %1405 = vmatpush1.bf16.msra.mxu0 0
      %1406 = vmatprep.subr.bf16.mxu0 0
      %1407 = vmatpush1.bf16.msra.mxu0 0
      %1408 = vmatprep.subr.bf16.mxu0 0
      %1409 = vmatpush1.bf16.msra.mxu0 0
      %1410 = vmatprep.subr.bf16.mxu0 0
      %1411 = vmatpush1.bf16.msra.mxu0 0
      %1412 = vmatprep.subr.bf16.mxu0 0
      %1413 = vmatpush1.bf16.msra.mxu0 0
      %1414 = vmatprep.mubr.bf16.mxu0 0
      %1415 = vmatmul.mubr.bf16.gmra.mrb[0].mxu0 %v1377
      %v1416 = vpop.f32.mrb[0].mxu0
      %v1417 = vadd.f32 0.0, %v1416
      %v1418 = vpop.f32.mrb[0].mxu0
      %v1419 = vpop.f32.mrb[0].mxu0
      %v1420 = vpop.f32.mrb[0].mxu0
      %1421 = vdwg.mxu0
      %1422 = vrot.lane.b32.xlu0 %v959, 96
      %v1423 = vpop.permute.xlu0 %1422
      %1424 = vrot.lane.b32.xlu0 %v959, 32
      %v1425 = vpop.permute.xlu0 %1424
      %v1427 = vsel %vm966, %v1423, 0
      %v1430 = vsel %vm966, %v1425, 0
      %1432 = vmatprep.subr.bf16.mxu0 0
      %1433 = vmatpush1.bf16.xpose.msra.mxu0 %v1430
      %1434 = vmatprep.subr.bf16.mxu0 0
      %1435 = vmatpush1.bf16.xpose.msra.mxu0 0
      %1436 = vmatprep.subr.bf16.mxu0 0
      %1437 = vmatpush1.bf16.xpose.msra.mxu0 0
      %1438 = vmatprep.subr.bf16.mxu0 0
      %1439 = vmatpush1.bf16.xpose.msra.mxu0 0
      %1440 = vmatprep.subr.bf16.mxu0 0
      %1441 = vmatpush1.bf16.xpose.msra.mxu0 0
      %1442 = vmatprep.subr.bf16.mxu0 0
      %1443 = vmatpush1.bf16.xpose.msra.mxu0 0
      %1444 = vmatprep.subr.bf16.mxu0 0
      %1445 = vmatpush1.bf16.xpose.msra.mxu0 0
      %1446 = vmatprep.subr.bf16.mxu0 0
      %1447 = vmatpush1.bf16.xpose.msra.mxu0 0
      %1448 = vmatprep.subr.bf16.mxu0 0
      %1449 = vmatpush1.bf16.xpose.msra.mxu0 0
      %1450 = vmatprep.subr.bf16.mxu0 0
      %1451 = vmatpush1.bf16.xpose.msra.mxu0 0
      %1452 = vmatprep.subr.bf16.mxu0 0
      %1453 = vmatpush1.bf16.xpose.msra.mxu0 0
      %1454 = vmatprep.subr.bf16.mxu0 0
      %1455 = vmatpush1.bf16.xpose.msra.mxu0 0
      %1456 = vmatprep.subr.bf16.mxu0 0
      %1457 = vmatpush1.bf16.xpose.msra.mxu0 0
      %1458 = vmatprep.subr.bf16.mxu0 0
      %1459 = vmatpush1.bf16.xpose.msra.mxu0 0
      %1460 = vmatprep.subr.bf16.mxu0 0
      %1461 = vmatpush1.bf16.xpose.msra.mxu0 0
      %1462 = vmatprep.subr.bf16.mxu0 0
      %1463 = vmatpush1.bf16.xpose.msra.mxu0 0
      %1464 = vmatprep.mubr.bf16.mxu0 0
      %1465 = vmatmul.mubr.bf16.gmra.mrb[0].mxu0 %v1427
      %v1466 = vpop.f32.mrb[0].mxu0
      %v1467 = vadd.f32 0.0, %v1466
      %v1468 = vpop.f32.mrb[0].mxu0
      %v1469 = vpop.f32.mrb[0].mxu0
      %v1470 = vpop.f32.mrb[0].mxu0
      %1471 = vdwg.mxu0
      %1472 = vrot.lane.b32.xlu0 %v960, 96
      %v1473 = vpop.permute.xlu0 %1472
      %1474 = vrot.lane.b32.xlu0 %v960, 32
      %v1475 = vpop.permute.xlu0 %1474
      %v1477 = vsel %vm966, %v1473, 0
      %v1480 = vsel %vm966, %v1475, 0
      %1482 = vmatprep.subr.bf16.mxu0 0
      %1483 = vmatpush1.bf16.xpose.msra.mxu0 %v1480
      %1484 = vmatprep.subr.bf16.mxu0 0
      %1485 = vmatpush1.bf16.xpose.msra.mxu0 0
      %1486 = vmatprep.subr.bf16.mxu0 0
      %1487 = vmatpush1.bf16.xpose.msra.mxu0 0
      %1488 = vmatprep.subr.bf16.mxu0 0
      %1489 = vmatpush1.bf16.xpose.msra.mxu0 0
      %1490 = vmatprep.subr.bf16.mxu0 0
      %1491 = vmatpush1.bf16.xpose.msra.mxu0 0
      %1492 = vmatprep.subr.bf16.mxu0 0
      %1493 = vmatpush1.bf16.xpose.msra.mxu0 0
      %1494 = vmatprep.subr.bf16.mxu0 0
      %1495 = vmatpush1.bf16.xpose.msra.mxu0 0
      %1496 = vmatprep.subr.bf16.mxu0 0
      %1497 = vmatpush1.bf16.xpose.msra.mxu0 0
      %1498 = vmatprep.subr.bf16.mxu0 0
      %1499 = vmatpush1.bf16.xpose.msra.mxu0 0
      %1500 = vmatprep.subr.bf16.mxu0 0
      %1501 = vmatpush1.bf16.xpose.msra.mxu0 0
      %1502 = vmatprep.subr.bf16.mxu0 0
      %1503 = vmatpush1.bf16.xpose.msra.mxu0 0
      %1504 = vmatprep.subr.bf16.mxu0 0
      %1505 = vmatpush1.bf16.xpose.msra.mxu0 0
      %1506 = vmatprep.subr.bf16.mxu0 0
      %1507 = vmatpush1.bf16.xpose.msra.mxu0 0
      %1508 = vmatprep.subr.bf16.mxu0 0
      %1509 = vmatpush1.bf16.xpose.msra.mxu0 0
      %1510 = vmatprep.subr.bf16.mxu0 0
      %1511 = vmatpush1.bf16.xpose.msra.mxu0 0
      %1512 = vmatprep.subr.bf16.mxu0 0
      %1513 = vmatpush1.bf16.xpose.msra.mxu0 0
      %1514 = vmatprep.mubr.bf16.mxu0 0
      %1515 = vmatmul.mubr.bf16.gmra.mrb[0].mxu0 %v1477
      %v1516 = vpop.f32.mrb[0].mxu0
      %v1517 = vadd.f32 0.0, %v1516
      %v1518 = vpop.f32.mrb[0].mxu0
      %v1519 = vpop.f32.mrb[0].mxu0
      %v1520 = vpop.f32.mrb[0].mxu0
      %1521 = vdwg.mxu0
      %v1522 = vmul.f32 %v1467, 0.25
      %v1523 = vmul.f32 %v1517, 0.25
      %v1524 = vadd.f32 %v1522, %v1069
      %v1525 = vadd.f32 %v1523, %v1073
      %v1526 = vsel %vm1078, %v1524, -inf
      %1527 = vmax.xlane.f32.xlu0 %v1526
      %v1528 = vpop.xlane.xlu0 %1527
      %v1529 = vsel %vm1078, %v1525, -inf
      %1530 = vmax.xlane.f32.xlu0 %v1529
      %v1531 = vpop.xlane.xlu0 %1530
      %v1532 = vsub.f32 %v1524, %v1528
      %v1533 = vsub.f32 %v1525, %v1531
      %v1534 = vmul.f32 %v1532, 1.442695
      %v1535 = vpow.pop %v1534
      %v1536 = vmul.f32 %v1533, 1.442695
      %v1537 = vpow.pop %v1536
      %v1538 = vsel %vm1078, %v1535, 0.0
      %1539 = vadd.xlane.f32.xlu0 %v1538
      %v1540 = vpop.xlane.xlu0 %1539
      %v1541 = vsel %vm1078, %v1537, 0.0
      %1542 = vadd.xlane.f32.xlu0 %v1541
      %v1543 = vpop.xlane.xlu0 %1542
      %v1544 = vrcp.pop %v1540
      %v1545 = vrcp.pop %v1543
      %v1546 = vmul.f32 %v1535, %v1544
      %v1547 = vmul.f32 %v1537, %v1545
      %v1548 = vpack.c.bf16 %v1546, %v1546
      %v1549 = vpack.c.bf16 %v1547, %v1547
      %1550 = vrot.lane.b32.xlu0 %v961, 96
      %v1551 = vpop.permute.xlu0 %1550
      %v1553 = vsel %vm1078, %v1548, 0
      %v1556 = vsel %vm1106, %v1551, 0
      %1558 = vmatprep.subr.bf16.mxu0 0
      %1559 = vmatpush1.bf16.msra.mxu0 %v1556
      %1560 = vmatprep.subr.bf16.mxu0 0
      %1561 = vmatpush1.bf16.msra.mxu0 0
      %1562 = vmatprep.subr.bf16.mxu0 0
      %1563 = vmatpush1.bf16.msra.mxu0 0
      %1564 = vmatprep.subr.bf16.mxu0 0
      %1565 = vmatpush1.bf16.msra.mxu0 0
      %1566 = vmatprep.subr.bf16.mxu0 0
      %1567 = vmatpush1.bf16.msra.mxu0 0
      %1568 = vmatprep.subr.bf16.mxu0 0
      %1569 = vmatpush1.bf16.msra.mxu0 0
      %1570 = vmatprep.subr.bf16.mxu0 0
      %1571 = vmatpush1.bf16.msra.mxu0 0
      %1572 = vmatprep.subr.bf16.mxu0 0
      %1573 = vmatpush1.bf16.msra.mxu0 0
      %1574 = vmatprep.subr.bf16.mxu0 0
      %1575 = vmatpush1.bf16.msra.mxu0 0
      %1576 = vmatprep.subr.bf16.mxu0 0
      %1577 = vmatpush1.bf16.msra.mxu0 0
      %1578 = vmatprep.subr.bf16.mxu0 0
      %1579 = vmatpush1.bf16.msra.mxu0 0
      %1580 = vmatprep.subr.bf16.mxu0 0
      %1581 = vmatpush1.bf16.msra.mxu0 0
      %1582 = vmatprep.subr.bf16.mxu0 0
      %1583 = vmatpush1.bf16.msra.mxu0 0
      %1584 = vmatprep.subr.bf16.mxu0 0
      %1585 = vmatpush1.bf16.msra.mxu0 0
      %1586 = vmatprep.subr.bf16.mxu0 0
      %1587 = vmatpush1.bf16.msra.mxu0 0
      %1588 = vmatprep.subr.bf16.mxu0 0
      %1589 = vmatpush1.bf16.msra.mxu0 0
      %1590 = vmatprep.mubr.bf16.mxu0 0
      %1591 = vmatmul.mubr.bf16.gmra.mrb[0].mxu0 %v1553
      %v1592 = vpop.f32.mrb[0].mxu0
      %v1593 = vadd.f32 0.0, %v1592
      %v1594 = vpop.f32.mrb[0].mxu0
      %v1595 = vpop.f32.mrb[0].mxu0
      %v1596 = vpop.f32.mrb[0].mxu0
      %1597 = vdwg.mxu0
      %1598 = vrot.lane.b32.xlu0 %v962, 96
      %v1599 = vpop.permute.xlu0 %1598
      %v1601 = vsel %vm1078, %v1549, 0
      %v1604 = vsel %vm1106, %v1599, 0
      %1606 = vmatprep.subr.bf16.mxu0 0
      %1607 = vmatpush1.bf16.msra.mxu0 %v1604
      %1608 = vmatprep.subr.bf16.mxu0 0
      %1609 = vmatpush1.bf16.msra.mxu0 0
      %1610 = vmatprep.subr.bf16.mxu0 0
      %1611 = vmatpush1.bf16.msra.mxu0 0
      %1612 = vmatprep.subr.bf16.mxu0 0
      %1613 = vmatpush1.bf16.msra.mxu0 0
      %1614 = vmatprep.subr.bf16.mxu0 0
      %1615 = vmatpush1.bf16.msra.mxu0 0
      %1616 = vmatprep.subr.bf16.mxu0 0
      %1617 = vmatpush1.bf16.msra.mxu0 0
      %1618 = vmatprep.subr.bf16.mxu0 0
      %1619 = vmatpush1.bf16.msra.mxu0 0
      %1620 = vmatprep.subr.bf16.mxu0 0
      %1621 = vmatpush1.bf16.msra.mxu0 0
      %1622 = vmatprep.subr.bf16.mxu0 0
      %1623 = vmatpush1.bf16.msra.mxu0 0
      %1624 = vmatprep.subr.bf16.mxu0 0
      %1625 = vmatpush1.bf16.msra.mxu0 0
      %1626 = vmatprep.subr.bf16.mxu0 0
      %1627 = vmatpush1.bf16.msra.mxu0 0
      %1628 = vmatprep.subr.bf16.mxu0 0
      %1629 = vmatpush1.bf16.msra.mxu0 0
      %1630 = vmatprep.subr.bf16.mxu0 0
      %1631 = vmatpush1.bf16.msra.mxu0 0
      %1632 = vmatprep.subr.bf16.mxu0 0
      %1633 = vmatpush1.bf16.msra.mxu0 0
      %1634 = vmatprep.subr.bf16.mxu0 0
      %1635 = vmatpush1.bf16.msra.mxu0 0
      %1636 = vmatprep.subr.bf16.mxu0 0
      %1637 = vmatpush1.bf16.msra.mxu0 0
      %1638 = vmatprep.mubr.bf16.mxu0 0
      %1639 = vmatmul.mubr.bf16.gmra.mrb[0].mxu0 %v1601
      %v1640 = vpop.f32.mrb[0].mxu0
      %v1641 = vadd.f32 0.0, %v1640
      %v1642 = vpop.f32.mrb[0].mxu0
      %v1643 = vpop.f32.mrb[0].mxu0
      %v1644 = vpop.f32.mrb[0].mxu0
      %1645 = vdwg.mxu0
      %1646 = vrot.lane.b32.xlu0 %v959, 80
      %v1647 = vpop.permute.xlu0 %1646
      %1648 = vrot.lane.b32.xlu0 %v959, 16
      %v1649 = vpop.permute.xlu0 %1648
      %v1651 = vsel %vm966, %v1647, 0
      %v1654 = vsel %vm966, %v1649, 0
      %1656 = vmatprep.subr.bf16.mxu0 0
      %1657 = vmatpush1.bf16.xpose.msra.mxu0 %v1654
      %1658 = vmatprep.subr.bf16.mxu0 0
      %1659 = vmatpush1.bf16.xpose.msra.mxu0 0
      %1660 = vmatprep.subr.bf16.mxu0 0
      %1661 = vmatpush1.bf16.xpose.msra.mxu0 0
      %1662 = vmatprep.subr.bf16.mxu0 0
      %1663 = vmatpush1.bf16.xpose.msra.mxu0 0
      %1664 = vmatprep.subr.bf16.mxu0 0
      %1665 = vmatpush1.bf16.xpose.msra.mxu0 0
      %1666 = vmatprep.subr.bf16.mxu0 0
      %1667 = vmatpush1.bf16.xpose.msra.mxu0 0
      %1668 = vmatprep.subr.bf16.mxu0 0
      %1669 = vmatpush1.bf16.xpose.msra.mxu0 0
      %1670 = vmatprep.subr.bf16.mxu0 0
      %1671 = vmatpush1.bf16.xpose.msra.mxu0 0
      %1672 = vmatprep.subr.bf16.mxu0 0
      %1673 = vmatpush1.bf16.xpose.msra.mxu0 0
      %1674 = vmatprep.subr.bf16.mxu0 0
      %1675 = vmatpush1.bf16.xpose.msra.mxu0 0
      %1676 = vmatprep.subr.bf16.mxu0 0
      %1677 = vmatpush1.bf16.xpose.msra.mxu0 0
      %1678 = vmatprep.subr.bf16.mxu0 0
      %1679 = vmatpush1.bf16.xpose.msra.mxu0 0
      %1680 = vmatprep.subr.bf16.mxu0 0
      %1681 = vmatpush1.bf16.xpose.msra.mxu0 0
      %1682 = vmatprep.subr.bf16.mxu0 0
      %1683 = vmatpush1.bf16.xpose.msra.mxu0 0
      %1684 = vmatprep.subr.bf16.mxu0 0
      %1685 = vmatpush1.bf16.xpose.msra.mxu0 0
      %1686 = vmatprep.subr.bf16.mxu0 0
      %1687 = vmatpush1.bf16.xpose.msra.mxu0 0
      %1688 = vmatprep.mubr.bf16.mxu0 0
      %1689 = vmatmul.mubr.bf16.gmra.mrb[0].mxu0 %v1651
      %v1690 = vpop.f32.mrb[0].mxu0
      %v1691 = vadd.f32 0.0, %v1690
      %v1692 = vpop.f32.mrb[0].mxu0
      %v1693 = vpop.f32.mrb[0].mxu0
      %v1694 = vpop.f32.mrb[0].mxu0
      %1695 = vdwg.mxu0
      %1696 = vrot.lane.b32.xlu0 %v960, 80
      %v1697 = vpop.permute.xlu0 %1696
      %1698 = vrot.lane.b32.xlu0 %v960, 16
      %v1699 = vpop.permute.xlu0 %1698
      %v1701 = vsel %vm966, %v1697, 0
      %v1704 = vsel %vm966, %v1699, 0
      %1706 = vmatprep.subr.bf16.mxu0 0
      %1707 = vmatpush1.bf16.xpose.msra.mxu0 %v1704
      %1708 = vmatprep.subr.bf16.mxu0 0
      %1709 = vmatpush1.bf16.xpose.msra.mxu0 0
      %1710 = vmatprep.subr.bf16.mxu0 0
      %1711 = vmatpush1.bf16.xpose.msra.mxu0 0
      %1712 = vmatprep.subr.bf16.mxu0 0
      %1713 = vmatpush1.bf16.xpose.msra.mxu0 0
      %1714 = vmatprep.subr.bf16.mxu0 0
      %1715 = vmatpush1.bf16.xpose.msra.mxu0 0
      %1716 = vmatprep.subr.bf16.mxu0 0
      %1717 = vmatpush1.bf16.xpose.msra.mxu0 0
      %1718 = vmatprep.subr.bf16.mxu0 0
      %1719 = vmatpush1.bf16.xpose.msra.mxu0 0
      %1720 = vmatprep.subr.bf16.mxu0 0
      %1721 = vmatpush1.bf16.xpose.msra.mxu0 0
      %1722 = vmatprep.subr.bf16.mxu0 0
      %1723 = vmatpush1.bf16.xpose.msra.mxu0 0
      %1724 = vmatprep.subr.bf16.mxu0 0
      %1725 = vmatpush1.bf16.xpose.msra.mxu0 0
      %1726 = vmatprep.subr.bf16.mxu0 0
      %1727 = vmatpush1.bf16.xpose.msra.mxu0 0
      %1728 = vmatprep.subr.bf16.mxu0 0
      %1729 = vmatpush1.bf16.xpose.msra.mxu0 0
      %1730 = vmatprep.subr.bf16.mxu0 0
      %1731 = vmatpush1.bf16.xpose.msra.mxu0 0
      %1732 = vmatprep.subr.bf16.mxu0 0
      %1733 = vmatpush1.bf16.xpose.msra.mxu0 0
      %1734 = vmatprep.subr.bf16.mxu0 0
      %1735 = vmatpush1.bf16.xpose.msra.mxu0 0
      %1736 = vmatprep.subr.bf16.mxu0 0
      %1737 = vmatpush1.bf16.xpose.msra.mxu0 0
      %1738 = vmatprep.mubr.bf16.mxu0 0
      %1739 = vmatmul.mubr.bf16.gmra.mrb[0].mxu0 %v1701
      %v1740 = vpop.f32.mrb[0].mxu0
      %v1741 = vadd.f32 0.0, %v1740
      %v1742 = vpop.f32.mrb[0].mxu0
      %v1743 = vpop.f32.mrb[0].mxu0
      %v1744 = vpop.f32.mrb[0].mxu0
      %1745 = vdwg.mxu0
      %v1746 = vmul.f32 %v1691, 0.25
      %v1747 = vmul.f32 %v1741, 0.25
      %v1748 = vadd.f32 %v1746, %v1069
      %v1749 = vadd.f32 %v1747, %v1073
      %v1750 = vsel %vm1078, %v1748, -inf
      %1751 = vmax.xlane.f32.xlu0 %v1750
      %v1752 = vpop.xlane.xlu0 %1751
      %v1753 = vsel %vm1078, %v1749, -inf
      %1754 = vmax.xlane.f32.xlu0 %v1753
      %v1755 = vpop.xlane.xlu0 %1754
      %v1756 = vsub.f32 %v1748, %v1752
      %v1757 = vsub.f32 %v1749, %v1755
      %v1758 = vmul.f32 %v1756, 1.442695
      %v1759 = vpow.pop %v1758
      %v1760 = vmul.f32 %v1757, 1.442695
      %v1761 = vpow.pop %v1760
      %v1762 = vsel %vm1078, %v1759, 0.0
      %1763 = vadd.xlane.f32.xlu0 %v1762
      %v1764 = vpop.xlane.xlu0 %1763
      %v1765 = vsel %vm1078, %v1761, 0.0
      %1766 = vadd.xlane.f32.xlu0 %v1765
      %v1767 = vpop.xlane.xlu0 %1766
      %v1768 = vrcp.pop %v1764
      %v1769 = vrcp.pop %v1767
      %v1770 = vmul.f32 %v1759, %v1768
      %v1771 = vmul.f32 %v1761, %v1769
      %v1772 = vpack.c.bf16 %v1770, %v1770
      %v1773 = vpack.c.bf16 %v1771, %v1771
      %1774 = vrot.lane.b32.xlu0 %v961, 80
      %v1775 = vpop.permute.xlu0 %1774
      %v1777 = vsel %vm1078, %v1772, 0
      %v1780 = vsel %vm1106, %v1775, 0
      %1782 = vmatprep.subr.bf16.mxu0 0
      %1783 = vmatpush1.bf16.msra.mxu0 %v1780
      %1784 = vmatprep.subr.bf16.mxu0 0
      %1785 = vmatpush1.bf16.msra.mxu0 0
      %1786 = vmatprep.subr.bf16.mxu0 0
      %1787 = vmatpush1.bf16.msra.mxu0 0
      %1788 = vmatprep.subr.bf16.mxu0 0
      %1789 = vmatpush1.bf16.msra.mxu0 0
      %1790 = vmatprep.subr.bf16.mxu0 0
      %1791 = vmatpush1.bf16.msra.mxu0 0
      %1792 = vmatprep.subr.bf16.mxu0 0
      %1793 = vmatpush1.bf16.msra.mxu0 0
      %1794 = vmatprep.subr.bf16.mxu0 0
      %1795 = vmatpush1.bf16.msra.mxu0 0
      %1796 = vmatprep.subr.bf16.mxu0 0
      %1797 = vmatpush1.bf16.msra.mxu0 0
      %1798 = vmatprep.subr.bf16.mxu0 0
      %1799 = vmatpush1.bf16.msra.mxu0 0
      %1800 = vmatprep.subr.bf16.mxu0 0
      %1801 = vmatpush1.bf16.msra.mxu0 0
      %1802 = vmatprep.subr.bf16.mxu0 0
      %1803 = vmatpush1.bf16.msra.mxu0 0
      %1804 = vmatprep.subr.bf16.mxu0 0
      %1805 = vmatpush1.bf16.msra.mxu0 0
      %1806 = vmatprep.subr.bf16.mxu0 0
      %1807 = vmatpush1.bf16.msra.mxu0 0
      %1808 = vmatprep.subr.bf16.mxu0 0
      %1809 = vmatpush1.bf16.msra.mxu0 0
      %1810 = vmatprep.subr.bf16.mxu0 0
      %1811 = vmatpush1.bf16.msra.mxu0 0
      %1812 = vmatprep.subr.bf16.mxu0 0
      %1813 = vmatpush1.bf16.msra.mxu0 0
      %1814 = vmatprep.mubr.bf16.mxu0 0
      %1815 = vmatmul.mubr.bf16.gmra.mrb[0].mxu0 %v1777
      %v1816 = vpop.f32.mrb[0].mxu0
      %v1817 = vadd.f32 0.0, %v1816
      %v1818 = vpop.f32.mrb[0].mxu0
      %v1819 = vpop.f32.mrb[0].mxu0
      %v1820 = vpop.f32.mrb[0].mxu0
      %1821 = vdwg.mxu0
      %1822 = vrot.lane.b32.xlu0 %v962, 80
      %v1823 = vpop.permute.xlu0 %1822
      %v1825 = vsel %vm1078, %v1773, 0
      %v1828 = vsel %vm1106, %v1823, 0
      %1830 = vmatprep.subr.bf16.mxu0 0
      %1831 = vmatpush1.bf16.msra.mxu0 %v1828
      %1832 = vmatprep.subr.bf16.mxu0 0
      %1833 = vmatpush1.bf16.msra.mxu0 0
      %1834 = vmatprep.subr.bf16.mxu0 0
      %1835 = vmatpush1.bf16.msra.mxu0 0
      %1836 = vmatprep.subr.bf16.mxu0 0
      %1837 = vmatpush1.bf16.msra.mxu0 0
      %1838 = vmatprep.subr.bf16.mxu0 0
      %1839 = vmatpush1.bf16.msra.mxu0 0
      %1840 = vmatprep.subr.bf16.mxu0 0
      %1841 = vmatpush1.bf16.msra.mxu0 0
      %1842 = vmatprep.subr.bf16.mxu0 0
      %1843 = vmatpush1.bf16.msra.mxu0 0
      %1844 = vmatprep.subr.bf16.mxu0 0
      %1845 = vmatpush1.bf16.msra.mxu0 0
      %1846 = vmatprep.subr.bf16.mxu0 0
      %1847 = vmatpush1.bf16.msra.mxu0 0
      %1848 = vmatprep.subr.bf16.mxu0 0
      %1849 = vmatpush1.bf16.msra.mxu0 0
      %1850 = vmatprep.subr.bf16.mxu0 0
      %1851 = vmatpush1.bf16.msra.mxu0 0
      %1852 = vmatprep.subr.bf16.mxu0 0
      %1853 = vmatpush1.bf16.msra.mxu0 0
      %1854 = vmatprep.subr.bf16.mxu0 0
      %1855 = vmatpush1.bf16.msra.mxu0 0
      %1856 = vmatprep.subr.bf16.mxu0 0
      %1857 = vmatpush1.bf16.msra.mxu0 0
      %1858 = vmatprep.subr.bf16.mxu0 0
      %1859 = vmatpush1.bf16.msra.mxu0 0
      %1860 = vmatprep.subr.bf16.mxu0 0
      %1861 = vmatpush1.bf16.msra.mxu0 0
      %1862 = vmatprep.mubr.bf16.mxu0 0
      %1863 = vmatmul.mubr.bf16.gmra.mrb[0].mxu0 %v1825
      %v1864 = vpop.f32.mrb[0].mxu0
      %v1865 = vadd.f32 0.0, %v1864
      %v1866 = vpop.f32.mrb[0].mxu0
      %v1867 = vpop.f32.mrb[0].mxu0
      %v1868 = vpop.f32.mrb[0].mxu0
      %1869 = vdwg.mxu0
      %1872 = vrot.lane.b32.xlu0 %v1368, 16
      %v1873 = vpop.permute.xlu0 %1872
      %1874 = vrot.lane.b32.xlu0 %v1417, 16
      %v1875 = vpop.permute.xlu0 %1874
      %1880 = vrot.lane.b32.xlu0 %v1593, 32
      %v1881 = vpop.permute.xlu0 %1880
      %1882 = vrot.lane.b32.xlu0 %v1641, 32
      %v1883 = vpop.permute.xlu0 %1882
      %1888 = vrot.lane.b32.xlu0 %v1817, 48
      %v1889 = vpop.permute.xlu0 %1888
      %1890 = vrot.lane.b32.xlu0 %v1865, 48
      %v1891 = vpop.permute.xlu0 %1890
      %v1894 = vsel %vm966, %v1145, %v1873
      %v1895 = vsel %vm966, %v1191, %v1875
      %vm1896 = vcmask 261120
      %v1897 = vsel %vm1896, %v1894, %v1881
      %v1898 = vsel %vm1896, %v1895, %v1883
      %vm1899 = vcmask 392192
      %v1900 = vsel %vm1899, %v1897, %v1889
      %v1901 = vsel %vm1899, %v1898, %v1891
      %v1902 = vpack.c.bf16 %v1901, %v1900
      %v1903 = vld [vmem:[%s760] sm:$0xf]
      %v1904 = vld [vmem:[%s760 + $0x4] sm:$0xf]
      %v1905 = vld [vmem:[%s760 + $0x8] sm:$0xf]
      %v1906 = vld [vmem:[%s760 + $0xc] sm:$0xf]
      %v1907 = vld [vmem:[%s760 + $0x10] sm:$0xf]
      %v1908 = vld [vmem:[%s760 + $0x14] sm:$0xf]
      %v1909 = vld [vmem:[%s760 + $0x18] sm:$0xf]
      %v1910 = vld [vmem:[%s760 + $0x1c] sm:$0xf]
      %v1911 = vld [vmem:[%s763] sm:$0x1]
      %v1913 = vlaneseq
      %v1914 = vshrl.u32 %v1913, 7
      %v1915 = vsub.s32 0, %v1914
      %v1916 = vrot.slane %v1911, %v1915
      %v1926 = vunpack.c.l.b16 %v1903
      %v1927 = vunpack.c.l.b16 %v1904
      %v1928 = vunpack.c.l.b16 %v1905
      %v1929 = vunpack.c.l.b16 %v1906
      %v1930 = vunpack.c.l.b16 %v1907
      %v1931 = vunpack.c.l.b16 %v1908
      %v1932 = vunpack.c.l.b16 %v1909
      %v1933 = vunpack.c.l.b16 %v1910
      %v1934 = vpack.c.b16 %v1927, %v1926
      %v1935 = vpack.c.b16 %v1929, %v1928
      %v1936 = vpack.c.b16 %v1931, %v1930
      %v1937 = vpack.c.b16 %v1933, %v1932
      %v1943 = vsel %vm910, %v1902, 0
      %1945 = vmatprep.subr.bf16.mxu0 0
      %1946 = vmatpush1.bf16.msra.mxu0 %v1934
      %1947 = vmatprep.subr.bf16.mxu0 0
      %1948 = vmatpush1.bf16.msra.mxu0 %v1935
      %1949 = vmatprep.subr.bf16.mxu0 0
      %1950 = vmatpush1.bf16.msra.mxu0 %v1936
      %1951 = vmatprep.subr.bf16.mxu0 0
      %1952 = vmatpush1.bf16.msra.mxu0 %v1937
      %1953 = vmatprep.subr.bf16.mxu0 0
      %1954 = vmatpush1.bf16.msra.mxu0 0
      %1955 = vmatprep.subr.bf16.mxu0 0
      %1956 = vmatpush1.bf16.msra.mxu0 0
      %1957 = vmatprep.subr.bf16.mxu0 0
      %1958 = vmatpush1.bf16.msra.mxu0 0
      %1959 = vmatprep.subr.bf16.mxu0 0
      %1960 = vmatpush1.bf16.msra.mxu0 0
      %1961 = vmatprep.subr.bf16.mxu0 0
      %1962 = vmatpush1.bf16.msra.mxu0 0
      %1963 = vmatprep.subr.bf16.mxu0 0
      %1964 = vmatpush1.bf16.msra.mxu0 0
      %1965 = vmatprep.subr.bf16.mxu0 0
      %1966 = vmatpush1.bf16.msra.mxu0 0
      %1967 = vmatprep.subr.bf16.mxu0 0
      %1968 = vmatpush1.bf16.msra.mxu0 0
      %1969 = vmatprep.subr.bf16.mxu0 0
      %1970 = vmatpush1.bf16.msra.mxu0 0
      %1971 = vmatprep.subr.bf16.mxu0 0
      %1972 = vmatpush1.bf16.msra.mxu0 0
      %1973 = vmatprep.subr.bf16.mxu0 0
      %1974 = vmatpush1.bf16.msra.mxu0 0
      %1975 = vmatprep.subr.bf16.mxu0 0
      %1976 = vmatpush1.bf16.msra.mxu0 0
      %1977 = vmatprep.mubr.bf16.mxu0 0
      %1978 = vmatmul.mubr.bf16.gmra.mrb[0].mxu0 %v1943
      %v1979 = vpop.f32.mrb[0].mxu0
      %v1980 = vadd.f32 %v1916, %v1979
      %v1981 = vpop.f32.mrb[0].mxu0
      %v1982 = vpop.f32.mrb[0].mxu0
      %v1983 = vadd.f32 %v1916, %v1982
      %v1984 = vpop.f32.mrb[0].mxu0
      %1985 = vdwg.mxu0
      %v1986 = vadd.f32 %v847, %v1980
      %v1987 = vadd.f32 %v848, %v1983
      %v1988 = vld [vmem:[%s766] sm:$0x1]
      %v1989 = vld [vmem:[%s769] sm:$0x1]
      %v1990 = vsel %vm910, %v1986, 0.0
      %1991 = vadd.xlane.f32.xlu0 %v1990
      %v1992 = vpop.xlane.xlu0 %1991
      %v1993 = vsel %vm910, %v1987, 0.0
      %1994 = vadd.xlane.f32.xlu0 %v1993
      %v1995 = vpop.xlane.xlu0 %1994
      %v1996 = vrcp.pop 64.0
      %v1997 = vmul.f32 %v1992, %v1996
      %v1998 = vmul.f32 %v1995, %v1996
      %v1999 = vsub.f32 %v1986, %v1997
      %v2000 = vsub.f32 %v1987, %v1998
      %v2001 = vmul.f32 %v1999, %v1999
      %v2002 = vmul.f32 %v2000, %v2000
      %v2003 = vsel %vm910, %v2001, 0.0
      %2004 = vadd.xlane.f32.xlu0 %v2003
      %v2005 = vpop.xlane.xlu0 %2004
      %v2006 = vsel %vm910, %v2002, 0.0
      %2007 = vadd.xlane.f32.xlu0 %v2006
      %v2008 = vpop.xlane.xlu0 %2007
      %v2009 = vmul.f32 %v2005, %v1996
      %v2010 = vmul.f32 %v2008, %v1996
      %v2011 = vadd.f32 %v2009, 1e-05
      %v2012 = vadd.f32 %v2010, 1e-05
      %v2013 = vrsqrt.pop %v2011
      %v2014 = vrsqrt.pop %v2012
      %v2015 = vmul.f32 %v1999, %v2013
      %v2016 = vmul.f32 %v2000, %v2014
      %v2018 = vlaneseq
      %v2019 = vshrl.u32 %v2018, 7
      %v2020 = vsub.s32 0, %v2019
      %v2021 = vrot.slane %v1988, %v2020
      %v2023 = vmul.f32 %v2015, %v2021
      %v2024 = vmul.f32 %v2016, %v2021
      %v2026 = vlaneseq
      %v2027 = vshrl.u32 %v2026, 7
      %v2028 = vsub.s32 0, %v2027
      %v2029 = vrot.slane %v1989, %v2028
      %v2031 = vadd.f32 %v2023, %v2029
      %v2032 = vadd.f32 %v2024, %v2029
      %v2033 = vpack.c.bf16 %v2032, %v2031
      %v2034 = vld [vmem:[%s774] sm:$0xf]
      %v2035 = vld [vmem:[%s774 + $0x4] sm:$0xf]
      %v2036 = vld [vmem:[%s774 + $0x8] sm:$0xf]
      %v2037 = vld [vmem:[%s774 + $0xc] sm:$0xf]
      %v2038 = vld [vmem:[%s774 + $0x10] sm:$0xf]
      %v2039 = vld [vmem:[%s774 + $0x14] sm:$0xf]
      %v2040 = vld [vmem:[%s774 + $0x18] sm:$0xf]
      %v2041 = vld [vmem:[%s774 + $0x1c] sm:$0xf]
      %v2042 = vld [vmem:[%s777] sm:$0x1]
      %v2044 = vlaneseq
      %v2045 = vshrl.u32 %v2044, 7
      %v2046 = vsub.s32 0, %v2045
      %v2047 = vrot.slane %v2042, %v2046
      %v2057 = vunpack.c.l.b16 %v2034
      %v2058 = vunpack.c.l.b16 %v2035
      %v2059 = vunpack.c.l.b16 %v2036
      %v2060 = vunpack.c.l.b16 %v2037
      %v2061 = vunpack.c.l.b16 %v2038
      %v2062 = vunpack.c.l.b16 %v2039
      %v2063 = vunpack.c.l.b16 %v2040
      %v2064 = vunpack.c.l.b16 %v2041
      %v2065 = vpack.c.b16 %v2058, %v2057
      %v2066 = vpack.c.b16 %v2060, %v2059
      %v2067 = vpack.c.b16 %v2062, %v2061
      %v2068 = vpack.c.b16 %v2064, %v2063
      %v2074 = vsel %vm910, %v2033, 0
      %2076 = vmatprep.subr.bf16.mxu0 0
      %2077 = vmatpush1.bf16.msra.mxu0 %v2065
      %2078 = vmatprep.subr.bf16.mxu0 0
      %2079 = vmatpush1.bf16.msra.mxu0 %v2066
      %2080 = vmatprep.subr.bf16.mxu0 0
      %2081 = vmatpush1.bf16.msra.mxu0 %v2067
      %2082 = vmatprep.subr.bf16.mxu0 0
      %2083 = vmatpush1.bf16.msra.mxu0 %v2068
      %2084 = vmatprep.subr.bf16.mxu0 0
      %2085 = vmatpush1.bf16.msra.mxu0 0
      %2086 = vmatprep.subr.bf16.mxu0 0
      %2087 = vmatpush1.bf16.msra.mxu0 0
      %2088 = vmatprep.subr.bf16.mxu0 0
      %2089 = vmatpush1.bf16.msra.mxu0 0
      %2090 = vmatprep.subr.bf16.mxu0 0
      %2091 = vmatpush1.bf16.msra.mxu0 0
      %2092 = vmatprep.subr.bf16.mxu0 0
      %2093 = vmatpush1.bf16.msra.mxu0 0
      %2094 = vmatprep.subr.bf16.mxu0 0
      %2095 = vmatpush1.bf16.msra.mxu0 0
      %2096 = vmatprep.subr.bf16.mxu0 0
      %2097 = vmatpush1.bf16.msra.mxu0 0
      %2098 = vmatprep.subr.bf16.mxu0 0
      %2099 = vmatpush1.bf16.msra.mxu0 0
      %2100 = vmatprep.subr.bf16.mxu0 0
      %2101 = vmatpush1.bf16.msra.mxu0 0
      %2102 = vmatprep.subr.bf16.mxu0 0
      %2103 = vmatpush1.bf16.msra.mxu0 0
      %2104 = vmatprep.subr.bf16.mxu0 0
      %2105 = vmatpush1.bf16.msra.mxu0 0
      %2106 = vmatprep.subr.bf16.mxu0 0
      %2107 = vmatpush1.bf16.msra.mxu0 0
      %2108 = vmatprep.mubr.bf16.mxu0 0
      %2109 = vmatmul.mubr.bf16.gmra.mrb[0].mxu0 %v2074
      %v2110 = vpop.f32.mrb[0].mxu0
      %v2111 = vadd.f32 %v2047, %v2110
      %v2112 = vpop.f32.mrb[0].mxu0
      %v2113 = vpop.f32.mrb[0].mxu0
      %v2114 = vadd.f32 %v2047, %v2113
      %v2115 = vpop.f32.mrb[0].mxu0
      %2116 = vdwg.mxu0
      %v2117 = vmul.f32 %v2111, %v2111
      %v2118 = vmul.f32 %v2114, %v2114
      %v2119 = vmul.f32 %v2111, %v2117
      %v2120 = vmul.f32 %v2114, %v2118
      %v2121 = vmul.f32 %v2119, 0.044715
      %v2122 = vmul.f32 %v2120, 0.044715
      %v2123 = vadd.f32 %v2111, %v2121
      %v2124 = vadd.f32 %v2114, %v2122
      %v2125 = vmul.f32 %v2123, 0.7978846
      %v2126 = vmul.f32 %v2124, 0.7978846
      %v2127 = vtanh.pop %v2125
      %v2128 = vtanh.pop %v2126
      %v2129 = vadd.f32 %v2127, 1.0
      %v2130 = vadd.f32 %v2128, 1.0
      %v2131 = vmul.f32 %v2129, 0.5
      %v2132 = vmul.f32 %v2130, 0.5
      %v2133 = vmul.f32 %v2111, %v2131
      %v2134 = vmul.f32 %v2114, %v2132
      %v2135 = vpack.c.bf16 %v2134, %v2133
      %v2136 = vld [vmem:[%s782] sm:$0xf]
      %v2137 = vld [vmem:[%s782 + $0x4] sm:$0xf]
      %v2138 = vld [vmem:[%s782 + $0x8] sm:$0xf]
      %v2139 = vld [vmem:[%s782 + $0xc] sm:$0xf]
      %v2140 = vld [vmem:[%s782 + $0x10] sm:$0xf]
      %v2141 = vld [vmem:[%s782 + $0x14] sm:$0xf]
      %v2142 = vld [vmem:[%s782 + $0x18] sm:$0xf]
      %v2143 = vld [vmem:[%s782 + $0x1c] sm:$0xf]
      %v2144 = vld [vmem:[%s782 + $0x20] sm:$0xf]
      %v2145 = vld [vmem:[%s782 + $0x24] sm:$0xf]
      %v2146 = vld [vmem:[%s782 + $0x28] sm:$0xf]
      %v2147 = vld [vmem:[%s782 + $0x2c] sm:$0xf]
      %v2148 = vld [vmem:[%s782 + $0x30] sm:$0xf]
      %v2149 = vld [vmem:[%s782 + $0x34] sm:$0xf]
      %v2150 = vld [vmem:[%s782 + $0x38] sm:$0xf]
      %v2151 = vld [vmem:[%s782 + $0x3c] sm:$0xf]
      %v2152 = vld [vmem:[%s785] sm:$0x1]
      %v2154 = vlaneseq
      %v2155 = vshrl.u32 %v2154, 7
      %v2156 = vsub.s32 0, %v2155
      %v2157 = vrot.slane %v2152, %v2156
      %v2175 = vunpack.c.l.b16 %v2136
      %v2176 = vunpack.c.l.b16 %v2137
      %v2177 = vunpack.c.l.b16 %v2138
      %v2178 = vunpack.c.l.b16 %v2139
      %v2179 = vunpack.c.l.b16 %v2140
      %v2180 = vunpack.c.l.b16 %v2141
      %v2181 = vunpack.c.l.b16 %v2142
      %v2182 = vunpack.c.l.b16 %v2143
      %v2183 = vunpack.c.l.b16 %v2144
      %v2184 = vunpack.c.l.b16 %v2145
      %v2185 = vunpack.c.l.b16 %v2146
      %v2186 = vunpack.c.l.b16 %v2147
      %v2187 = vunpack.c.l.b16 %v2148
      %v2188 = vunpack.c.l.b16 %v2149
      %v2189 = vunpack.c.l.b16 %v2150
      %v2190 = vunpack.c.l.b16 %v2151
      %v2191 = vpack.c.b16 %v2176, %v2175
      %v2192 = vpack.c.b16 %v2178, %v2177
      %v2193 = vpack.c.b16 %v2180, %v2179
      %v2194 = vpack.c.b16 %v2182, %v2181
      %v2195 = vpack.c.b16 %v2184, %v2183
      %v2196 = vpack.c.b16 %v2186, %v2185
      %v2197 = vpack.c.b16 %v2188, %v2187
      %v2198 = vpack.c.b16 %v2190, %v2189
      %2207 = vmatprep.subr.bf16.mxu0 0
      %2208 = vmatpush1.bf16.msra.mxu0 %v2191
      %2209 = vmatprep.subr.bf16.mxu0 0
      %2210 = vmatpush1.bf16.msra.mxu0 %v2192
      %2211 = vmatprep.subr.bf16.mxu0 0
      %2212 = vmatpush1.bf16.msra.mxu0 %v2193
      %2213 = vmatprep.subr.bf16.mxu0 0
      %2214 = vmatpush1.bf16.msra.mxu0 %v2194
      %2215 = vmatprep.subr.bf16.mxu0 0
      %2216 = vmatpush1.bf16.msra.mxu0 %v2195
      %2217 = vmatprep.subr.bf16.mxu0 0
      %2218 = vmatpush1.bf16.msra.mxu0 %v2196
      %2219 = vmatprep.subr.bf16.mxu0 0
      %2220 = vmatpush1.bf16.msra.mxu0 %v2197
      %2221 = vmatprep.subr.bf16.mxu0 0
      %2222 = vmatpush1.bf16.msra.mxu0 %v2198
      %2223 = vmatprep.subr.bf16.mxu0 0
      %2224 = vmatpush1.bf16.msra.mxu0 0
      %2225 = vmatprep.subr.bf16.mxu0 0
      %2226 = vmatpush1.bf16.msra.mxu0 0
      %2227 = vmatprep.subr.bf16.mxu0 0
      %2228 = vmatpush1.bf16.msra.mxu0 0
      %2229 = vmatprep.subr.bf16.mxu0 0
      %2230 = vmatpush1.bf16.msra.mxu0 0
      %2231 = vmatprep.subr.bf16.mxu0 0
      %2232 = vmatpush1.bf16.msra.mxu0 0
      %2233 = vmatprep.subr.bf16.mxu0 0
      %2234 = vmatpush1.bf16.msra.mxu0 0
      %2235 = vmatprep.subr.bf16.mxu0 0
      %2236 = vmatpush1.bf16.msra.mxu0 0
      %2237 = vmatprep.subr.bf16.mxu0 0
      %2238 = vmatpush1.bf16.msra.mxu0 0
      %2239 = vmatprep.mubr.bf16.mxu0 0
      %2240 = vmatmul.mubr.bf16.gmra.mrb[0].mxu0 %v2135
      %v2241 = vpop.f32.mrb[0].mxu0
      %v2242 = vadd.f32 %v2157, %v2241
      %v2243 = vpop.f32.mrb[0].mxu0
      %v2244 = vpop.f32.mrb[0].mxu0
      %v2245 = vadd.f32 %v2157, %v2244
      %v2246 = vpop.f32.mrb[0].mxu0
      %2247 = vdwg.mxu0
      %v2248 = vadd.f32 %v2031, %v2242
      %v2249 = vadd.f32 %v2032, %v2245
      %v2250 = vld [vmem:[%s788] sm:$0x1]
      %v2251 = vld [vmem:[%s791] sm:$0x1]
      %v2252 = vsel %vm910, %v2248, 0.0
      %2253 = vadd.xlane.f32.xlu0 %v2252
      %v2254 = vpop.xlane.xlu0 %2253
      %v2255 = vsel %vm910, %v2249, 0.0
      %2256 = vadd.xlane.f32.xlu0 %v2255
      %v2257 = vpop.xlane.xlu0 %2256
      %v2258 = vmul.f32 %v2254, %v1996
      %v2259 = vmul.f32 %v2257, %v1996
      %v2260 = vsub.f32 %v2248, %v2258
      %v2261 = vsub.f32 %v2249, %v2259
      %v2262 = vmul.f32 %v2260, %v2260
      %v2263 = vmul.f32 %v2261, %v2261
      %v2264 = vsel %vm910, %v2262, 0.0
      %2265 = vadd.xlane.f32.xlu0 %v2264
      %v2266 = vpop.xlane.xlu0 %2265
      %v2267 = vsel %vm910, %v2263, 0.0
      %2268 = vadd.xlane.f32.xlu0 %v2267
      %v2269 = vpop.xlane.xlu0 %2268
      %v2270 = vmul.f32 %v2266, %v1996
      %v2271 = vmul.f32 %v2269, %v1996
      %v2272 = vadd.f32 %v2270, 1e-05
      %v2273 = vadd.f32 %v2271, 1e-05
      %v2274 = vrsqrt.pop %v2272
      %v2275 = vrsqrt.pop %v2273
      %v2276 = vmul.f32 %v2260, %v2274
      %v2277 = vmul.f32 %v2261, %v2275
      %v2279 = vlaneseq
      %v2280 = vshrl.u32 %v2279, 7
      %v2281 = vsub.s32 0, %v2280
      %v2282 = vrot.slane %v2250, %v2281
      %v2284 = vmul.f32 %v2276, %v2282
      %v2285 = vmul.f32 %v2277, %v2282
      %v2287 = vlaneseq
      %v2288 = vshrl.u32 %v2287, 7
      %v2289 = vsub.s32 0, %v2288
      %v2290 = vrot.slane %v2251, %v2289
      %v2292 = vadd.f32 %v2284, %v2290
      %v2293 = vadd.f32 %v2285, %v2290
      %2294 = vst.msk [vmem:[#allocation2] sm:$0xff] %vm910, %v2292
      %2295 = vst.msk [vmem:[#allocation2 + $0x8] sm:$0xff] %vm910, %v2293
      %p2296 = scmp.eq.s32.totalorder %s33, 1
      // Predicated region
      $region105: #{xlmroberta_regressor_forward.1} parent=99 // pred_check
        %p2297 = pneg %p2296
      $region106: #{xlmroberta_regressor_forward.1} parent=99 // pred_check_branch
        %2299 = sbr.rel (%p2297) target = $region108
      $region107: #{xlmroberta_regressor_forward.1} parent=99 // pred_region
        %v2301 = vrot.slane %v2293, 7
        %vm2303 = vcmask 1040384
        %v2304 = vsel %vm2303, %v2292, %v2301
        %v2305 = vpack.c.bf16 %v2304, %v2304
        %v2306 = vld [vmem:[%s16] sm:$0xf]
        %v2307 = vld [vmem:[%s16 + $0x4] sm:$0xf]
        %v2308 = vld [vmem:[%s16 + $0x8] sm:$0xf]
        %v2309 = vld [vmem:[%s16 + $0xc] sm:$0xf]
        %v2310 = vld [vmem:[%s16 + $0x10] sm:$0xf]
        %v2311 = vld [vmem:[%s16 + $0x14] sm:$0xf]
        %v2312 = vld [vmem:[%s16 + $0x18] sm:$0xf]
        %v2313 = vld [vmem:[%s16 + $0x1c] sm:$0xf]
        %v2314 = vld [vmem:[%s17] sm:$0x1]
        %v2316 = vlaneseq
        %v2317 = vshrl.u32 %v2316, 7
        %v2318 = vsub.s32 0, %v2317
        %v2319 = vrot.slane %v2314, %v2318
        %v2329 = vunpack.c.l.b16 %v2306
        %v2330 = vunpack.c.l.b16 %v2307
        %v2331 = vunpack.c.l.b16 %v2308
        %v2332 = vunpack.c.l.b16 %v2309
        %v2333 = vunpack.c.l.b16 %v2310
        %v2334 = vunpack.c.l.b16 %v2311
        %v2335 = vunpack.c.l.b16 %v2312
        %v2336 = vunpack.c.l.b16 %v2313
        %v2337 = vpack.c.b16 %v2330, %v2329
        %v2338 = vpack.c.b16 %v2332, %v2331
        %v2339 = vpack.c.b16 %v2334, %v2333
        %v2340 = vpack.c.b16 %v2336, %v2335
        %v2346 = vsel %vm910, %v2305, 0
        %2348 = vmatprep.subr.bf16.mxu0 0
        %2349 = vmatpush1.bf16.msra.mxu0 %v2337
        %2350 = vmatprep.subr.bf16.mxu0 0
        %2351 = vmatpush1.bf16.msra.mxu0 %v2338
        %2352 = vmatprep.subr.bf16.mxu0 0
        %2353 = vmatpush1.bf16.msra.mxu0 %v2339
        %2354 = vmatprep.subr.bf16.mxu0 0
        %2355 = vmatpush1.bf16.msra.mxu0 %v2340
        %2356 = vmatprep.subr.bf16.mxu0 0
        %2357 = vmatpush1.bf16.msra.mxu0 0
        %2358 = vmatprep.subr.bf16.mxu0 0
        %2359 = vmatpush1.bf16.msra.mxu0 0
        %2360 = vmatprep.subr.bf16.mxu0 0
        %2361 = vmatpush1.bf16.msra.mxu0 0
        %2362 = vmatprep.subr.bf16.mxu0 0
        %2363 = vmatpush1.bf16.msra.mxu0 0
        %2364 = vmatprep.subr.bf16.mxu0 0
        %2365 = vmatpush1.bf16.msra.mxu0 0
        %2366 = vmatprep.subr.bf16.mxu0 0
        %2367 = vmatpush1.bf16.msra.mxu0 0
        %2368 = vmatprep.subr.bf16.mxu0 0
        %2369 = vmatpush1.bf16.msra.mxu0 0
        %2370 = vmatprep.subr.bf16.mxu0 0
        %2371 = vmatpush1.bf16.msra.mxu0 0
        %2372 = vmatprep.subr.bf16.mxu0 0
        %2373 = vmatpush1.bf16.msra.mxu0 0
        %2374 = vmatprep.subr.bf16.mxu0 0
        %2375 = vmatpush1.bf16.msra.mxu0 0
        %2376 = vmatprep.subr.bf16.mxu0 0
        %2377 = vmatpush1.bf16.msra.mxu0 0
        %2378 = vmatprep.subr.bf16.mxu0 0
        %2379 = vmatpush1.bf16.msra.mxu0 0
        %2380 = vmatprep.mubr.bf16.mxu0 0
        %2381 = vmatmul.mubr.bf16.gmra.mrb[0].mxu0 %v2346
        %v2382 = vpop.f32.mrb[0].mxu0
        %v2383 = vadd.f32 %v2319, %v2382
        %v2384 = vpop.f32.mrb[0].mxu0
        %v2385 = vpop.f32.mrb[0].mxu0
        %v2386 = vpop.f32.mrb[0].mxu0
        %2387 = vdwg.mxu0
        %v2388 = vtanh.pop %v2383
        %v2389 = vpack.c.bf16 %v2388, %v2388
        %v2390 = vld [vmem:[%s18] sm:$0xf]
        %v2391 = vld [vmem:[%s18 + $0x4] sm:$0xf]
        %v2392 = vld [vmem:[%s18 + $0x8] sm:$0xf]
        %v2393 = vld [vmem:[%s18 + $0xc] sm:$0xf]
        %v2394 = vld [vmem:[%s18 + $0x10] sm:$0xf]
        %v2395 = vld [vmem:[%s18 + $0x14] sm:$0xf]
        %v2396 = vld [vmem:[%s18 + $0x18] sm:$0xf]
        %v2397 = vld [vmem:[%s18 + $0x1c] sm:$0xf]
        %v2398 = vld [vmem:[#allocation3] sm:$0x1]
        %v2400 = vlaneseq
        %v2401 = vshrl.u32 %v2400, 7
        %v2402 = vsub.s32 0, %v2401
        %v2403 = vrot.slane %v2398, %v2402
        %v2413 = vunpack.c.l.b16 %v2390
        %v2414 = vunpack.c.l.b16 %v2391
        %v2415 = vunpack.c.l.b16 %v2392
        %v2416 = vunpack.c.l.b16 %v2393
        %v2417 = vunpack.c.l.b16 %v2394
        %v2418 = vunpack.c.l.b16 %v2395
        %v2419 = vunpack.c.l.b16 %v2396
        %v2420 = vunpack.c.l.b16 %v2397
        %v2421 = vpack.c.b16 %v2414, %v2413
        %v2422 = vpack.c.b16 %v2416, %v2415
        %v2423 = vpack.c.b16 %v2418, %v2417
        %v2424 = vpack.c.b16 %v2420, %v2419
        %v2430 = vsel %vm910, %v2389, 0
        %2432 = vmatprep.subr.bf16.mxu0 0
        %2433 = vmatpush1.bf16.msra.mxu0 %v2421
        %2434 = vmatprep.subr.bf16.mxu0 0
        %2435 = vmatpush1.bf16.msra.mxu0 %v2422
        %2436 = vmatprep.subr.bf16.mxu0 0
        %2437 = vmatpush1.bf16.msra.mxu0 %v2423
        %2438 = vmatprep.subr.bf16.mxu0 0
        %2439 = vmatpush1.bf16.msra.mxu0 %v2424
        %2440 = vmatprep.subr.bf16.mxu0 0
        %2441 = vmatpush1.bf16.msra.mxu0 0
        %2442 = vmatprep.subr.bf16.mxu0 0
        %2443 = vmatpush1.bf16.msra.mxu0 0
        %2444 = vmatprep.subr.bf16.mxu0 0
        %2445 = vmatpush1.bf16.msra.mxu0 0
        %2446 = vmatprep.subr.bf16.mxu0 0
        %2447 = vmatpush1.bf16.msra.mxu0 0
        %2448 = vmatprep.subr.bf16.mxu0 0
        %2449 = vmatpush1.bf16.msra.mxu0 0
        %2450 = vmatprep.subr.bf16.mxu0 0
        %2451 = vmatpush1.bf16.msra.mxu0 0
        %2452 = vmatprep.subr.bf16.mxu0 0
        %2453 = vmatpush1.bf16.msra.mxu0 0
        %2454 = vmatprep.subr.bf16.mxu0 0
        %2455 = vmatpush1.bf16.msra.mxu0 0
        %2456 = vmatprep.subr.bf16.mxu0 0
        %2457 = vmatpush1.bf16.msra.mxu0 0
        %2458 = vmatprep.subr.bf16.mxu0 0
        %2459 = vmatpush1.bf16.msra.mxu0 0
        %2460 = vmatprep.subr.bf16.mxu0 0
        %2461 = vmatpush1.bf16.msra.mxu0 0
        %2462 = vmatprep.subr.bf16.mxu0 0
        %2463 = vmatpush1.bf16.msra.mxu0 0
        %2464 = vmatprep.mubr.bf16.mxu0 0
        %2465 = vmatmul.mubr.bf16.gmra.mrb[0].mxu0 %v2430
        %v2466 = vpop.f32.mrb[0].mxu0
        %v2467 = vadd.f32 %v2403, %v2466
        %v2468 = vpop.f32.mrb[0].mxu0
        %v2469 = vpop.f32.mrb[0].mxu0
        %v2470 = vpop.f32.mrb[0].mxu0
        %2471 = vdwg.mxu0
        %vm2472 = vcmask 1024
        %2473 = vst.msk [vmem:[%s20] sm:$0x3] %vm2472, %v2467
      $region108: #{xlmroberta_regressor_forward.1} parent=99 // pred_fallthru
        _
      // Predicated region
      $region109: #{xlmroberta_regressor_forward.1} parent=99 // pred_check
        %p2474 = pneg %p526
      $region110: #{xlmroberta_regressor_forward.1} parent=99 // pred_check_branch
        %2476 = sbr.rel (%p2474) target = $region112
      $region111: #{xlmroberta_regressor_forward.1} parent=99 // pred_region
        _
      $region112: #{xlmroberta_regressor_forward.1} parent=99 // pred_fallthru
        _
      // Predicated region
      $region113: #{xlmroberta_regressor_forward.1} parent=99 // pred_check
        %p2477 = pneg %p526
      $region114: #{xlmroberta_regressor_forward.1} parent=99 // pred_check_branch
        %2479 = sbr.rel (%p2477) target = $region116
      $region115: #{xlmroberta_regressor_forward.1} parent=99 // pred_region
        _
      $region116: #{xlmroberta_regressor_forward.1} parent=99 // pred_fallthru
        _
    $region100: #{xlmroberta_regressor_forward.1} parent=5 // pred_fallthru
      _
    %p2480 = scmp.le.s32.totalorder 2, %s28
    // Predicated region
    $region117: #{xlmroberta_regressor_forward.1} parent=5 // pred_check
      %p2481 = pneg %p2480
    $region118: #{xlmroberta_regressor_forward.1} parent=5 // pred_check_branch
      %2483 = sbr.rel (%p2481) target = $region120
    $region119: #{xlmroberta_regressor_forward.1} parent=5 // pred_region
      %s2484 = ssub.s32 %s28, 2
    $region120: #{xlmroberta_regressor_forward.1} parent=5 // pred_fallthru
      _
  $region6: #{xlmroberta_regressor_forward.1} parent=0 // loop_footer
    %s32 = sadd.s32 1, %s28
  $region7: #{xlmroberta_regressor_forward.1} parent=0 // loop_footer_branch
    %27 = sbr.rel target = $region3
  $region8: #{xlmroberta_regressor_forward.1} parent=0 // loop_exit
    _

</llo_original>
